<compile_context>
chip_gen: v7x
topology: tpu7x:2x2x1
jax: 0.10.0
libtpu: 0.0.40
codegen_flags: <defaults>
</compile_context>

<pallas_src>
import math

import numpy as np

import jax
import jax.numpy as jnp
from jax.experimental import pallas as pl
from jax.experimental.pallas import tpu as pltpu

# ----- Config (small, consistent with the module's __init__) -----
D_MODEL = 32
D_FF = 64
H = 4
DK = D_MODEL // H
N_LAYERS = 2
SEQ = 8
BATCH = 2
SRC_VOCAB = 50
TGT_VOCAB = 50
EPS_LN = 1e-6
EPS_COS = 1e-6
NEG_INF = -1e30

N_SEQS = 2 * BATCH                     # both inputs x batch -> 4 sequences
STACK_ROWS = N_SEQS * SEQ              # 32 rows processed together
HR = H * STACK_ROWS                    # 128: head-batched score rows
VOCAB2 = SRC_VOCAB + TGT_VOCAB         # 100: concatenated src|tgt table rows
TBL_ROWS = ((VOCAB2 + STACK_ROWS + 7) // 8) * 8   # 136 (tables + tiled PE + pad)

# slab32 row layout (everything 32 lanes wide):
HEADM_OFF = TBL_ROWS                   # 136: per-head lane mask       (HR, 32)
AMASK_OFF = HEADM_OFF + HR             # 264: additive same-seq mask   (HR, 32)
W2_OFF = AMASK_OFF + HR                # 392: per-layer W2 stacks      (N*64, 32)
SLAB32_ROWS = W2_OFF + N_LAYERS * D_FF # 520

# slabw lane layout (per-layer 32 rows, lane-tile aligned chunks):
SLABW_LANES = 384
W1_LANE = 128
WO_LANE = 256

# slabb layout: 8 rows per layer, then final-LN rows, then pool matrix rows.
SLABB_ROWS = 32
SLABB_LANES = 96
FINAL_G_ROW = N_LAYERS * 8             # 16
FINAL_B_ROW = FINAL_G_ROW + 1          # 17
POOL_ROW = 24                          # rows 24..31: (8, 2*STACK_ROWS) pool

OUT_ROWS = 8
OUT_LANES = 128                        # lane-dense output slab width


# ----------------------------------------------------------------------------
# Fused Pallas kernel: embeddings + stacked encoder + final LN + both cosines
# ----------------------------------------------------------------------------
def fused_transformer_kernel(tok_ref, c32_ref, wide_ref, vec_ref, out_ref):
    f32 = jnp.float32
    R = STACK_ROWS

    # ---- Embedding: lut[token] * sqrt(d_model) + PE with ONE one-hot matmul.
    # onehot_aug[r, c] = 1 at c == token[r]   (pre-scaled table rows 0..99)
    #                and c == VOCAB2 + r      (tiled positional-encoding rows).
    tok = tok_ref[...]                                              # (R, 1) i32
    ri = jax.lax.broadcasted_iota(jnp.int32, (R, TBL_ROWS), 0)
    ci = jax.lax.broadcasted_iota(jnp.int32, (R, TBL_ROWS), 1)
    onehot = jnp.where((ci == tok) | (ci == ri + VOCAB2), f32(1.0), f32(0.0))
    emb = jnp.dot(onehot, c32_ref[0:TBL_ROWS, :],
                  preferred_element_type=f32)                       # (R, D)

    vec = vec_ref[...]                                              # (32, 96)
    inv_sqrt_dk = f32(1.0 / math.sqrt(DK))

    def layer_norm(v, g, b):
        # Annotated-transformer LayerNorm; torch.std is unbiased (D-1).
        mu = jnp.mean(v, axis=-1, keepdims=True)
        var = jnp.sum((v - mu) ** 2, axis=-1, keepdims=True) / (v.shape[-1] - 1)
        return g * (v - mu) / (jnp.sqrt(var) + EPS_LN) + b

    # TODO(synk): the reference passes the float embeddings as the attention
    # mask; attention is left unmasked within each length-SEQ sequence here
    # (the block-diagonal mask only separates the 4 stacked sequences).
    x = emb
    for li in range(N_LAYERS):
        rs = li * D_MODEL
        wqkv = wide_ref[rs:rs + D_MODEL, 0:3 * D_MODEL]             # (D, 3D)
        w1 = wide_ref[rs:rs + D_MODEL, W1_LANE:W1_LANE + D_FF]      # (D, D_FF)
        wo = wide_ref[rs:rs + D_MODEL, WO_LANE:WO_LANE + D_MODEL]   # (D, D)
        w2 = c32_ref[W2_OFF + li * D_FF:W2_OFF + (li + 1) * D_FF, :]

        b = li * 8
        bqkv = vec[b + 0:b + 1, 0:3 * D_MODEL]
        bo = vec[b + 1:b + 2, 0:D_MODEL]
        ln1g = vec[b + 2:b + 3, 0:D_MODEL]
        ln1b = vec[b + 3:b + 4, 0:D_MODEL]
        b1 = vec[b + 4:b + 5, 0:D_FF]
        b2 = vec[b + 5:b + 6, 0:D_MODEL]
        ln2g = vec[b + 6:b + 7, 0:D_MODEL]
        ln2b = vec[b + 7:b + 8, 0:D_MODEL]

        # --- sublayer 0: x + MHA(LN(x)); all 4 heads batched along sublanes.
        xn = layer_norm(x, ln1g, ln1b)
        qkv = jnp.dot(xn, wqkv, preferred_element_type=f32) + bqkv  # (R, 3D)
        q = qkv[:, 0:D_MODEL]
        k = qkv[:, D_MODEL:2 * D_MODEL]
        v = qkv[:, 2 * D_MODEL:3 * D_MODEL]

        headm = c32_ref[HEADM_OFF:HEADM_OFF + HR, :]                # (HR, D) 0/1
        amask = c32_ref[AMASK_OFF:AMASK_OFF + HR, :]                # (HR, R) 0/-1e30

        # Q tiled over head blocks and lane-masked -> one matmul for all heads.
        qstack = jnp.concatenate([q] * H, axis=0) * headm           # (HR, D)
        # Scores: contract last axes of Q-stack and K (no explicit K^T).
        s = jax.lax.dot_general(qstack, k, (((1,), (1,)), ((), ())),
                                preferred_element_type=f32)         # (HR, R)
        s = s * inv_sqrt_dk + amask
        s = s - jnp.max(s, axis=-1, keepdims=True)
        e = jnp.exp(s)
        p = e * pl.reciprocal(jnp.sum(e, axis=-1, keepdims=True), approx=True)
        ctx = jnp.dot(p, v, preferred_element_type=f32) * headm     # (HR, D)
        # Fold the 4 head blocks back to (R, D) == concat-of-heads output.
        ctx = (ctx[0 * R:1 * R, :] + ctx[1 * R:2 * R, :]
               + ctx[2 * R:3 * R, :] + ctx[3 * R:4 * R, :])
        x = x + jnp.dot(ctx, wo, preferred_element_type=f32) + bo   # dropout=id

        # --- sublayer 1: x + FFN(LN(x))
        xn2 = layer_norm(x, ln2g, ln2b)
        hid = jnp.maximum(jnp.dot(xn2, w1, preferred_element_type=f32) + b1, 0.0)
        x = x + jnp.dot(hid, w2, preferred_element_type=f32) + b2

    enc = layer_norm(x, vec[FINAL_G_ROW:FINAL_G_ROW + 1, 0:D_MODEL],
                     vec[FINAL_B_ROW:FINAL_B_ROW + 1, 0:D_MODEL])

    # ---- All 8 sequence means (emb & enc, both inputs, both batch rows) with
    #      ONE pool matmul; rows 0..3 are "left" vectors, rows 4..7 "right".
    pool = vec[POOL_ROW:POOL_ROW + 8, 0:2 * R]                      # (8, 2R)
    cat = jnp.concatenate([emb, enc], axis=0)                       # (2R, D)
    means = jnp.dot(pool, cat, preferred_element_type=f32)          # (8, D)
    rolled = pltpu.roll(means, shift=4, axis=0)                     # pair i <-> i+4
    dots = jnp.sum(means * rolled, axis=-1, keepdims=True)
    n = jnp.sqrt(jnp.sum(means * means, axis=-1, keepdims=True))
    nr = jnp.sqrt(jnp.sum(rolled * rolled, axis=-1, keepdims=True))
    # torch cosine_similarity clamps each norm separately.
    cos8 = dots / (jnp.maximum(n, EPS_COS) * jnp.maximum(nr, EPS_COS))
    # rows: [comp_b0, comp_b1, enc_b0, enc_b1, <duplicates>]; lane-dense slab.
    out_ref[...] = jnp.broadcast_to(cos8, (OUT_ROWS, OUT_LANES))


# ----------------------------------------------------------------------------
# Wrapper around the single pallas_call
# ----------------------------------------------------------------------------
def fused_forward(x1, x2, params):
    # x.permute(1, 0): (S, B) -> (B, S); flatten batch-major; offset tgt vocab.
    tok = jnp.concatenate(
        [x1.T.reshape(-1), x2.T.reshape(-1) + SRC_VOCAB]
    ).astype(jnp.int32).reshape(STACK_ROWS, 1)
    out = pl.pallas_call(
        fused_transformer_kernel,
        out_shape=jax.ShapeDtypeStruct((OUT_ROWS, OUT_LANES), jnp.float32),
    )(tok, params["slab32"], params["slabw"], params["slabb"])
    comp = out[0:BATCH, 0]
    enc_cos = out[BATCH:2 * BATCH, 0]
    return comp, enc_cos


# ----------------------------------------------------------------------------
# Parameter init (plain numpy/JAX; assembles the three VMEM slabs)
# ----------------------------------------------------------------------------
def make_positional_encoding(seq, d_model):
    pos = np.arange(seq, dtype=np.float32)[:, None]
    div = np.exp(np.arange(0, d_model, 2, dtype=np.float32)
                 * (-math.log(10000.0) / d_model))
    pe = np.zeros((seq, d_model), np.float32)
    pe[:, 0::2] = np.sin(pos * div)
    pe[:, 1::2] = np.cos(pos * div)
    return pe


def init_params(key):
    keys = jax.random.split(key, 2 + N_LAYERS)

    def nrm(k, shape, scale=0.1):
        return np.asarray(scale * jax.random.normal(k, shape), dtype=np.float32)

    src = nrm(keys[0], (SRC_VOCAB, D_MODEL), 1.0)
    tgt = nrm(keys[1], (TGT_VOCAB, D_MODEL), 1.0)
    pe = make_positional_encoding(SEQ, D_MODEL)

    # --- slab32: [scaled emb tables ; tiled PE ; pad ; head mask ; attn mask ; W2 x N]
    slab32 = np.zeros((SLAB32_ROWS, D_MODEL), np.float32)
    slab32[0:VOCAB2] = np.concatenate([src, tgt], axis=0) * math.sqrt(D_MODEL)
    slab32[VOCAB2:VOCAB2 + STACK_ROWS] = np.tile(pe, (N_SEQS, 1))
    for h in range(H):                                   # per-head lane mask
        slab32[HEADM_OFF + h * STACK_ROWS:HEADM_OFF + (h + 1) * STACK_ROWS,
               h * DK:(h + 1) * DK] = 1.0
    r = np.arange(STACK_ROWS)
    same = (r[:, None] // SEQ) == (r[None, :] // SEQ)    # block-diag same-sequence
    slab32[AMASK_OFF:AMASK_OFF + HR] = np.tile(
        np.where(same, 0.0, NEG_INF).astype(np.float32), (H, 1))

    # --- slabw: per layer [Wqkv | pad | W1 | pad | Wo | pad] (lane-tile aligned)
    slabw = np.zeros((N_LAYERS * D_MODEL, SLABW_LANES), np.float32)
    # --- slabb: per-layer bias/LN rows + final-LN rows + pool-matrix rows
    slabb = np.zeros((SLABB_ROWS, SLABB_LANES), np.float32)
    for li in range(N_LAYERS):
        ks = jax.random.split(keys[2 + li], 6)
        wq, wk, wv, wo = (nrm(ks[i], (D_MODEL, D_MODEL)) for i in range(4))
        w1 = nrm(ks[4], (D_MODEL, D_FF))
        w2 = nrm(ks[5], (D_FF, D_MODEL))
        rs = li * D_MODEL
        slabw[rs:rs + D_MODEL, 0:3 * D_MODEL] = np.concatenate([wq, wk, wv], 1)
        slabw[rs:rs + D_MODEL, W1_LANE:W1_LANE + D_FF] = w1
        slabw[rs:rs + D_MODEL, WO_LANE:WO_LANE + D_MODEL] = wo
        slab32[W2_OFF + li * D_FF:W2_OFF + (li + 1) * D_FF] = w2
        base = li * 8
        # linear biases (rows base+0,+1,+4,+5) stay zero; LayerNorm gains = 1
        slabb[base + 2, 0:D_MODEL] = 1.0
        slabb[base + 6, 0:D_MODEL] = 1.0
    slabb[FINAL_G_ROW, 0:D_MODEL] = 1.0                  # final LN gain (bias row 0)
    # pool rows: mean over each length-SEQ block of concat([emb_all, enc_all]);
    # order = [emb1_b0, emb1_b1, enc1_b0, enc1_b1, emb2_b0, emb2_b1, enc2_b0, enc2_b1]
    for i, blk in enumerate((0, 1, 4, 5, 2, 3, 6, 7)):
        slabb[POOL_ROW + i, blk * SEQ:(blk + 1) * SEQ] = 1.0 / SEQ

    return {"slab32": jnp.asarray(slab32),
            "slabw": jnp.asarray(slabw),
            "slabb": jnp.asarray(slabb)}


def transformer_forward(x1, x2, idx, params):
    del idx  # only indexes externally-loaded contextualized embeddings in the ref
    comp, enc_cos = fused_forward(x1, x2, params)
    # reference: for j in range(len(comp)): output[j] = comp[j]  ->  output == comp
    output = comp
    return output, enc_cos


# ----------------------------------------------------------------------------
if __name__ == "__main__":
    key = jax.random.PRNGKey(0)
    pk, k1, k2 = jax.random.split(key, 3)
    params = init_params(pk)

    x1 = jax.random.randint(k1, (SEQ, BATCH), 0, SRC_VOCAB, dtype=jnp.int32)
    x2 = jax.random.randint(k2, (SEQ, BATCH), 0, TGT_VOCAB, dtype=jnp.int32)
    idx = jnp.arange(BATCH, dtype=jnp.float32)

    fwd = jax.jit(transformer_forward)
    output, output_enc = fwd(x1, x2, idx, params)
    jax.block_until_ready((output, output_enc))
    assert output.shape == (BATCH,)
    assert output_enc.shape == (BATCH,)
    print("KERNEL_OK")
</pallas_src>

<mosaic_0001>
module attributes {stable_mosaic.version = 11 : i64} {
  func.func @fused_transformer_kernel(%arg0: memref<32x1xi32, #tpu.memory_space<vmem>>, %arg1: memref<520x32xf32, #tpu.memory_space<vmem>>, %arg2: memref<64x384xf32, #tpu.memory_space<vmem>>, %arg3: memref<32x96xf32, #tpu.memory_space<vmem>>, %arg4: memref<8x128xf32, #tpu.memory_space<vmem>>) attributes {dimension_semantics = [], scalar_prefetch = 0 : i64, scratch_operands = 0 : i64, tpu.core_type = #tpu.core_type<tc>} {
    %c0 = arith.constant 0 : index
    %c0_0 = arith.constant 0 : index
    %0 = vector.load %arg0[%c0, %c0_0] : memref<32x1xi32, #tpu.memory_space<vmem>>, vector<32x1xi32>
    %1 = tpu.iota {dimensions = array<i32: 0>} : vector<32x136xi32>
    %2 = tpu.iota {dimensions = array<i32: 1>} : vector<32x136xi32>
    %3 = vector.broadcast %0 : vector<32x1xi32> to vector<32x136xi32>
    %4 = arith.cmpi eq, %2, %3 : vector<32x136xi32>
    %c100_i32 = arith.constant 100 : i32
    %5 = vector.broadcast %c100_i32 : i32 to vector<32x136xi32>
    %6 = arith.addi %1, %5 : vector<32x136xi32>
    %7 = arith.cmpi eq, %2, %6 : vector<32x136xi32>
    %8 = arith.ori %4, %7 : vector<32x136xi1>
    %cst = arith.constant 1.000000e+00 : f32
    %cst_1 = arith.constant 0.000000e+00 : f32
    %9 = vector.broadcast %cst : f32 to vector<32x136xf32>
    %10 = vector.broadcast %cst_1 : f32 to vector<32x136xf32>
    %11 = arith.select %8, %9, %10 : vector<32x136xi1>, vector<32x136xf32>
    %c0_2 = arith.constant 0 : index
    %c0_3 = arith.constant 0 : index
    %12 = vector.load %arg1[%c0_2, %c0_3] : memref<520x32xf32, #tpu.memory_space<vmem>>, vector<136x32xf32>
    %cst_4 = arith.constant dense<0.000000e+00> : vector<32x32xf32>
    %13 = tpu.matmul %11, %12, %cst_4 {dimension_numbers = #tpu.dot_dimension_numbers<[1], [0], [0], [1], [0, 0, 1, 1], [], []>} : vector<32x136xf32>, vector<136x32xf32>, vector<32x32xf32> -> vector<32x32xf32>
    %c0_5 = arith.constant 0 : index
    %c0_6 = arith.constant 0 : index
    %14 = vector.load %arg3[%c0_5, %c0_6] : memref<32x96xf32, #tpu.memory_space<vmem>>, vector<32x96xf32>
    %c0_7 = arith.constant 0 : index
    %c0_8 = arith.constant 0 : index
    %15 = vector.load %arg2[%c0_7, %c0_8] : memref<64x384xf32, #tpu.memory_space<vmem>>, vector<32x96xf32>
    %c0_9 = arith.constant 0 : index
    %c128 = arith.constant 128 : index
    %16 = vector.load %arg2[%c0_9, %c128] : memref<64x384xf32, #tpu.memory_space<vmem>>, vector<32x64xf32>
    %c0_10 = arith.constant 0 : index
    %c256 = arith.constant 256 : index
    %17 = vector.load %arg2[%c0_10, %c256] : memref<64x384xf32, #tpu.memory_space<vmem>>, vector<32x32xf32>
    %c392 = arith.constant 392 : index
    %c0_11 = arith.constant 0 : index
    %18 = vector.load %arg1[%c392, %c0_11] : memref<520x32xf32, #tpu.memory_space<vmem>>, vector<64x32xf32>
    %19 = vector.extract_strided_slice %14 {offsets = [0, 0], sizes = [1, 96], strides = [1, 1]} : vector<32x96xf32> to vector<1x96xf32>
    %20 = vector.extract_strided_slice %14 {offsets = [1, 0], sizes = [1, 32], strides = [1, 1]} : vector<32x96xf32> to vector<1x32xf32>
    %21 = vector.extract_strided_slice %14 {offsets = [2, 0], sizes = [1, 32], strides = [1, 1]} : vector<32x96xf32> to vector<1x32xf32>
    %22 = vector.extract_strided_slice %14 {offsets = [3, 0], sizes = [1, 32], strides = [1, 1]} : vector<32x96xf32> to vector<1x32xf32>
    %23 = vector.extract_strided_slice %14 {offsets = [4, 0], sizes = [1, 64], strides = [1, 1]} : vector<32x96xf32> to vector<1x64xf32>
    %24 = vector.extract_strided_slice %14 {offsets = [5, 0], sizes = [1, 32], strides = [1, 1]} : vector<32x96xf32> to vector<1x32xf32>
    %25 = vector.extract_strided_slice %14 {offsets = [6, 0], sizes = [1, 32], strides = [1, 1]} : vector<32x96xf32> to vector<1x32xf32>
    %26 = vector.extract_strided_slice %14 {offsets = [7, 0], sizes = [1, 32], strides = [1, 1]} : vector<32x96xf32> to vector<1x32xf32>
    %cst_12 = arith.constant dense<0.000000e+00> : vector<32xf32>
    %27 = vector.multi_reduction <add>, %13, %cst_12 [1] : vector<32x32xf32> to vector<32xf32>
    %28 = vector.shape_cast %27 : vector<32xf32> to vector<32x1xf32>
    %cst_13 = arith.constant 3.200000e+01 : f32
    %29 = vector.broadcast %cst_13 : f32 to vector<32x1xf32>
    %30 = arith.divf %28, %29 : vector<32x1xf32>
    %31 = vector.broadcast %30 : vector<32x1xf32> to vector<32x32xf32>
    %32 = arith.subf %13, %31 : vector<32x32xf32>
    %33 = arith.mulf %32, %32 : vector<32x32xf32>
    %cst_14 = arith.constant dense<0.000000e+00> : vector<32xf32>
    %34 = vector.multi_reduction <add>, %33, %cst_14 [1] : vector<32x32xf32> to vector<32xf32>
    %35 = vector.shape_cast %34 : vector<32xf32> to vector<32x1xf32>
    %cst_15 = arith.constant 3.100000e+01 : f32
    %36 = vector.broadcast %cst_15 : f32 to vector<32x1xf32>
    %37 = arith.divf %35, %36 : vector<32x1xf32>
    %38 = vector.broadcast %30 : vector<32x1xf32> to vector<32x32xf32>
    %39 = arith.subf %13, %38 : vector<32x32xf32>
    %40 = vector.broadcast %21 : vector<1x32xf32> to vector<32x32xf32>
    %41 = arith.mulf %40, %39 : vector<32x32xf32>
    %42 = math.sqrt %37 : vector<32x1xf32>
    %cst_16 = arith.constant 9.99999997E-7 : f32
    %43 = vector.broadcast %cst_16 : f32 to vector<32x1xf32>
    %44 = arith.addf %42, %43 : vector<32x1xf32>
    %45 = vector.broadcast %44 : vector<32x1xf32> to vector<32x32xf32>
    %46 = arith.divf %41, %45 : vector<32x32xf32>
    %47 = vector.broadcast %22 : vector<1x32xf32> to vector<32x32xf32>
    %48 = arith.addf %46, %47 : vector<32x32xf32>
    %cst_17 = arith.constant dense<0.000000e+00> : vector<32x96xf32>
    %49 = tpu.matmul %48, %15, %cst_17 {dimension_numbers = #tpu.dot_dimension_numbers<[1], [0], [0], [1], [0, 0, 1, 1], [], []>} : vector<32x32xf32>, vector<32x96xf32>, vector<32x96xf32> -> vector<32x96xf32>
    %50 = vector.broadcast %19 : vector<1x96xf32> to vector<32x96xf32>
    %51 = arith.addf %49, %50 : vector<32x96xf32>
    %52 = vector.extract_strided_slice %51 {offsets = [0, 0], sizes = [32, 32], strides = [1, 1]} : vector<32x96xf32> to vector<32x32xf32>
    %53 = vector.extract_strided_slice %51 {offsets = [0, 32], sizes = [32, 32], strides = [1, 1]} : vector<32x96xf32> to vector<32x32xf32>
    %54 = vector.extract_strided_slice %51 {offsets = [0, 64], sizes = [32, 32], strides = [1, 1]} : vector<32x96xf32> to vector<32x32xf32>
    %c136 = arith.constant 136 : index
    %c0_18 = arith.constant 0 : index
    %55 = vector.load %arg1[%c136, %c0_18] : memref<520x32xf32, #tpu.memory_space<vmem>>, vector<128x32xf32>
    %c264 = arith.constant 264 : index
    %c0_19 = arith.constant 0 : index
    %56 = vector.load %arg1[%c264, %c0_19] : memref<520x32xf32, #tpu.memory_space<vmem>>, vector<128x32xf32>
    %57 = tpu.concatenate %52, %52, %52, %52 in 0 : vector<32x32xf32>, vector<32x32xf32>, vector<32x32xf32>, vector<32x32xf32> -> vector<128x32xf32>
    %58 = arith.mulf %57, %55 : vector<128x32xf32>
    %cst_20 = arith.constant dense<0.000000e+00> : vector<128x32xf32>
    %59 = tpu.matmul %58, %53, %cst_20 {dimension_numbers = #tpu.dot_dimension_numbers<[1], [1], [0], [0], [0, 0, 1, 0], [], []>} : vector<128x32xf32>, vector<32x32xf32>, vector<128x32xf32> -> vector<128x32xf32>
    %cst_21 = arith.constant 0.353553385 : f32
    %60 = vector.broadcast %cst_21 : f32 to vector<128x32xf32>
    %61 = arith.mulf %59, %60 : vector<128x32xf32>
    %62 = arith.addf %61, %56 : vector<128x32xf32>
    %cst_22 = arith.constant dense<0xFF800000> : vector<128xf32>
    %63 = vector.multi_reduction <maximumf>, %62, %cst_22 [1] : vector<128x32xf32> to vector<128xf32>
    %64 = vector.shape_cast %63 : vector<128xf32> to vector<128x1xf32>
    %65 = vector.broadcast %64 : vector<128x1xf32> to vector<128x32xf32>
    %66 = arith.subf %62, %65 : vector<128x32xf32>
    %67 = math.exp %66 : vector<128x32xf32>
    %cst_23 = arith.constant dense<0.000000e+00> : vector<128xf32>
    %68 = vector.multi_reduction <add>, %67, %cst_23 [1] : vector<128x32xf32> to vector<128xf32>
    %69 = vector.shape_cast %68 : vector<128xf32> to vector<128x1xf32>
    %70 = tpu.reciprocal %69 {approx = true} : vector<128x1xf32> -> vector<128x1xf32>
    %71 = vector.broadcast %70 : vector<128x1xf32> to vector<128x32xf32>
    %72 = arith.mulf %67, %71 : vector<128x32xf32>
    %cst_24 = arith.constant dense<0.000000e+00> : vector<128x32xf32>
    %73 = tpu.matmul %72, %54, %cst_24 {dimension_numbers = #tpu.dot_dimension_numbers<[1], [0], [0], [1], [0, 0, 1, 1], [], []>} : vector<128x32xf32>, vector<32x32xf32>, vector<128x32xf32> -> vector<128x32xf32>
    %74 = arith.mulf %73, %55 : vector<128x32xf32>
    %75 = vector.extract_strided_slice %74 {offsets = [0, 0], sizes = [32, 32], strides = [1, 1]} : vector<128x32xf32> to vector<32x32xf32>
    %76 = vector.extract_strided_slice %74 {offsets = [32, 0], sizes = [32, 32], strides = [1, 1]} : vector<128x32xf32> to vector<32x32xf32>
    %77 = arith.addf %75, %76 : vector<32x32xf32>
    %78 = vector.extract_strided_slice %74 {offsets = [64, 0], sizes = [32, 32], strides = [1, 1]} : vector<128x32xf32> to vector<32x32xf32>
    %79 = arith.addf %77, %78 : vector<32x32xf32>
    %80 = vector.extract_strided_slice %74 {offsets = [96, 0], sizes = [32, 32], strides = [1, 1]} : vector<128x32xf32> to vector<32x32xf32>
    %81 = arith.addf %79, %80 : vector<32x32xf32>
    %cst_25 = arith.constant dense<0.000000e+00> : vector<32x32xf32>
    %82 = tpu.matmul %81, %17, %cst_25 {dimension_numbers = #tpu.dot_dimension_numbers<[1], [0], [0], [1], [0, 0, 1, 1], [], []>} : vector<32x32xf32>, vector<32x32xf32>, vector<32x32xf32> -> vector<32x32xf32>
    %83 = arith.addf %13, %82 : vector<32x32xf32>
    %84 = vector.broadcast %20 : vector<1x32xf32> to vector<32x32xf32>
    %85 = arith.addf %83, %84 : vector<32x32xf32>
    %cst_26 = arith.constant dense<0.000000e+00> : vector<32xf32>
    %86 = vector.multi_reduction <add>, %85, %cst_26 [1] : vector<32x32xf32> to vector<32xf32>
    %87 = vector.shape_cast %86 : vector<32xf32> to vector<32x1xf32>
    %cst_27 = arith.constant 3.200000e+01 : f32
    %88 = vector.broadcast %cst_27 : f32 to vector<32x1xf32>
    %89 = arith.divf %87, %88 : vector<32x1xf32>
    %90 = vector.broadcast %89 : vector<32x1xf32> to vector<32x32xf32>
    %91 = arith.subf %85, %90 : vector<32x32xf32>
    %92 = arith.mulf %91, %91 : vector<32x32xf32>
    %cst_28 = arith.constant dense<0.000000e+00> : vector<32xf32>
    %93 = vector.multi_reduction <add>, %92, %cst_28 [1] : vector<32x32xf32> to vector<32xf32>
    %94 = vector.shape_cast %93 : vector<32xf32> to vector<32x1xf32>
    %cst_29 = arith.constant 3.100000e+01 : f32
    %95 = vector.broadcast %cst_29 : f32 to vector<32x1xf32>
    %96 = arith.divf %94, %95 : vector<32x1xf32>
    %97 = vector.broadcast %89 : vector<32x1xf32> to vector<32x32xf32>
    %98 = arith.subf %85, %97 : vector<32x32xf32>
    %99 = vector.broadcast %25 : vector<1x32xf32> to vector<32x32xf32>
    %100 = arith.mulf %99, %98 : vector<32x32xf32>
    %101 = math.sqrt %96 : vector<32x1xf32>
    %cst_30 = arith.constant 9.99999997E-7 : f32
    %102 = vector.broadcast %cst_30 : f32 to vector<32x1xf32>
    %103 = arith.addf %101, %102 : vector<32x1xf32>
    %104 = vector.broadcast %103 : vector<32x1xf32> to vector<32x32xf32>
    %105 = arith.divf %100, %104 : vector<32x32xf32>
    %106 = vector.broadcast %26 : vector<1x32xf32> to vector<32x32xf32>
    %107 = arith.addf %105, %106 : vector<32x32xf32>
    %cst_31 = arith.constant dense<0.000000e+00> : vector<32x64xf32>
    %108 = tpu.matmul %107, %16, %cst_31 {dimension_numbers = #tpu.dot_dimension_numbers<[1], [0], [0], [1], [0, 0, 1, 1], [], []>} : vector<32x32xf32>, vector<32x64xf32>, vector<32x64xf32> -> vector<32x64xf32>
    %109 = vector.broadcast %23 : vector<1x64xf32> to vector<32x64xf32>
    %110 = arith.addf %108, %109 : vector<32x64xf32>
    %cst_32 = arith.constant 0.000000e+00 : f32
    %111 = vector.broadcast %cst_32 : f32 to vector<32x64xf32>
    %112 = arith.maximumf %110, %111 : vector<32x64xf32>
    %cst_33 = arith.constant dense<0.000000e+00> : vector<32x32xf32>
    %113 = tpu.matmul %112, %18, %cst_33 {dimension_numbers = #tpu.dot_dimension_numbers<[1], [0], [0], [1], [0, 0, 1, 1], [], []>} : vector<32x64xf32>, vector<64x32xf32>, vector<32x32xf32> -> vector<32x32xf32>
    %114 = arith.addf %85, %113 : vector<32x32xf32>
    %115 = vector.broadcast %24 : vector<1x32xf32> to vector<32x32xf32>
    %116 = arith.addf %114, %115 : vector<32x32xf32>
    %c32 = arith.constant 32 : index
    %c0_34 = arith.constant 0 : index
    %117 = vector.load %arg2[%c32, %c0_34] : memref<64x384xf32, #tpu.memory_space<vmem>>, vector<32x96xf32>
    %c32_35 = arith.constant 32 : index
    %c128_36 = arith.constant 128 : index
    %118 = vector.load %arg2[%c32_35, %c128_36] : memref<64x384xf32, #tpu.memory_space<vmem>>, vector<32x64xf32>
    %c32_37 = arith.constant 32 : index
    %c256_38 = arith.constant 256 : index
    %119 = vector.load %arg2[%c32_37, %c256_38] : memref<64x384xf32, #tpu.memory_space<vmem>>, vector<32x32xf32>
    %c456 = arith.constant 456 : index
    %c0_39 = arith.constant 0 : index
    %120 = vector.load %arg1[%c456, %c0_39] : memref<520x32xf32, #tpu.memory_space<vmem>>, vector<64x32xf32>
    %121 = vector.extract_strided_slice %14 {offsets = [8, 0], sizes = [1, 96], strides = [1, 1]} : vector<32x96xf32> to vector<1x96xf32>
    %122 = vector.extract_strided_slice %14 {offsets = [9, 0], sizes = [1, 32], strides = [1, 1]} : vector<32x96xf32> to vector<1x32xf32>
    %123 = vector.extract_strided_slice %14 {offsets = [10, 0], sizes = [1, 32], strides = [1, 1]} : vector<32x96xf32> to vector<1x32xf32>
    %124 = vector.extract_strided_slice %14 {offsets = [11, 0], sizes = [1, 32], strides = [1, 1]} : vector<32x96xf32> to vector<1x32xf32>
    %125 = vector.extract_strided_slice %14 {offsets = [12, 0], sizes = [1, 64], strides = [1, 1]} : vector<32x96xf32> to vector<1x64xf32>
    %126 = vector.extract_strided_slice %14 {offsets = [13, 0], sizes = [1, 32], strides = [1, 1]} : vector<32x96xf32> to vector<1x32xf32>
    %127 = vector.extract_strided_slice %14 {offsets = [14, 0], sizes = [1, 32], strides = [1, 1]} : vector<32x96xf32> to vector<1x32xf32>
    %128 = vector.extract_strided_slice %14 {offsets = [15, 0], sizes = [1, 32], strides = [1, 1]} : vector<32x96xf32> to vector<1x32xf32>
    %cst_40 = arith.constant dense<0.000000e+00> : vector<32xf32>
    %129 = vector.multi_reduction <add>, %116, %cst_40 [1] : vector<32x32xf32> to vector<32xf32>
    %130 = vector.shape_cast %129 : vector<32xf32> to vector<32x1xf32>
    %cst_41 = arith.constant 3.200000e+01 : f32
    %131 = vector.broadcast %cst_41 : f32 to vector<32x1xf32>
    %132 = arith.divf %130, %131 : vector<32x1xf32>
    %133 = vector.broadcast %132 : vector<32x1xf32> to vector<32x32xf32>
    %134 = arith.subf %116, %133 : vector<32x32xf32>
    %135 = arith.mulf %134, %134 : vector<32x32xf32>
    %cst_42 = arith.constant dense<0.000000e+00> : vector<32xf32>
    %136 = vector.multi_reduction <add>, %135, %cst_42 [1] : vector<32x32xf32> to vector<32xf32>
    %137 = vector.shape_cast %136 : vector<32xf32> to vector<32x1xf32>
    %cst_43 = arith.constant 3.100000e+01 : f32
    %138 = vector.broadcast %cst_43 : f32 to vector<32x1xf32>
    %139 = arith.divf %137, %138 : vector<32x1xf32>
    %140 = vector.broadcast %132 : vector<32x1xf32> to vector<32x32xf32>
    %141 = arith.subf %116, %140 : vector<32x32xf32>
    %142 = vector.broadcast %123 : vector<1x32xf32> to vector<32x32xf32>
    %143 = arith.mulf %142, %141 : vector<32x32xf32>
    %144 = math.sqrt %139 : vector<32x1xf32>
    %cst_44 = arith.constant 9.99999997E-7 : f32
    %145 = vector.broadcast %cst_44 : f32 to vector<32x1xf32>
    %146 = arith.addf %144, %145 : vector<32x1xf32>
    %147 = vector.broadcast %146 : vector<32x1xf32> to vector<32x32xf32>
    %148 = arith.divf %143, %147 : vector<32x32xf32>
    %149 = vector.broadcast %124 : vector<1x32xf32> to vector<32x32xf32>
    %150 = arith.addf %148, %149 : vector<32x32xf32>
    %cst_45 = arith.constant dense<0.000000e+00> : vector<32x96xf32>
    %151 = tpu.matmul %150, %117, %cst_45 {dimension_numbers = #tpu.dot_dimension_numbers<[1], [0], [0], [1], [0, 0, 1, 1], [], []>} : vector<32x32xf32>, vector<32x96xf32>, vector<32x96xf32> -> vector<32x96xf32>
    %152 = vector.broadcast %121 : vector<1x96xf32> to vector<32x96xf32>
    %153 = arith.addf %151, %152 : vector<32x96xf32>
    %154 = vector.extract_strided_slice %153 {offsets = [0, 0], sizes = [32, 32], strides = [1, 1]} : vector<32x96xf32> to vector<32x32xf32>
    %155 = vector.extract_strided_slice %153 {offsets = [0, 32], sizes = [32, 32], strides = [1, 1]} : vector<32x96xf32> to vector<32x32xf32>
    %156 = vector.extract_strided_slice %153 {offsets = [0, 64], sizes = [32, 32], strides = [1, 1]} : vector<32x96xf32> to vector<32x32xf32>
    %c136_46 = arith.constant 136 : index
    %c0_47 = arith.constant 0 : index
    %157 = vector.load %arg1[%c136_46, %c0_47] : memref<520x32xf32, #tpu.memory_space<vmem>>, vector<128x32xf32>
    %c264_48 = arith.constant 264 : index
    %c0_49 = arith.constant 0 : index
    %158 = vector.load %arg1[%c264_48, %c0_49] : memref<520x32xf32, #tpu.memory_space<vmem>>, vector<128x32xf32>
    %159 = tpu.concatenate %154, %154, %154, %154 in 0 : vector<32x32xf32>, vector<32x32xf32>, vector<32x32xf32>, vector<32x32xf32> -> vector<128x32xf32>
    %160 = arith.mulf %159, %157 : vector<128x32xf32>
    %cst_50 = arith.constant dense<0.000000e+00> : vector<128x32xf32>
    %161 = tpu.matmul %160, %155, %cst_50 {dimension_numbers = #tpu.dot_dimension_numbers<[1], [1], [0], [0], [0, 0, 1, 0], [], []>} : vector<128x32xf32>, vector<32x32xf32>, vector<128x32xf32> -> vector<128x32xf32>
    %cst_51 = arith.constant 0.353553385 : f32
    %162 = vector.broadcast %cst_51 : f32 to vector<128x32xf32>
    %163 = arith.mulf %161, %162 : vector<128x32xf32>
    %164 = arith.addf %163, %158 : vector<128x32xf32>
    %cst_52 = arith.constant dense<0xFF800000> : vector<128xf32>
    %165 = vector.multi_reduction <maximumf>, %164, %cst_52 [1] : vector<128x32xf32> to vector<128xf32>
    %166 = vector.shape_cast %165 : vector<128xf32> to vector<128x1xf32>
    %167 = vector.broadcast %166 : vector<128x1xf32> to vector<128x32xf32>
    %168 = arith.subf %164, %167 : vector<128x32xf32>
    %169 = math.exp %168 : vector<128x32xf32>
    %cst_53 = arith.constant dense<0.000000e+00> : vector<128xf32>
    %170 = vector.multi_reduction <add>, %169, %cst_53 [1] : vector<128x32xf32> to vector<128xf32>
    %171 = vector.shape_cast %170 : vector<128xf32> to vector<128x1xf32>
    %172 = tpu.reciprocal %171 {approx = true} : vector<128x1xf32> -> vector<128x1xf32>
    %173 = vector.broadcast %172 : vector<128x1xf32> to vector<128x32xf32>
    %174 = arith.mulf %169, %173 : vector<128x32xf32>
    %cst_54 = arith.constant dense<0.000000e+00> : vector<128x32xf32>
    %175 = tpu.matmul %174, %156, %cst_54 {dimension_numbers = #tpu.dot_dimension_numbers<[1], [0], [0], [1], [0, 0, 1, 1], [], []>} : vector<128x32xf32>, vector<32x32xf32>, vector<128x32xf32> -> vector<128x32xf32>
    %176 = arith.mulf %175, %157 : vector<128x32xf32>
    %177 = vector.extract_strided_slice %176 {offsets = [0, 0], sizes = [32, 32], strides = [1, 1]} : vector<128x32xf32> to vector<32x32xf32>
    %178 = vector.extract_strided_slice %176 {offsets = [32, 0], sizes = [32, 32], strides = [1, 1]} : vector<128x32xf32> to vector<32x32xf32>
    %179 = arith.addf %177, %178 : vector<32x32xf32>
    %180 = vector.extract_strided_slice %176 {offsets = [64, 0], sizes = [32, 32], strides = [1, 1]} : vector<128x32xf32> to vector<32x32xf32>
    %181 = arith.addf %179, %180 : vector<32x32xf32>
    %182 = vector.extract_strided_slice %176 {offsets = [96, 0], sizes = [32, 32], strides = [1, 1]} : vector<128x32xf32> to vector<32x32xf32>
    %183 = arith.addf %181, %182 : vector<32x32xf32>
    %cst_55 = arith.constant dense<0.000000e+00> : vector<32x32xf32>
    %184 = tpu.matmul %183, %119, %cst_55 {dimension_numbers = #tpu.dot_dimension_numbers<[1], [0], [0], [1], [0, 0, 1, 1], [], []>} : vector<32x32xf32>, vector<32x32xf32>, vector<32x32xf32> -> vector<32x32xf32>
    %185 = arith.addf %116, %184 : vector<32x32xf32>
    %186 = vector.broadcast %122 : vector<1x32xf32> to vector<32x32xf32>
    %187 = arith.addf %185, %186 : vector<32x32xf32>
    %cst_56 = arith.constant dense<0.000000e+00> : vector<32xf32>
    %188 = vector.multi_reduction <add>, %187, %cst_56 [1] : vector<32x32xf32> to vector<32xf32>
    %189 = vector.shape_cast %188 : vector<32xf32> to vector<32x1xf32>
    %cst_57 = arith.constant 3.200000e+01 : f32
    %190 = vector.broadcast %cst_57 : f32 to vector<32x1xf32>
    %191 = arith.divf %189, %190 : vector<32x1xf32>
    %192 = vector.broadcast %191 : vector<32x1xf32> to vector<32x32xf32>
    %193 = arith.subf %187, %192 : vector<32x32xf32>
    %194 = arith.mulf %193, %193 : vector<32x32xf32>
    %cst_58 = arith.constant dense<0.000000e+00> : vector<32xf32>
    %195 = vector.multi_reduction <add>, %194, %cst_58 [1] : vector<32x32xf32> to vector<32xf32>
    %196 = vector.shape_cast %195 : vector<32xf32> to vector<32x1xf32>
    %cst_59 = arith.constant 3.100000e+01 : f32
    %197 = vector.broadcast %cst_59 : f32 to vector<32x1xf32>
    %198 = arith.divf %196, %197 : vector<32x1xf32>
    %199 = vector.broadcast %191 : vector<32x1xf32> to vector<32x32xf32>
    %200 = arith.subf %187, %199 : vector<32x32xf32>
    %201 = vector.broadcast %127 : vector<1x32xf32> to vector<32x32xf32>
    %202 = arith.mulf %201, %200 : vector<32x32xf32>
    %203 = math.sqrt %198 : vector<32x1xf32>
    %cst_60 = arith.constant 9.99999997E-7 : f32
    %204 = vector.broadcast %cst_60 : f32 to vector<32x1xf32>
    %205 = arith.addf %203, %204 : vector<32x1xf32>
    %206 = vector.broadcast %205 : vector<32x1xf32> to vector<32x32xf32>
    %207 = arith.divf %202, %206 : vector<32x32xf32>
    %208 = vector.broadcast %128 : vector<1x32xf32> to vector<32x32xf32>
    %209 = arith.addf %207, %208 : vector<32x32xf32>
    %cst_61 = arith.constant dense<0.000000e+00> : vector<32x64xf32>
    %210 = tpu.matmul %209, %118, %cst_61 {dimension_numbers = #tpu.dot_dimension_numbers<[1], [0], [0], [1], [0, 0, 1, 1], [], []>} : vector<32x32xf32>, vector<32x64xf32>, vector<32x64xf32> -> vector<32x64xf32>
    %211 = vector.broadcast %125 : vector<1x64xf32> to vector<32x64xf32>
    %212 = arith.addf %210, %211 : vector<32x64xf32>
    %cst_62 = arith.constant 0.000000e+00 : f32
    %213 = vector.broadcast %cst_62 : f32 to vector<32x64xf32>
    %214 = arith.maximumf %212, %213 : vector<32x64xf32>
    %cst_63 = arith.constant dense<0.000000e+00> : vector<32x32xf32>
    %215 = tpu.matmul %214, %120, %cst_63 {dimension_numbers = #tpu.dot_dimension_numbers<[1], [0], [0], [1], [0, 0, 1, 1], [], []>} : vector<32x64xf32>, vector<64x32xf32>, vector<32x32xf32> -> vector<32x32xf32>
    %216 = arith.addf %187, %215 : vector<32x32xf32>
    %217 = vector.broadcast %126 : vector<1x32xf32> to vector<32x32xf32>
    %218 = arith.addf %216, %217 : vector<32x32xf32>
    %219 = vector.extract_strided_slice %14 {offsets = [16, 0], sizes = [1, 32], strides = [1, 1]} : vector<32x96xf32> to vector<1x32xf32>
    %220 = vector.extract_strided_slice %14 {offsets = [17, 0], sizes = [1, 32], strides = [1, 1]} : vector<32x96xf32> to vector<1x32xf32>
    %cst_64 = arith.constant dense<0.000000e+00> : vector<32xf32>
    %221 = vector.multi_reduction <add>, %218, %cst_64 [1] : vector<32x32xf32> to vector<32xf32>
    %222 = vector.shape_cast %221 : vector<32xf32> to vector<32x1xf32>
    %cst_65 = arith.constant 3.200000e+01 : f32
    %223 = vector.broadcast %cst_65 : f32 to vector<32x1xf32>
    %224 = arith.divf %222, %223 : vector<32x1xf32>
    %225 = vector.broadcast %224 : vector<32x1xf32> to vector<32x32xf32>
    %226 = arith.subf %218, %225 : vector<32x32xf32>
    %227 = arith.mulf %226, %226 : vector<32x32xf32>
    %cst_66 = arith.constant dense<0.000000e+00> : vector<32xf32>
    %228 = vector.multi_reduction <add>, %227, %cst_66 [1] : vector<32x32xf32> to vector<32xf32>
    %229 = vector.shape_cast %228 : vector<32xf32> to vector<32x1xf32>
    %cst_67 = arith.constant 3.100000e+01 : f32
    %230 = vector.broadcast %cst_67 : f32 to vector<32x1xf32>
    %231 = arith.divf %229, %230 : vector<32x1xf32>
    %232 = vector.broadcast %224 : vector<32x1xf32> to vector<32x32xf32>
    %233 = arith.subf %218, %232 : vector<32x32xf32>
    %234 = vector.broadcast %219 : vector<1x32xf32> to vector<32x32xf32>
    %235 = arith.mulf %234, %233 : vector<32x32xf32>
    %236 = math.sqrt %231 : vector<32x1xf32>
    %cst_68 = arith.constant 9.99999997E-7 : f32
    %237 = vector.broadcast %cst_68 : f32 to vector<32x1xf32>
    %238 = arith.addf %236, %237 : vector<32x1xf32>
    %239 = vector.broadcast %238 : vector<32x1xf32> to vector<32x32xf32>
    %240 = arith.divf %235, %239 : vector<32x32xf32>
    %241 = vector.broadcast %220 : vector<1x32xf32> to vector<32x32xf32>
    %242 = arith.addf %240, %241 : vector<32x32xf32>
    %243 = vector.extract_strided_slice %14 {offsets = [24, 0], sizes = [8, 64], strides = [1, 1]} : vector<32x96xf32> to vector<8x64xf32>
    %244 = tpu.concatenate %13, %242 in 0 : vector<32x32xf32>, vector<32x32xf32> -> vector<64x32xf32>
    %cst_69 = arith.constant dense<0.000000e+00> : vector<8x32xf32>
    %245 = tpu.matmul %243, %244, %cst_69 {dimension_numbers = #tpu.dot_dimension_numbers<[1], [0], [0], [1], [0, 0, 1, 1], [], []>} : vector<8x64xf32>, vector<64x32xf32>, vector<8x32xf32> -> vector<8x32xf32>
    %c4_i32 = arith.constant 4 : i32
    %246 = tpu.dynamic_rotate %245 by %c4_i32 dim 0 : vector<8x32xf32>, i32 -> vector<8x32xf32>
    %247 = arith.mulf %245, %246 : vector<8x32xf32>
    %cst_70 = arith.constant dense<0.000000e+00> : vector<8xf32>
    %248 = vector.multi_reduction <add>, %247, %cst_70 [1] : vector<8x32xf32> to vector<8xf32>
    %249 = vector.shape_cast %248 : vector<8xf32> to vector<8x1xf32>
    %250 = arith.mulf %245, %245 : vector<8x32xf32>
    %cst_71 = arith.constant dense<0.000000e+00> : vector<8xf32>
    %251 = vector.multi_reduction <add>, %250, %cst_71 [1] : vector<8x32xf32> to vector<8xf32>
    %252 = vector.shape_cast %251 : vector<8xf32> to vector<8x1xf32>
    %253 = math.sqrt %252 : vector<8x1xf32>
    %254 = arith.mulf %246, %246 : vector<8x32xf32>
    %cst_72 = arith.constant dense<0.000000e+00> : vector<8xf32>
    %255 = vector.multi_reduction <add>, %254, %cst_72 [1] : vector<8x32xf32> to vector<8xf32>
    %256 = vector.shape_cast %255 : vector<8xf32> to vector<8x1xf32>
    %257 = math.sqrt %256 : vector<8x1xf32>
    %cst_73 = arith.constant 9.99999997E-7 : f32
    %258 = vector.broadcast %cst_73 : f32 to vector<8x1xf32>
    %259 = arith.maximumf %253, %258 : vector<8x1xf32>
    %cst_74 = arith.constant 9.99999997E-7 : f32
    %260 = vector.broadcast %cst_74 : f32 to vector<8x1xf32>
    %261 = arith.maximumf %257, %260 : vector<8x1xf32>
    %262 = arith.mulf %259, %261 : vector<8x1xf32>
    %263 = arith.divf %249, %262 : vector<8x1xf32>
    %264 = vector.shape_cast %263 : vector<8x1xf32> to vector<8x1xf32>
    %265 = vector.broadcast %264 : vector<8x1xf32> to vector<8x128xf32>
    %c0_75 = arith.constant 0 : index
    %c0_76 = arith.constant 0 : index
    %266 = vector.load %arg4[%c0_75, %c0_76] : memref<8x128xf32, #tpu.memory_space<vmem>>, vector<8x128xf32>
    tpu.vector_store %arg4[%c0_75, %c0_76], %265 {strides = array<i32>} : memref<8x128xf32, #tpu.memory_space<vmem>>, vector<8x128xf32>,
    return
  }
}

</mosaic_0001>

<llo_original>
// kernel: transformer_forward.1
$region0: #{transformer_forward.1}
  #allocation0 [shape = 'u32[]', space=smem, size = 0x4, offset = 0x4, fixed_abs, tag = 'smem constant byte address 0x4 - core index']
  #allocation1 [shape = 'u32[144,128]{1,0:T(1,128)}', space=vmem, size = 0x12000, scoped, tag = 'internal scratch']
  %s0 = inlined_call_operand.vmem [shape: s32[32,1], index: 0, kind: input, shape index: {}]
  %s1 = inlined_call_operand.vmem [shape: f32[520,32], index: 1, kind: input, shape index: {}]
  %s2 = inlined_call_operand.vmem [shape: f32[64,384], index: 2, kind: input, shape index: {}]
  %s3 = inlined_call_operand.vmem [shape: f32[32,96], index: 3, kind: input, shape index: {}]
  %s4 = inlined_call_operand.vmem [shape: f32[8,128], index: 4, kind: output, shape index: {}]
  %s5 = sld [smem:[#allocation0]]
  $region26: #{transformer_forward.1} parent=0
    _
  %s7 = ssub.s32 1, %s5
  %s8 = scalar_select 0, %s7, %s5
  // Predicated region
  $region2: #{transformer_forward.1} parent=0 // pred_check
    _
  $region3: #{transformer_forward.1} parent=0 // pred_check_branch
    %10 = sbr.rel (0) target = $region5
  $region4: #{transformer_forward.1} parent=0 // pred_region
    _
  $region5: #{transformer_forward.1} parent=0 // pred_fallthru
    _
  // Predicated region
  $region6: #{transformer_forward.1} parent=0 // pred_check
    _
  $region7: #{transformer_forward.1} parent=0 // pred_check_branch
    %12 = sbr.rel (0) target = $region9
  $region8: #{transformer_forward.1} parent=0 // pred_region
    _
  $region9: #{transformer_forward.1} parent=0 // pred_fallthru
    _
  // Predicated region
  $region10: #{transformer_forward.1} parent=0 // pred_check
    _
  $region11: #{transformer_forward.1} parent=0 // pred_check_branch
    %14 = sbr.rel (0) target = $region13
  $region12: #{transformer_forward.1} parent=0 // pred_region
    _
  $region13: #{transformer_forward.1} parent=0 // pred_fallthru
    _
  // Predicated region
  $region14: #{transformer_forward.1} parent=0 // pred_check
    _
  $region15: #{transformer_forward.1} parent=0 // pred_check_branch
    %16 = sbr.rel (0) target = $region17
  $region16: #{transformer_forward.1} parent=0 // pred_region
    _
  $region17: #{transformer_forward.1} parent=0 // pred_fallthru
    _
  %v17 = vld [vmem:[%s0] sm:$0xff]
  %v18 = vld [vmem:[%s0 + $0x8] sm:$0xff]
  %v19 = vld [vmem:[%s0 + $0x10] sm:$0xff]
  %v20 = vld [vmem:[%s0 + $0x18] sm:$0xff]
  %v21 = vlaneseq
  %v22 = vshrl.u32 %v21, 7
  %v23 = vadd.s32 %v22, 8
  %v24 = vadd.s32 %v22, 16
  %v25 = vadd.s32 %v22, 24
  %v26 = vlaneseq
  %v27 = vand.u32 %v26, 127
  %v28 = vadd.s32 %v27, 128
  %29 = vset.pattern.permute.xlu0 0
  %30 = vperm.xlu0 %29, %v17
  %v31 = vpop.permute.xlu0 %30
  %32 = vset.pattern.permute.xlu0 0
  %33 = vperm.xlu0 %32, %v18
  %v34 = vpop.permute.xlu0 %33
  %35 = vset.pattern.permute.xlu0 0
  %36 = vperm.xlu0 %35, %v19
  %v37 = vpop.permute.xlu0 %36
  %38 = vset.pattern.permute.xlu0 0
  %39 = vperm.xlu0 %38, %v20
  %v40 = vpop.permute.xlu0 %39
  %vm41 = vcmp.eq.s32.totalorder %v27, %v31
  %vm42 = vcmp.eq.s32.totalorder %v28, %v31
  %vm43 = vcmp.eq.s32.totalorder %v27, %v34
  %vm44 = vcmp.eq.s32.totalorder %v28, %v34
  %vm45 = vcmp.eq.s32.totalorder %v27, %v37
  %vm46 = vcmp.eq.s32.totalorder %v28, %v37
  %vm47 = vcmp.eq.s32.totalorder %v27, %v40
  %vm48 = vcmp.eq.s32.totalorder %v28, %v40
  %v49 = vadd.s32 %v22, 100
  %v50 = vadd.s32 %v23, 100
  %v51 = vadd.s32 %v24, 100
  %v52 = vadd.s32 %v25, 100
  %vm53 = vcmp.eq.s32.totalorder %v27, %v49
  %vm54 = vcmp.eq.s32.totalorder %v28, %v49
  %vm55 = vcmp.eq.s32.totalorder %v27, %v50
  %vm56 = vcmp.eq.s32.totalorder %v28, %v50
  %vm57 = vcmp.eq.s32.totalorder %v27, %v51
  %vm58 = vcmp.eq.s32.totalorder %v28, %v51
  %vm59 = vcmp.eq.s32.totalorder %v27, %v52
  %vm60 = vcmp.eq.s32.totalorder %v28, %v52
  %vm61 = vmor %vm41, %vm53
  %vm62 = vmor %vm42, %vm54
  %vm63 = vmor %vm43, %vm55
  %vm64 = vmor %vm44, %vm56
  %vm65 = vmor %vm45, %vm57
  %vm66 = vmor %vm46, %vm58
  %vm67 = vmor %vm47, %vm59
  %vm68 = vmor %vm48, %vm60
  %v69 = vsel %vm61, 1.0, 0.0
  %v70 = vsel %vm62, 1.0, 0.0
  %v71 = vsel %vm63, 1.0, 0.0
  %v72 = vsel %vm64, 1.0, 0.0
  %v73 = vsel %vm65, 1.0, 0.0
  %v74 = vsel %vm66, 1.0, 0.0
  %v75 = vsel %vm67, 1.0, 0.0
  %v76 = vsel %vm68, 1.0, 0.0
  %v77 = vld [vmem:[%s1] sm:$0xff]
  %v78 = vld [vmem:[%s1 + $0x8] sm:$0xff]
  %v79 = vld [vmem:[%s1 + $0x10] sm:$0xff]
  %v80 = vld [vmem:[%s1 + $0x18] sm:$0xff]
  %v81 = vld [vmem:[%s1 + $0x20] sm:$0xff]
  %v82 = vld [vmem:[%s1 + $0x28] sm:$0xff]
  %v83 = vld [vmem:[%s1 + $0x30] sm:$0xff]
  %v84 = vld [vmem:[%s1 + $0x38] sm:$0xff]
  %v85 = vld [vmem:[%s1 + $0x40] sm:$0xff]
  %v86 = vld [vmem:[%s1 + $0x48] sm:$0xff]
  %v87 = vld [vmem:[%s1 + $0x50] sm:$0xff]
  %v88 = vld [vmem:[%s1 + $0x58] sm:$0xff]
  %v89 = vld [vmem:[%s1 + $0x60] sm:$0xff]
  %v90 = vld [vmem:[%s1 + $0x68] sm:$0xff]
  %v91 = vld [vmem:[%s1 + $0x70] sm:$0xff]
  %v92 = vld [vmem:[%s1 + $0x78] sm:$0xff]
  %v93 = vld [vmem:[%s1 + $0x80] sm:$0xff]
  %vm94 = vcmask 64512
  %v96 = vsel %vm94, %v70, 0
  %v99 = vsel %vm94, %v72, 0
  %v102 = vsel %vm94, %v74, 0
  %v105 = vsel %vm94, %v76, 0
  %107 = vmatprep.subr.mxu0 0.0
  %108 = vmatpush1.msra.mxu0 %v77
  %109 = vmatprep.subr.mxu0 0.0
  %110 = vmatpush1.msra.mxu0 %v78
  %111 = vmatprep.subr.mxu0 0.0
  %112 = vmatpush1.msra.mxu0 %v79
  %113 = vmatprep.subr.mxu0 0.0
  %114 = vmatpush1.msra.mxu0 %v80
  %115 = vmatprep.subr.mxu0 0.0
  %116 = vmatpush1.msra.mxu0 %v81
  %117 = vmatprep.subr.mxu0 0.0
  %118 = vmatpush1.msra.mxu0 %v82
  %119 = vmatprep.subr.mxu0 0.0
  %120 = vmatpush1.msra.mxu0 %v83
  %121 = vmatprep.subr.mxu0 0.0
  %122 = vmatpush1.msra.mxu0 %v84
  %123 = vmatprep.subr.mxu0 0.0
  %124 = vmatpush1.msra.mxu0 %v85
  %125 = vmatprep.subr.mxu0 0.0
  %126 = vmatpush1.msra.mxu0 %v86
  %127 = vmatprep.subr.mxu0 0.0
  %128 = vmatpush1.msra.mxu0 %v87
  %129 = vmatprep.subr.mxu0 0.0
  %130 = vmatpush1.msra.mxu0 %v88
  %131 = vmatprep.subr.mxu0 0.0
  %132 = vmatpush1.msra.mxu0 %v89
  %133 = vmatprep.subr.mxu0 0.0
  %134 = vmatpush1.msra.mxu0 %v90
  %135 = vmatprep.subr.mxu0 0.0
  %136 = vmatpush1.msra.mxu0 %v91
  %137 = vmatprep.subr.mxu0 0.0
  %138 = vmatpush1.msra.mxu0 %v92
  %139 = vmatprep.subr.mxu0 0.0
  %140 = vmatpush1.msra.mxu0 %v93
  %141 = vmatprep.subr.mxu0 0.0
  %142 = vmatpush1.msra.mxu0 0.0
  %143 = vmatprep.subr.mxu0 0.0
  %144 = vmatpush1.msra.mxu0 0.0
  %145 = vmatprep.subr.mxu0 0.0
  %146 = vmatpush1.msra.mxu0 0.0
  %147 = vmatprep.subr.mxu0 0.0
  %148 = vmatpush1.msra.mxu0 0.0
  %149 = vmatprep.subr.mxu0 0.0
  %150 = vmatpush1.msra.mxu0 0.0
  %151 = vmatprep.subr.mxu0 0.0
  %152 = vmatpush1.msra.mxu0 0.0
  %153 = vmatprep.subr.mxu0 0.0
  %154 = vmatpush1.msra.mxu0 0.0
  %155 = vmatprep.subr.mxu0 0.0
  %156 = vmatpush1.msra.mxu0 0.0
  %157 = vmatprep.subr.mxu0 0.0
  %158 = vmatpush1.msra.mxu0 0.0
  %159 = vmatprep.subr.mxu0 0.0
  %160 = vmatpush1.msra.mxu0 0.0
  %161 = vmatprep.subr.mxu0 0.0
  %162 = vmatpush1.msra.mxu0 0.0
  %163 = vmatprep.subr.mxu0 0.0
  %164 = vmatpush1.msra.mxu0 0.0
  %165 = vmatprep.subr.mxu0 0.0
  %166 = vmatpush1.msra.mxu0 0.0
  %167 = vmatprep.subr.mxu0 0.0
  %168 = vmatpush1.msra.mxu0 0.0
  %169 = vmatprep.subr.mxu0 0.0
  %170 = vmatpush1.msra.mxu0 0.0
  %171 = vmatprep.mubr.f32.mxu0 %v96
  %172 = vmatmul.mubr.f32.gmra.mrb[0].mxu0 %v69
  %v173 = vpop.f32.mrb[0].mxu0
  %v174 = vadd.f32 0.0, %v173
  %v175 = vpop.f32.mrb[0].mxu0
  %176 = vmatprep.mubr.f32.mxu0 %v99
  %177 = vmatmul.mubr.f32.gmra.mrb[0].mxu0 %v71
  %v178 = vpop.f32.mrb[0].mxu0
  %v179 = vadd.f32 0.0, %v178
  %v180 = vpop.f32.mrb[0].mxu0
  %181 = vmatprep.mubr.f32.mxu0 %v102
  %182 = vmatmul.mubr.f32.gmra.mrb[0].mxu0 %v73
  %v183 = vpop.f32.mrb[0].mxu0
  %v184 = vadd.f32 0.0, %v183
  %v185 = vpop.f32.mrb[0].mxu0
  %186 = vmatprep.mubr.f32.mxu0 %v105
  %187 = vmatmul.mubr.f32.gmra.mrb[0].mxu0 %v75
  %v188 = vpop.f32.mrb[0].mxu0
  %v189 = vadd.f32 0.0, %v188
  %v190 = vpop.f32.mrb[0].mxu0
  %191 = vdwg.mxu0
  %v192 = vld [vmem:[%s3] sm:$0xff]
  %v193 = vld [vmem:[%s3 + $0x8] sm:$0xff]
  %v194 = vld [vmem:[%s3 + $0x10] sm:$0xff]
  %v195 = vld [vmem:[%s3 + $0x18] sm:$0xff]
  %v196 = vld [vmem:[%s2] sm:$0xff]
  %v197 = vld [vmem:[%s2 + $0x18] sm:$0xff]
  %v198 = vld [vmem:[%s2 + $0x30] sm:$0xff]
  %v199 = vld [vmem:[%s2 + $0x48] sm:$0xff]
  %v200 = vld [vmem:[%s2 + $0x8] sm:$0xff]
  %v201 = vld [vmem:[%s2 + $0x20] sm:$0xff]
  %v202 = vld [vmem:[%s2 + $0x38] sm:$0xff]
  %v203 = vld [vmem:[%s2 + $0x50] sm:$0xff]
  %v204 = vld [vmem:[%s2 + $0x10] sm:$0xff]
  %v205 = vld [vmem:[%s2 + $0x28] sm:$0xff]
  %v206 = vld [vmem:[%s2 + $0x40] sm:$0xff]
  %v207 = vld [vmem:[%s2 + $0x58] sm:$0xff]
  %v208 = vld [vmem:[%s1 + $0x188] sm:$0xff]
  %v209 = vld [vmem:[%s1 + $0x190] sm:$0xff]
  %v210 = vld [vmem:[%s1 + $0x198] sm:$0xff]
  %v211 = vld [vmem:[%s1 + $0x1a0] sm:$0xff]
  %v212 = vld [vmem:[%s1 + $0x1a8] sm:$0xff]
  %v213 = vld [vmem:[%s1 + $0x1b0] sm:$0xff]
  %v214 = vld [vmem:[%s1 + $0x1b8] sm:$0xff]
  %v215 = vld [vmem:[%s1 + $0x1c0] sm:$0xff]
  %vm216 = vcmask 261120
  %v217 = vsel %vm216, %v174, 0.0
  %218 = vadd.xlane.f32.xlu0 %v217
  %v219 = vpop.xlane.xlu0 %218
  %v220 = vsel %vm216, %v179, 0.0
  %221 = vadd.xlane.f32.xlu0 %v220
  %v222 = vpop.xlane.xlu0 %221
  %v223 = vsel %vm216, %v184, 0.0
  %224 = vadd.xlane.f32.xlu0 %v223
  %v225 = vpop.xlane.xlu0 %224
  %v226 = vsel %vm216, %v189, 0.0
  %227 = vadd.xlane.f32.xlu0 %v226
  %v228 = vpop.xlane.xlu0 %227
  %v229 = vrcp.pop 32.0
  %v230 = vmul.f32 %v219, %v229
  %v231 = vmul.f32 %v222, %v229
  %v232 = vmul.f32 %v225, %v229
  %v233 = vmul.f32 %v228, %v229
  %v234 = vsub.f32 %v174, %v230
  %v235 = vsub.f32 %v179, %v231
  %v236 = vsub.f32 %v184, %v232
  %v237 = vsub.f32 %v189, %v233
  %v238 = vmul.f32 %v234, %v234
  %v239 = vmul.f32 %v235, %v235
  %v240 = vmul.f32 %v236, %v236
  %v241 = vmul.f32 %v237, %v237
  %v242 = vsel %vm216, %v238, 0.0
  %243 = vadd.xlane.f32.xlu0 %v242
  %v244 = vpop.xlane.xlu0 %243
  %v245 = vsel %vm216, %v239, 0.0
  %246 = vadd.xlane.f32.xlu0 %v245
  %v247 = vpop.xlane.xlu0 %246
  %v248 = vsel %vm216, %v240, 0.0
  %249 = vadd.xlane.f32.xlu0 %v248
  %v250 = vpop.xlane.xlu0 %249
  %v251 = vsel %vm216, %v241, 0.0
  %252 = vadd.xlane.f32.xlu0 %v251
  %v253 = vpop.xlane.xlu0 %252
  %v254 = vrcp.pop 31.0
  %v255 = vmul.f32 %v244, %v254
  %v256 = vmul.f32 %v247, %v254
  %v257 = vmul.f32 %v250, %v254
  %v258 = vmul.f32 %v253, %v254
  %v259 = vlaneseq
  %v260 = vshrl.u32 %v259, 7
  %v261 = vsub.s32 2, %v260
  %v262 = vrot.slane %v192, %v261
  %v263 = vmul.f32 %v262, %v234
  %v264 = vmul.f32 %v262, %v235
  %v265 = vmul.f32 %v262, %v236
  %v266 = vmul.f32 %v262, %v237
  %v267 = vrsqrt.pop %v255
  %v268 = vmul.f32 %v255, %v267
  %vm269 = vcmp.eq.f32.partialorder %v255, inf
  %v270 = vsel %vm269, %v255, %v268
  %vm271 = vcmp.eq.f32.partialorder %v255, 0.0
  %v272 = vand.u32 %v255, 2147483648
  %v273 = vsel %vm271, %v272, %v270
  %v274 = vrsqrt.pop %v256
  %v275 = vmul.f32 %v256, %v274
  %vm276 = vcmp.eq.f32.partialorder %v256, inf
  %v277 = vsel %vm276, %v256, %v275
  %vm278 = vcmp.eq.f32.partialorder %v256, 0.0
  %v279 = vand.u32 %v256, 2147483648
  %v280 = vsel %vm278, %v279, %v277
  %v281 = vrsqrt.pop %v257
  %v282 = vmul.f32 %v257, %v281
  %vm283 = vcmp.eq.f32.partialorder %v257, inf
  %v284 = vsel %vm283, %v257, %v282
  %vm285 = vcmp.eq.f32.partialorder %v257, 0.0
  %v286 = vand.u32 %v257, 2147483648
  %v287 = vsel %vm285, %v286, %v284
  %v288 = vrsqrt.pop %v258
  %v289 = vmul.f32 %v258, %v288
  %vm290 = vcmp.eq.f32.partialorder %v258, inf
  %v291 = vsel %vm290, %v258, %v289
  %vm292 = vcmp.eq.f32.partialorder %v258, 0.0
  %v293 = vand.u32 %v258, 2147483648
  %v294 = vsel %vm292, %v293, %v291
  %v295 = vadd.f32 %v273, 1e-06
  %v296 = vadd.f32 %v280, 1e-06
  %v297 = vadd.f32 %v287, 1e-06
  %v298 = vadd.f32 %v294, 1e-06
  %v299 = vrcp.pop %v295
  %v300 = vmul.f32 %v263, %v299
  %v301 = vrcp.pop %v296
  %v302 = vmul.f32 %v264, %v301
  %v303 = vrcp.pop %v297
  %v304 = vmul.f32 %v265, %v303
  %v305 = vrcp.pop %v298
  %v306 = vmul.f32 %v266, %v305
  %v307 = vlaneseq
  %v308 = vshrl.u32 %v307, 7
  %v309 = vsub.s32 3, %v308
  %v310 = vrot.slane %v192, %v309
  %v311 = vadd.f32 %v300, %v310
  %v312 = vadd.f32 %v302, %v310
  %v313 = vadd.f32 %v304, %v310
  %v314 = vadd.f32 %v306, %v310
  %v315 = vlaneseq
  %v316 = vshrl.u32 %v315, 7
  %v317 = vsub.s32 0, %v316
  %v318 = vrot.slane %v192, %v317
  %v320 = vsel %vm216, %v311, 0
  %v323 = vsel %vm216, %v312, 0
  %v326 = vsel %vm216, %v313, 0
  %v329 = vsel %vm216, %v314, 0
  %331 = vmatprep.subr.mxu0 0.0
  %332 = vmatpush1.msra.mxu0 %v196
  %333 = vmatprep.subr.mxu0 0.0
  %334 = vmatpush1.msra.mxu0 %v197
  %335 = vmatprep.subr.mxu0 0.0
  %336 = vmatpush1.msra.mxu0 %v198
  %337 = vmatprep.subr.mxu0 0.0
  %338 = vmatpush1.msra.mxu0 %v199
  %339 = vmatprep.subr.mxu0 0.0
  %340 = vmatpush1.msra.mxu0 0.0
  %341 = vmatprep.subr.mxu0 0.0
  %342 = vmatpush1.msra.mxu0 0.0
  %343 = vmatprep.subr.mxu0 0.0
  %344 = vmatpush1.msra.mxu0 0.0
  %345 = vmatprep.subr.mxu0 0.0
  %346 = vmatpush1.msra.mxu0 0.0
  %347 = vmatprep.subr.mxu0 0.0
  %348 = vmatpush1.msra.mxu0 0.0
  %349 = vmatprep.subr.mxu0 0.0
  %350 = vmatpush1.msra.mxu0 0.0
  %351 = vmatprep.subr.mxu0 0.0
  %352 = vmatpush1.msra.mxu0 0.0
  %353 = vmatprep.subr.mxu0 0.0
  %354 = vmatpush1.msra.mxu0 0.0
  %355 = vmatprep.subr.mxu0 0.0
  %356 = vmatpush1.msra.mxu0 0.0
  %357 = vmatprep.subr.mxu0 0.0
  %358 = vmatpush1.msra.mxu0 0.0
  %359 = vmatprep.subr.mxu0 0.0
  %360 = vmatpush1.msra.mxu0 0.0
  %361 = vmatprep.subr.mxu0 0.0
  %362 = vmatpush1.msra.mxu0 0.0
  %363 = vmatprep.subr.mxu0 0.0
  %364 = vmatpush1.msra.mxu0 0.0
  %365 = vmatprep.subr.mxu0 0.0
  %366 = vmatpush1.msra.mxu0 0.0
  %367 = vmatprep.subr.mxu0 0.0
  %368 = vmatpush1.msra.mxu0 0.0
  %369 = vmatprep.subr.mxu0 0.0
  %370 = vmatpush1.msra.mxu0 0.0
  %371 = vmatprep.subr.mxu0 0.0
  %372 = vmatpush1.msra.mxu0 0.0
  %373 = vmatprep.subr.mxu0 0.0
  %374 = vmatpush1.msra.mxu0 0.0
  %375 = vmatprep.subr.mxu0 0.0
  %376 = vmatpush1.msra.mxu0 0.0
  %377 = vmatprep.subr.mxu0 0.0
  %378 = vmatpush1.msra.mxu0 0.0
  %379 = vmatprep.subr.mxu0 0.0
  %380 = vmatpush1.msra.mxu0 0.0
  %381 = vmatprep.subr.mxu0 0.0
  %382 = vmatpush1.msra.mxu0 0.0
  %383 = vmatprep.subr.mxu0 0.0
  %384 = vmatpush1.msra.mxu0 0.0
  %385 = vmatprep.subr.mxu0 0.0
  %386 = vmatpush1.msra.mxu0 0.0
  %387 = vmatprep.subr.mxu0 0.0
  %388 = vmatpush1.msra.mxu0 0.0
  %389 = vmatprep.subr.mxu0 0.0
  %390 = vmatpush1.msra.mxu0 0.0
  %391 = vmatprep.subr.mxu0 0.0
  %392 = vmatpush1.msra.mxu0 0.0
  %393 = vmatprep.subr.mxu0 0.0
  %394 = vmatpush1.msra.mxu0 0.0
  %395 = vmatprep.mubr.f32.mxu0 0.0
  %396 = vmatmul.mubr.f32.gmra.mrb[0].mxu0 %v320
  %v397 = vpop.f32.mrb[0].mxu0
  %v398 = vadd.f32 %v318, %v397
  %v399 = vpop.f32.mrb[0].mxu0
  %400 = vmatprep.mubr.f32.mxu0 0.0
  %401 = vmatmul.mubr.f32.gmra.mrb[0].mxu0 %v323
  %v402 = vpop.f32.mrb[0].mxu0
  %v403 = vadd.f32 %v318, %v402
  %v404 = vpop.f32.mrb[0].mxu0
  %405 = vmatprep.mubr.f32.mxu0 0.0
  %406 = vmatmul.mubr.f32.gmra.mrb[0].mxu0 %v326
  %v407 = vpop.f32.mrb[0].mxu0
  %v408 = vadd.f32 %v318, %v407
  %v409 = vpop.f32.mrb[0].mxu0
  %410 = vmatprep.mubr.f32.mxu0 0.0
  %411 = vmatmul.mubr.f32.gmra.mrb[0].mxu0 %v329
  %v412 = vpop.f32.mrb[0].mxu0
  %v413 = vadd.f32 %v318, %v412
  %v414 = vpop.f32.mrb[0].mxu0
  %415 = vdwg.mxu0
  %v416 = vld [vmem:[%s1 + $0x88] sm:$0xff]
  %v417 = vld [vmem:[%s1 + $0x90] sm:$0xff]
  %v418 = vld [vmem:[%s1 + $0x98] sm:$0xff]
  %v419 = vld [vmem:[%s1 + $0xa0] sm:$0xff]
  %v420 = vld [vmem:[%s1 + $0xa8] sm:$0xff]
  %v421 = vld [vmem:[%s1 + $0xb0] sm:$0xff]
  %v422 = vld [vmem:[%s1 + $0xb8] sm:$0xff]
  %v423 = vld [vmem:[%s1 + $0xc0] sm:$0xff]
  %v424 = vld [vmem:[%s1 + $0xc8] sm:$0xff]
  %v425 = vld [vmem:[%s1 + $0xd0] sm:$0xff]
  %v426 = vld [vmem:[%s1 + $0xd8] sm:$0xff]
  %v427 = vld [vmem:[%s1 + $0xe0] sm:$0xff]
  %v428 = vld [vmem:[%s1 + $0xe8] sm:$0xff]
  %v429 = vld [vmem:[%s1 + $0xf0] sm:$0xff]
  %v430 = vld [vmem:[%s1 + $0xf8] sm:$0xff]
  %v431 = vld [vmem:[%s1 + $0x100] sm:$0xff]
  %v432 = vld [vmem:[%s1 + $0x108] sm:$0xff]
  %v433 = vld [vmem:[%s1 + $0x110] sm:$0xff]
  %v434 = vld [vmem:[%s1 + $0x118] sm:$0xff]
  %v435 = vld [vmem:[%s1 + $0x120] sm:$0xff]
  %v436 = vld [vmem:[%s1 + $0x128] sm:$0xff]
  %v437 = vld [vmem:[%s1 + $0x130] sm:$0xff]
  %v438 = vld [vmem:[%s1 + $0x138] sm:$0xff]
  %v439 = vld [vmem:[%s1 + $0x140] sm:$0xff]
  %v440 = vld [vmem:[%s1 + $0x148] sm:$0xff]
  %v441 = vld [vmem:[%s1 + $0x150] sm:$0xff]
  %v442 = vld [vmem:[%s1 + $0x158] sm:$0xff]
  %v443 = vld [vmem:[%s1 + $0x160] sm:$0xff]
  %v444 = vld [vmem:[%s1 + $0x168] sm:$0xff]
  %v445 = vld [vmem:[%s1 + $0x170] sm:$0xff]
  %v446 = vld [vmem:[%s1 + $0x178] sm:$0xff]
  %v447 = vld [vmem:[%s1 + $0x180] sm:$0xff]
  %v448 = vmul.f32 %v398, %v416
  %v449 = vmul.f32 %v403, %v417
  %v450 = vmul.f32 %v408, %v418
  %v451 = vmul.f32 %v413, %v419
  %v452 = vmul.f32 %v398, %v420
  %v453 = vmul.f32 %v403, %v421
  %v454 = vmul.f32 %v408, %v422
  %v455 = vmul.f32 %v413, %v423
  %v456 = vmul.f32 %v398, %v424
  %v457 = vmul.f32 %v403, %v425
  %v458 = vmul.f32 %v408, %v426
  %v459 = vmul.f32 %v413, %v427
  %v460 = vmul.f32 %v398, %v428
  %v461 = vmul.f32 %v403, %v429
  %v462 = vmul.f32 %v408, %v430
  %v463 = vmul.f32 %v413, %v431
  %468 = vrot.lane.b32.xlu0 %v398, 96
  %v469 = vpop.permute.xlu0 %468
  %470 = vrot.lane.b32.xlu0 %v403, 96
  %v471 = vpop.permute.xlu0 %470
  %472 = vrot.lane.b32.xlu0 %v408, 96
  %v473 = vpop.permute.xlu0 %472
  %474 = vrot.lane.b32.xlu0 %v413, 96
  %v475 = vpop.permute.xlu0 %474
  %v477 = vsel %vm216, %v448, 0
  %v480 = vsel %vm216, %v449, 0
  %v483 = vsel %vm216, %v450, 0
  %v486 = vsel %vm216, %v451, 0
  %v489 = vsel %vm216, %v452, 0
  %v492 = vsel %vm216, %v453, 0
  %v495 = vsel %vm216, %v454, 0
  %v498 = vsel %vm216, %v455, 0
  %v501 = vsel %vm216, %v456, 0
  %v504 = vsel %vm216, %v457, 0
  %v507 = vsel %vm216, %v458, 0
  %v510 = vsel %vm216, %v459, 0
  %v513 = vsel %vm216, %v460, 0
  %v516 = vsel %vm216, %v461, 0
  %v519 = vsel %vm216, %v462, 0
  %v522 = vsel %vm216, %v463, 0
  %v524 = vsel %vm216, %v469, 0
  %v526 = vsel %vm216, %v471, 0
  %v528 = vsel %vm216, %v473, 0
  %v530 = vsel %vm216, %v475, 0
  %532 = vmatprep.subr.mxu0 0.0
  %533 = vmatpush1.xpose.msra.mxu0 %v524
  %534 = vmatprep.subr.mxu0 0.0
  %535 = vmatpush1.xpose.msra.mxu0 %v526
  %536 = vmatprep.subr.mxu0 0.0
  %537 = vmatpush1.xpose.msra.mxu0 %v528
  %538 = vmatprep.subr.mxu0 0.0
  %539 = vmatpush1.xpose.msra.mxu0 %v530
  %540 = vmatprep.subr.mxu0 0.0
  %541 = vmatpush1.xpose.msra.mxu0 0.0
  %542 = vmatprep.subr.mxu0 0.0
  %543 = vmatpush1.xpose.msra.mxu0 0.0
  %544 = vmatprep.subr.mxu0 0.0
  %545 = vmatpush1.xpose.msra.mxu0 0.0
  %546 = vmatprep.subr.mxu0 0.0
  %547 = vmatpush1.xpose.msra.mxu0 0.0
  %548 = vmatprep.subr.mxu0 0.0
  %549 = vmatpush1.xpose.msra.mxu0 0.0
  %550 = vmatprep.subr.mxu0 0.0
  %551 = vmatpush1.xpose.msra.mxu0 0.0
  %552 = vmatprep.subr.mxu0 0.0
  %553 = vmatpush1.xpose.msra.mxu0 0.0
  %554 = vmatprep.subr.mxu0 0.0
  %555 = vmatpush1.xpose.msra.mxu0 0.0
  %556 = vmatprep.subr.mxu0 0.0
  %557 = vmatpush1.xpose.msra.mxu0 0.0
  %558 = vmatprep.subr.mxu0 0.0
  %559 = vmatpush1.xpose.msra.mxu0 0.0
  %560 = vmatprep.subr.mxu0 0.0
  %561 = vmatpush1.xpose.msra.mxu0 0.0
  %562 = vmatprep.subr.mxu0 0.0
  %563 = vmatpush1.xpose.msra.mxu0 0.0
  %564 = vmatprep.subr.mxu0 0.0
  %565 = vmatpush1.xpose.msra.mxu0 0.0
  %566 = vmatprep.subr.mxu0 0.0
  %567 = vmatpush1.xpose.msra.mxu0 0.0
  %568 = vmatprep.subr.mxu0 0.0
  %569 = vmatpush1.xpose.msra.mxu0 0.0
  %570 = vmatprep.subr.mxu0 0.0
  %571 = vmatpush1.xpose.msra.mxu0 0.0
  %572 = vmatprep.subr.mxu0 0.0
  %573 = vmatpush1.xpose.msra.mxu0 0.0
  %574 = vmatprep.subr.mxu0 0.0
  %575 = vmatpush1.xpose.msra.mxu0 0.0
  %576 = vmatprep.subr.mxu0 0.0
  %577 = vmatpush1.xpose.msra.mxu0 0.0
  %578 = vmatprep.subr.mxu0 0.0
  %579 = vmatpush1.xpose.msra.mxu0 0.0
  %580 = vmatprep.subr.mxu0 0.0
  %581 = vmatpush1.xpose.msra.mxu0 0.0
  %582 = vmatprep.subr.mxu0 0.0
  %583 = vmatpush1.xpose.msra.mxu0 0.0
  %584 = vmatprep.subr.mxu0 0.0
  %585 = vmatpush1.xpose.msra.mxu0 0.0
  %586 = vmatprep.subr.mxu0 0.0
  %587 = vmatpush1.xpose.msra.mxu0 0.0
  %588 = vmatprep.subr.mxu0 0.0
  %589 = vmatpush1.xpose.msra.mxu0 0.0
  %590 = vmatprep.subr.mxu0 0.0
  %591 = vmatpush1.xpose.msra.mxu0 0.0
  %592 = vmatprep.subr.mxu0 0.0
  %593 = vmatpush1.xpose.msra.mxu0 0.0
  %594 = vmatprep.subr.mxu0 0.0
  %595 = vmatpush1.xpose.msra.mxu0 0.0
  %596 = vmatprep.mubr.f32.mxu0 0.0
  %597 = vmatmul.mubr.f32.gmra.mrb[0].mxu0 %v477
  %v598 = vpop.f32.mrb[0].mxu0
  %v599 = vadd.f32 0.0, %v598
  %v600 = vpop.f32.mrb[0].mxu0
  %601 = vmatprep.mubr.f32.mxu0 0.0
  %602 = vmatmul.mubr.f32.gmra.mrb[0].mxu0 %v480
  %v603 = vpop.f32.mrb[0].mxu0
  %v604 = vadd.f32 0.0, %v603
  %v605 = vpop.f32.mrb[0].mxu0
  %606 = vmatprep.mubr.f32.mxu0 0.0
  %607 = vmatmul.mubr.f32.gmra.mrb[0].mxu0 %v483
  %v608 = vpop.f32.mrb[0].mxu0
  %v609 = vadd.f32 0.0, %v608
  %v610 = vpop.f32.mrb[0].mxu0
  %611 = vmatprep.mubr.f32.mxu0 0.0
  %612 = vmatmul.mubr.f32.gmra.mrb[0].mxu0 %v486
  %v613 = vpop.f32.mrb[0].mxu0
  %v614 = vadd.f32 0.0, %v613
  %v615 = vpop.f32.mrb[0].mxu0
  %616 = vmatprep.mubr.f32.mxu0 0.0
  %617 = vmatmul.mubr.f32.gmra.mrb[0].mxu0 %v489
  %v618 = vpop.f32.mrb[0].mxu0
  %v619 = vadd.f32 0.0, %v618
  %v620 = vpop.f32.mrb[0].mxu0
  %621 = vmatprep.mubr.f32.mxu0 0.0
  %622 = vmatmul.mubr.f32.gmra.mrb[0].mxu0 %v492
  %v623 = vpop.f32.mrb[0].mxu0
  %v624 = vadd.f32 0.0, %v623
  %v625 = vpop.f32.mrb[0].mxu0
  %626 = vmatprep.mubr.f32.mxu0 0.0
  %627 = vmatmul.mubr.f32.gmra.mrb[0].mxu0 %v495
  %v628 = vpop.f32.mrb[0].mxu0
  %v629 = vadd.f32 0.0, %v628
  %v630 = vpop.f32.mrb[0].mxu0
  %631 = vmatprep.mubr.f32.mxu0 0.0
  %632 = vmatmul.mubr.f32.gmra.mrb[0].mxu0 %v498
  %v633 = vpop.f32.mrb[0].mxu0
  %v634 = vadd.f32 0.0, %v633
  %v635 = vpop.f32.mrb[0].mxu0
  %636 = vmatprep.mubr.f32.mxu0 0.0
  %637 = vmatmul.mubr.f32.gmra.mrb[0].mxu0 %v501
  %v638 = vpop.f32.mrb[0].mxu0
  %v639 = vadd.f32 0.0, %v638
  %v640 = vpop.f32.mrb[0].mxu0
  %641 = vmatprep.mubr.f32.mxu0 0.0
  %642 = vmatmul.mubr.f32.gmra.mrb[0].mxu0 %v504
  %v643 = vpop.f32.mrb[0].mxu0
  %v644 = vadd.f32 0.0, %v643
  %v645 = vpop.f32.mrb[0].mxu0
  %646 = vmatprep.mubr.f32.mxu0 0.0
  %647 = vmatmul.mubr.f32.gmra.mrb[0].mxu0 %v507
  %v648 = vpop.f32.mrb[0].mxu0
  %v649 = vadd.f32 0.0, %v648
  %v650 = vpop.f32.mrb[0].mxu0
  %651 = vmatprep.mubr.f32.mxu0 0.0
  %652 = vmatmul.mubr.f32.gmra.mrb[0].mxu0 %v510
  %v653 = vpop.f32.mrb[0].mxu0
  %v654 = vadd.f32 0.0, %v653
  %v655 = vpop.f32.mrb[0].mxu0
  %656 = vmatprep.mubr.f32.mxu0 0.0
  %657 = vmatmul.mubr.f32.gmra.mrb[0].mxu0 %v513
  %v658 = vpop.f32.mrb[0].mxu0
  %v659 = vadd.f32 0.0, %v658
  %v660 = vpop.f32.mrb[0].mxu0
  %661 = vmatprep.mubr.f32.mxu0 0.0
  %662 = vmatmul.mubr.f32.gmra.mrb[0].mxu0 %v516
  %v663 = vpop.f32.mrb[0].mxu0
  %v664 = vadd.f32 0.0, %v663
  %v665 = vpop.f32.mrb[0].mxu0
  %666 = vmatprep.mubr.f32.mxu0 0.0
  %667 = vmatmul.mubr.f32.gmra.mrb[0].mxu0 %v519
  %v668 = vpop.f32.mrb[0].mxu0
  %v669 = vadd.f32 0.0, %v668
  %v670 = vpop.f32.mrb[0].mxu0
  %671 = vmatprep.mubr.f32.mxu0 0.0
  %672 = vmatmul.mubr.f32.gmra.mrb[0].mxu0 %v522
  %v673 = vpop.f32.mrb[0].mxu0
  %v674 = vadd.f32 0.0, %v673
  %v675 = vpop.f32.mrb[0].mxu0
  %676 = vdwg.mxu0
  %v677 = vmul.f32 %v599, 0.35355338
  %v678 = vmul.f32 %v604, 0.35355338
  %v679 = vmul.f32 %v609, 0.35355338
  %v680 = vmul.f32 %v614, 0.35355338
  %v681 = vmul.f32 %v619, 0.35355338
  %v682 = vmul.f32 %v624, 0.35355338
  %v683 = vmul.f32 %v629, 0.35355338
  %v684 = vmul.f32 %v634, 0.35355338
  %v685 = vmul.f32 %v639, 0.35355338
  %v686 = vmul.f32 %v644, 0.35355338
  %v687 = vmul.f32 %v649, 0.35355338
  %v688 = vmul.f32 %v654, 0.35355338
  %v689 = vmul.f32 %v659, 0.35355338
  %v690 = vmul.f32 %v664, 0.35355338
  %v691 = vmul.f32 %v669, 0.35355338
  %v692 = vmul.f32 %v674, 0.35355338
  %v693 = vadd.f32 %v677, %v432
  %v694 = vadd.f32 %v678, %v433
  %v695 = vadd.f32 %v679, %v434
  %v696 = vadd.f32 %v680, %v435
  %v697 = vadd.f32 %v681, %v436
  %v698 = vadd.f32 %v682, %v437
  %v699 = vadd.f32 %v683, %v438
  %v700 = vadd.f32 %v684, %v439
  %v701 = vadd.f32 %v685, %v440
  %v702 = vadd.f32 %v686, %v441
  %v703 = vadd.f32 %v687, %v442
  %v704 = vadd.f32 %v688, %v443
  %v705 = vadd.f32 %v689, %v444
  %v706 = vadd.f32 %v690, %v445
  %v707 = vadd.f32 %v691, %v446
  %v708 = vadd.f32 %v692, %v447
  %v709 = vsel %vm216, %v693, -inf
  %710 = vmax.xlane.f32.xlu0 %v709
  %v711 = vpop.xlane.xlu0 %710
  %v712 = vsel %vm216, %v694, -inf
  %713 = vmax.xlane.f32.xlu0 %v712
  %v714 = vpop.xlane.xlu0 %713
  %v715 = vsel %vm216, %v695, -inf
  %716 = vmax.xlane.f32.xlu0 %v715
  %v717 = vpop.xlane.xlu0 %716
  %v718 = vsel %vm216, %v696, -inf
  %719 = vmax.xlane.f32.xlu0 %v718
  %v720 = vpop.xlane.xlu0 %719
  %v721 = vsel %vm216, %v697, -inf
  %722 = vmax.xlane.f32.xlu0 %v721
  %v723 = vpop.xlane.xlu0 %722
  %v724 = vsel %vm216, %v698, -inf
  %725 = vmax.xlane.f32.xlu0 %v724
  %v726 = vpop.xlane.xlu0 %725
  %v727 = vsel %vm216, %v699, -inf
  %728 = vmax.xlane.f32.xlu0 %v727
  %v729 = vpop.xlane.xlu0 %728
  %v730 = vsel %vm216, %v700, -inf
  %731 = vmax.xlane.f32.xlu0 %v730
  %v732 = vpop.xlane.xlu0 %731
  %v733 = vsel %vm216, %v701, -inf
  %734 = vmax.xlane.f32.xlu0 %v733
  %v735 = vpop.xlane.xlu0 %734
  %v736 = vsel %vm216, %v702, -inf
  %737 = vmax.xlane.f32.xlu0 %v736
  %v738 = vpop.xlane.xlu0 %737
  %v739 = vsel %vm216, %v703, -inf
  %740 = vmax.xlane.f32.xlu0 %v739
  %v741 = vpop.xlane.xlu0 %740
  %v742 = vsel %vm216, %v704, -inf
  %743 = vmax.xlane.f32.xlu0 %v742
  %v744 = vpop.xlane.xlu0 %743
  %v745 = vsel %vm216, %v705, -inf
  %746 = vmax.xlane.f32.xlu0 %v745
  %v747 = vpop.xlane.xlu0 %746
  %v748 = vsel %vm216, %v706, -inf
  %749 = vmax.xlane.f32.xlu0 %v748
  %v750 = vpop.xlane.xlu0 %749
  %v751 = vsel %vm216, %v707, -inf
  %752 = vmax.xlane.f32.xlu0 %v751
  %v753 = vpop.xlane.xlu0 %752
  %v754 = vsel %vm216, %v708, -inf
  %755 = vmax.xlane.f32.xlu0 %v754
  %v756 = vpop.xlane.xlu0 %755
  %v757 = vsub.f32 %v693, %v711
  %v758 = vsub.f32 %v694, %v714
  %v759 = vsub.f32 %v695, %v717
  %v760 = vsub.f32 %v696, %v720
  %v761 = vsub.f32 %v697, %v723
  %v762 = vsub.f32 %v698, %v726
  %v763 = vsub.f32 %v699, %v729
  %v764 = vsub.f32 %v700, %v732
  %v765 = vsub.f32 %v701, %v735
  %v766 = vsub.f32 %v702, %v738
  %v767 = vsub.f32 %v703, %v741
  %v768 = vsub.f32 %v704, %v744
  %v769 = vsub.f32 %v705, %v747
  %v770 = vsub.f32 %v706, %v750
  %v771 = vsub.f32 %v707, %v753
  %v772 = vsub.f32 %v708, %v756
  %v773 = vmul.f32 %v757, 1.442695
  %v774 = vpow.pop %v773
  %v775 = vmul.f32 %v758, 1.442695
  %v776 = vpow.pop %v775
  %v777 = vmul.f32 %v759, 1.442695
  %v778 = vpow.pop %v777
  %v779 = vmul.f32 %v760, 1.442695
  %v780 = vpow.pop %v779
  %v781 = vmul.f32 %v761, 1.442695
  %v782 = vpow.pop %v781
  %v783 = vmul.f32 %v762, 1.442695
  %v784 = vpow.pop %v783
  %v785 = vmul.f32 %v763, 1.442695
  %v786 = vpow.pop %v785
  %v787 = vmul.f32 %v764, 1.442695
  %v788 = vpow.pop %v787
  %v789 = vmul.f32 %v765, 1.442695
  %v790 = vpow.pop %v789
  %v791 = vmul.f32 %v766, 1.442695
  %v792 = vpow.pop %v791
  %v793 = vmul.f32 %v767, 1.442695
  %v794 = vpow.pop %v793
  %v795 = vmul.f32 %v768, 1.442695
  %v796 = vpow.pop %v795
  %v797 = vmul.f32 %v769, 1.442695
  %v798 = vpow.pop %v797
  %v799 = vmul.f32 %v770, 1.442695
  %v800 = vpow.pop %v799
  %v801 = vmul.f32 %v771, 1.442695
  %v802 = vpow.pop %v801
  %v803 = vmul.f32 %v772, 1.442695
  %v804 = vpow.pop %v803
  %v805 = vsel %vm216, %v774, 0.0
  %806 = vadd.xlane.f32.xlu0 %v805
  %v807 = vpop.xlane.xlu0 %806
  %v808 = vsel %vm216, %v776, 0.0
  %809 = vadd.xlane.f32.xlu0 %v808
  %v810 = vpop.xlane.xlu0 %809
  %v811 = vsel %vm216, %v778, 0.0
  %812 = vadd.xlane.f32.xlu0 %v811
  %v813 = vpop.xlane.xlu0 %812
  %v814 = vsel %vm216, %v780, 0.0
  %815 = vadd.xlane.f32.xlu0 %v814
  %v816 = vpop.xlane.xlu0 %815
  %v817 = vsel %vm216, %v782, 0.0
  %818 = vadd.xlane.f32.xlu0 %v817
  %v819 = vpop.xlane.xlu0 %818
  %v820 = vsel %vm216, %v784, 0.0
  %821 = vadd.xlane.f32.xlu0 %v820
  %v822 = vpop.xlane.xlu0 %821
  %v823 = vsel %vm216, %v786, 0.0
  %824 = vadd.xlane.f32.xlu0 %v823
  %v825 = vpop.xlane.xlu0 %824
  %v826 = vsel %vm216, %v788, 0.0
  %827 = vadd.xlane.f32.xlu0 %v826
  %v828 = vpop.xlane.xlu0 %827
  %v829 = vsel %vm216, %v790, 0.0
  %830 = vadd.xlane.f32.xlu0 %v829
  %v831 = vpop.xlane.xlu0 %830
  %v832 = vsel %vm216, %v792, 0.0
  %833 = vadd.xlane.f32.xlu0 %v832
  %v834 = vpop.xlane.xlu0 %833
  %v835 = vsel %vm216, %v794, 0.0
  %836 = vadd.xlane.f32.xlu0 %v835
  %v837 = vpop.xlane.xlu0 %836
  %v838 = vsel %vm216, %v796, 0.0
  %839 = vadd.xlane.f32.xlu0 %v838
  %v840 = vpop.xlane.xlu0 %839
  %v841 = vsel %vm216, %v798, 0.0
  %842 = vadd.xlane.f32.xlu0 %v841
  %v843 = vpop.xlane.xlu0 %842
  %v844 = vsel %vm216, %v800, 0.0
  %845 = vadd.xlane.f32.xlu0 %v844
  %v846 = vpop.xlane.xlu0 %845
  %v847 = vsel %vm216, %v802, 0.0
  %848 = vadd.xlane.f32.xlu0 %v847
  %v849 = vpop.xlane.xlu0 %848
  %v850 = vsel %vm216, %v804, 0.0
  %851 = vadd.xlane.f32.xlu0 %v850
  %v852 = vpop.xlane.xlu0 %851
  %v853 = vrcp.pop %v807
  %v854 = vrcp.pop %v810
  %v855 = vrcp.pop %v813
  %v856 = vrcp.pop %v816
  %v857 = vrcp.pop %v819
  %v858 = vrcp.pop %v822
  %v859 = vrcp.pop %v825
  %v860 = vrcp.pop %v828
  %v861 = vrcp.pop %v831
  %v862 = vrcp.pop %v834
  %v863 = vrcp.pop %v837
  %v864 = vrcp.pop %v840
  %v865 = vrcp.pop %v843
  %v866 = vrcp.pop %v846
  %v867 = vrcp.pop %v849
  %v868 = vrcp.pop %v852
  %v869 = vmul.f32 %v774, %v853
  %v870 = vmul.f32 %v776, %v854
  %v871 = vmul.f32 %v778, %v855
  %v872 = vmul.f32 %v780, %v856
  %v873 = vmul.f32 %v782, %v857
  %v874 = vmul.f32 %v784, %v858
  %v875 = vmul.f32 %v786, %v859
  %v876 = vmul.f32 %v788, %v860
  %v877 = vmul.f32 %v790, %v861
  %v878 = vmul.f32 %v792, %v862
  %v879 = vmul.f32 %v794, %v863
  %v880 = vmul.f32 %v796, %v864
  %v881 = vmul.f32 %v798, %v865
  %v882 = vmul.f32 %v800, %v866
  %v883 = vmul.f32 %v802, %v867
  %v884 = vmul.f32 %v804, %v868
  %885 = vrot.lane.b32.xlu0 %v398, 64
  %v886 = vpop.permute.xlu0 %885
  %887 = vrot.lane.b32.xlu0 %v403, 64
  %v888 = vpop.permute.xlu0 %887
  %889 = vrot.lane.b32.xlu0 %v408, 64
  %v890 = vpop.permute.xlu0 %889
  %891 = vrot.lane.b32.xlu0 %v413, 64
  %v892 = vpop.permute.xlu0 %891
  %v898 = vsel %vm216, %v869, 0
  %v901 = vsel %vm216, %v870, 0
  %v904 = vsel %vm216, %v871, 0
  %v907 = vsel %vm216, %v872, 0
  %v910 = vsel %vm216, %v873, 0
  %v913 = vsel %vm216, %v874, 0
  %v916 = vsel %vm216, %v875, 0
  %v919 = vsel %vm216, %v876, 0
  %v922 = vsel %vm216, %v877, 0
  %v925 = vsel %vm216, %v878, 0
  %v928 = vsel %vm216, %v879, 0
  %v931 = vsel %vm216, %v880, 0
  %v934 = vsel %vm216, %v881, 0
  %v937 = vsel %vm216, %v882, 0
  %v940 = vsel %vm216, %v883, 0
  %v943 = vsel %vm216, %v884, 0
  %945 = vmatprep.subr.mxu0 0.0
  %946 = vmatpush1.msra.mxu0 %v886
  %947 = vmatprep.subr.mxu0 0.0
  %948 = vmatpush1.msra.mxu0 %v888
  %949 = vmatprep.subr.mxu0 0.0
  %950 = vmatpush1.msra.mxu0 %v890
  %951 = vmatprep.subr.mxu0 0.0
  %952 = vmatpush1.msra.mxu0 %v892
  %953 = vmatprep.subr.mxu0 0.0
  %954 = vmatpush1.msra.mxu0 0.0
  %955 = vmatprep.subr.mxu0 0.0
  %956 = vmatpush1.msra.mxu0 0.0
  %957 = vmatprep.subr.mxu0 0.0
  %958 = vmatpush1.msra.mxu0 0.0
  %959 = vmatprep.subr.mxu0 0.0
  %960 = vmatpush1.msra.mxu0 0.0
  %961 = vmatprep.subr.mxu0 0.0
  %962 = vmatpush1.msra.mxu0 0.0
  %963 = vmatprep.subr.mxu0 0.0
  %964 = vmatpush1.msra.mxu0 0.0
  %965 = vmatprep.subr.mxu0 0.0
  %966 = vmatpush1.msra.mxu0 0.0
  %967 = vmatprep.subr.mxu0 0.0
  %968 = vmatpush1.msra.mxu0 0.0
  %969 = vmatprep.subr.mxu0 0.0
  %970 = vmatpush1.msra.mxu0 0.0
  %971 = vmatprep.subr.mxu0 0.0
  %972 = vmatpush1.msra.mxu0 0.0
  %973 = vmatprep.subr.mxu0 0.0
  %974 = vmatpush1.msra.mxu0 0.0
  %975 = vmatprep.subr.mxu0 0.0
  %976 = vmatpush1.msra.mxu0 0.0
  %977 = vmatprep.subr.mxu0 0.0
  %978 = vmatpush1.msra.mxu0 0.0
  %979 = vmatprep.subr.mxu0 0.0
  %980 = vmatpush1.msra.mxu0 0.0
  %981 = vmatprep.subr.mxu0 0.0
  %982 = vmatpush1.msra.mxu0 0.0
  %983 = vmatprep.subr.mxu0 0.0
  %984 = vmatpush1.msra.mxu0 0.0
  %985 = vmatprep.subr.mxu0 0.0
  %986 = vmatpush1.msra.mxu0 0.0
  %987 = vmatprep.subr.mxu0 0.0
  %988 = vmatpush1.msra.mxu0 0.0
  %989 = vmatprep.subr.mxu0 0.0
  %990 = vmatpush1.msra.mxu0 0.0
  %991 = vmatprep.subr.mxu0 0.0
  %992 = vmatpush1.msra.mxu0 0.0
  %993 = vmatprep.subr.mxu0 0.0
  %994 = vmatpush1.msra.mxu0 0.0
  %995 = vmatprep.subr.mxu0 0.0
  %996 = vmatpush1.msra.mxu0 0.0
  %997 = vmatprep.subr.mxu0 0.0
  %998 = vmatpush1.msra.mxu0 0.0
  %999 = vmatprep.subr.mxu0 0.0
  %1000 = vmatpush1.msra.mxu0 0.0
  %1001 = vmatprep.subr.mxu0 0.0
  %1002 = vmatpush1.msra.mxu0 0.0
  %1003 = vmatprep.subr.mxu0 0.0
  %1004 = vmatpush1.msra.mxu0 0.0
  %1005 = vmatprep.subr.mxu0 0.0
  %1006 = vmatpush1.msra.mxu0 0.0
  %1007 = vmatprep.subr.mxu0 0.0
  %1008 = vmatpush1.msra.mxu0 0.0
  %1009 = vmatprep.mubr.f32.mxu0 0.0
  %1010 = vmatmul.mubr.f32.gmra.mrb[0].mxu0 %v898
  %v1011 = vpop.f32.mrb[0].mxu0
  %v1012 = vadd.f32 0.0, %v1011
  %v1013 = vpop.f32.mrb[0].mxu0
  %1014 = vmatprep.mubr.f32.mxu0 0.0
  %1015 = vmatmul.mubr.f32.gmra.mrb[0].mxu0 %v901
  %v1016 = vpop.f32.mrb[0].mxu0
  %v1017 = vadd.f32 0.0, %v1016
  %v1018 = vpop.f32.mrb[0].mxu0
  %1019 = vmatprep.mubr.f32.mxu0 0.0
  %1020 = vmatmul.mubr.f32.gmra.mrb[0].mxu0 %v904
  %v1021 = vpop.f32.mrb[0].mxu0
  %v1022 = vadd.f32 0.0, %v1021
  %v1023 = vpop.f32.mrb[0].mxu0
  %1024 = vmatprep.mubr.f32.mxu0 0.0
  %1025 = vmatmul.mubr.f32.gmra.mrb[0].mxu0 %v907
  %v1026 = vpop.f32.mrb[0].mxu0
  %v1027 = vadd.f32 0.0, %v1026
  %v1028 = vpop.f32.mrb[0].mxu0
  %1029 = vmatprep.mubr.f32.mxu0 0.0
  %1030 = vmatmul.mubr.f32.gmra.mrb[0].mxu0 %v910
  %v1031 = vpop.f32.mrb[0].mxu0
  %v1032 = vadd.f32 0.0, %v1031
  %v1033 = vpop.f32.mrb[0].mxu0
  %1034 = vmatprep.mubr.f32.mxu0 0.0
  %1035 = vmatmul.mubr.f32.gmra.mrb[0].mxu0 %v913
  %v1036 = vpop.f32.mrb[0].mxu0
  %v1037 = vadd.f32 0.0, %v1036
  %v1038 = vpop.f32.mrb[0].mxu0
  %1039 = vmatprep.mubr.f32.mxu0 0.0
  %1040 = vmatmul.mubr.f32.gmra.mrb[0].mxu0 %v916
  %v1041 = vpop.f32.mrb[0].mxu0
  %v1042 = vadd.f32 0.0, %v1041
  %v1043 = vpop.f32.mrb[0].mxu0
  %1044 = vmatprep.mubr.f32.mxu0 0.0
  %1045 = vmatmul.mubr.f32.gmra.mrb[0].mxu0 %v919
  %v1046 = vpop.f32.mrb[0].mxu0
  %v1047 = vadd.f32 0.0, %v1046
  %v1048 = vpop.f32.mrb[0].mxu0
  %1049 = vmatprep.mubr.f32.mxu0 0.0
  %1050 = vmatmul.mubr.f32.gmra.mrb[0].mxu0 %v922
  %v1051 = vpop.f32.mrb[0].mxu0
  %v1052 = vadd.f32 0.0, %v1051
  %v1053 = vpop.f32.mrb[0].mxu0
  %1054 = vmatprep.mubr.f32.mxu0 0.0
  %1055 = vmatmul.mubr.f32.gmra.mrb[0].mxu0 %v925
  %v1056 = vpop.f32.mrb[0].mxu0
  %v1057 = vadd.f32 0.0, %v1056
  %v1058 = vpop.f32.mrb[0].mxu0
  %1059 = vmatprep.mubr.f32.mxu0 0.0
  %1060 = vmatmul.mubr.f32.gmra.mrb[0].mxu0 %v928
  %v1061 = vpop.f32.mrb[0].mxu0
  %v1062 = vadd.f32 0.0, %v1061
  %v1063 = vpop.f32.mrb[0].mxu0
  %1064 = vmatprep.mubr.f32.mxu0 0.0
  %1065 = vmatmul.mubr.f32.gmra.mrb[0].mxu0 %v931
  %v1066 = vpop.f32.mrb[0].mxu0
  %v1067 = vadd.f32 0.0, %v1066
  %v1068 = vpop.f32.mrb[0].mxu0
  %1069 = vmatprep.mubr.f32.mxu0 0.0
  %1070 = vmatmul.mubr.f32.gmra.mrb[0].mxu0 %v934
  %v1071 = vpop.f32.mrb[0].mxu0
  %v1072 = vadd.f32 0.0, %v1071
  %v1073 = vpop.f32.mrb[0].mxu0
  %1074 = vmatprep.mubr.f32.mxu0 0.0
  %1075 = vmatmul.mubr.f32.gmra.mrb[0].mxu0 %v937
  %v1076 = vpop.f32.mrb[0].mxu0
  %v1077 = vadd.f32 0.0, %v1076
  %v1078 = vpop.f32.mrb[0].mxu0
  %1079 = vmatprep.mubr.f32.mxu0 0.0
  %1080 = vmatmul.mubr.f32.gmra.mrb[0].mxu0 %v940
  %v1081 = vpop.f32.mrb[0].mxu0
  %v1082 = vadd.f32 0.0, %v1081
  %v1083 = vpop.f32.mrb[0].mxu0
  %1084 = vmatprep.mubr.f32.mxu0 0.0
  %1085 = vmatmul.mubr.f32.gmra.mrb[0].mxu0 %v943
  %v1086 = vpop.f32.mrb[0].mxu0
  %v1087 = vadd.f32 0.0, %v1086
  %v1088 = vpop.f32.mrb[0].mxu0
  %1089 = vdwg.mxu0
  %v1090 = vmul.f32 %v1012, %v416
  %v1091 = vmul.f32 %v1017, %v417
  %v1092 = vmul.f32 %v1022, %v418
  %v1093 = vmul.f32 %v1027, %v419
  %v1094 = vmul.f32 %v1032, %v420
  %v1095 = vmul.f32 %v1037, %v421
  %v1096 = vmul.f32 %v1042, %v422
  %v1097 = vmul.f32 %v1047, %v423
  %v1098 = vmul.f32 %v1052, %v424
  %v1099 = vmul.f32 %v1057, %v425
  %v1100 = vmul.f32 %v1062, %v426
  %v1101 = vmul.f32 %v1067, %v427
  %v1102 = vmul.f32 %v1072, %v428
  %v1103 = vmul.f32 %v1077, %v429
  %v1104 = vmul.f32 %v1082, %v430
  %v1105 = vmul.f32 %v1087, %v431
  %v1106 = vadd.f32 %v1090, %v1094
  %v1107 = vadd.f32 %v1091, %v1095
  %v1108 = vadd.f32 %v1092, %v1096
  %v1109 = vadd.f32 %v1093, %v1097
  %v1110 = vadd.f32 %v1106, %v1098
  %v1111 = vadd.f32 %v1107, %v1099
  %v1112 = vadd.f32 %v1108, %v1100
  %v1113 = vadd.f32 %v1109, %v1101
  %v1114 = vadd.f32 %v1110, %v1102
  %v1115 = vadd.f32 %v1111, %v1103
  %v1116 = vadd.f32 %v1112, %v1104
  %v1117 = vadd.f32 %v1113, %v1105
  %v1119 = vsel %vm216, %v1114, 0
  %v1122 = vsel %vm216, %v1115, 0
  %v1125 = vsel %vm216, %v1116, 0
  %v1128 = vsel %vm216, %v1117, 0
  %1130 = vmatprep.subr.mxu0 0.0
  %1131 = vmatpush1.msra.mxu0 %v204
  %1132 = vmatprep.subr.mxu0 0.0
  %1133 = vmatpush1.msra.mxu0 %v205
  %1134 = vmatprep.subr.mxu0 0.0
  %1135 = vmatpush1.msra.mxu0 %v206
  %1136 = vmatprep.subr.mxu0 0.0
  %1137 = vmatpush1.msra.mxu0 %v207
  %1138 = vmatprep.subr.mxu0 0.0
  %1139 = vmatpush1.msra.mxu0 0.0
  %1140 = vmatprep.subr.mxu0 0.0
  %1141 = vmatpush1.msra.mxu0 0.0
  %1142 = vmatprep.subr.mxu0 0.0
  %1143 = vmatpush1.msra.mxu0 0.0
  %1144 = vmatprep.subr.mxu0 0.0
  %1145 = vmatpush1.msra.mxu0 0.0
  %1146 = vmatprep.subr.mxu0 0.0
  %1147 = vmatpush1.msra.mxu0 0.0
  %1148 = vmatprep.subr.mxu0 0.0
  %1149 = vmatpush1.msra.mxu0 0.0
  %1150 = vmatprep.subr.mxu0 0.0
  %1151 = vmatpush1.msra.mxu0 0.0
  %1152 = vmatprep.subr.mxu0 0.0
  %1153 = vmatpush1.msra.mxu0 0.0
  %1154 = vmatprep.subr.mxu0 0.0
  %1155 = vmatpush1.msra.mxu0 0.0
  %1156 = vmatprep.subr.mxu0 0.0
  %1157 = vmatpush1.msra.mxu0 0.0
  %1158 = vmatprep.subr.mxu0 0.0
  %1159 = vmatpush1.msra.mxu0 0.0
  %1160 = vmatprep.subr.mxu0 0.0
  %1161 = vmatpush1.msra.mxu0 0.0
  %1162 = vmatprep.subr.mxu0 0.0
  %1163 = vmatpush1.msra.mxu0 0.0
  %1164 = vmatprep.subr.mxu0 0.0
  %1165 = vmatpush1.msra.mxu0 0.0
  %1166 = vmatprep.subr.mxu0 0.0
  %1167 = vmatpush1.msra.mxu0 0.0
  %1168 = vmatprep.subr.mxu0 0.0
  %1169 = vmatpush1.msra.mxu0 0.0
  %1170 = vmatprep.subr.mxu0 0.0
  %1171 = vmatpush1.msra.mxu0 0.0
  %1172 = vmatprep.subr.mxu0 0.0
  %1173 = vmatpush1.msra.mxu0 0.0
  %1174 = vmatprep.subr.mxu0 0.0
  %1175 = vmatpush1.msra.mxu0 0.0
  %1176 = vmatprep.subr.mxu0 0.0
  %1177 = vmatpush1.msra.mxu0 0.0
  %1178 = vmatprep.subr.mxu0 0.0
  %1179 = vmatpush1.msra.mxu0 0.0
  %1180 = vmatprep.subr.mxu0 0.0
  %1181 = vmatpush1.msra.mxu0 0.0
  %1182 = vmatprep.subr.mxu0 0.0
  %1183 = vmatpush1.msra.mxu0 0.0
  %1184 = vmatprep.subr.mxu0 0.0
  %1185 = vmatpush1.msra.mxu0 0.0
  %1186 = vmatprep.subr.mxu0 0.0
  %1187 = vmatpush1.msra.mxu0 0.0
  %1188 = vmatprep.subr.mxu0 0.0
  %1189 = vmatpush1.msra.mxu0 0.0
  %1190 = vmatprep.subr.mxu0 0.0
  %1191 = vmatpush1.msra.mxu0 0.0
  %1192 = vmatprep.subr.mxu0 0.0
  %1193 = vmatpush1.msra.mxu0 0.0
  %1194 = vmatprep.mubr.f32.mxu0 0.0
  %1195 = vmatmul.mubr.f32.gmra.mrb[0].mxu0 %v1119
  %v1196 = vpop.f32.mrb[0].mxu0
  %v1197 = vadd.f32 0.0, %v1196
  %v1198 = vpop.f32.mrb[0].mxu0
  %1199 = vmatprep.mubr.f32.mxu0 0.0
  %1200 = vmatmul.mubr.f32.gmra.mrb[0].mxu0 %v1122
  %v1201 = vpop.f32.mrb[0].mxu0
  %v1202 = vadd.f32 0.0, %v1201
  %v1203 = vpop.f32.mrb[0].mxu0
  %1204 = vmatprep.mubr.f32.mxu0 0.0
  %1205 = vmatmul.mubr.f32.gmra.mrb[0].mxu0 %v1125
  %v1206 = vpop.f32.mrb[0].mxu0
  %v1207 = vadd.f32 0.0, %v1206
  %v1208 = vpop.f32.mrb[0].mxu0
  %1209 = vmatprep.mubr.f32.mxu0 0.0
  %1210 = vmatmul.mubr.f32.gmra.mrb[0].mxu0 %v1128
  %v1211 = vpop.f32.mrb[0].mxu0
  %v1212 = vadd.f32 0.0, %v1211
  %v1213 = vpop.f32.mrb[0].mxu0
  %1214 = vdwg.mxu0
  %v1215 = vadd.f32 %v174, %v1197
  %v1216 = vadd.f32 %v179, %v1202
  %v1217 = vadd.f32 %v184, %v1207
  %v1218 = vadd.f32 %v189, %v1212
  %v1219 = vlaneseq
  %v1220 = vshrl.u32 %v1219, 7
  %v1221 = vsub.s32 1, %v1220
  %v1222 = vrot.slane %v192, %v1221
  %v1223 = vadd.f32 %v1215, %v1222
  %v1224 = vadd.f32 %v1216, %v1222
  %v1225 = vadd.f32 %v1217, %v1222
  %v1226 = vadd.f32 %v1218, %v1222
  %v1227 = vsel %vm216, %v1223, 0.0
  %1228 = vadd.xlane.f32.xlu0 %v1227
  %v1229 = vpop.xlane.xlu0 %1228
  %v1230 = vsel %vm216, %v1224, 0.0
  %1231 = vadd.xlane.f32.xlu0 %v1230
  %v1232 = vpop.xlane.xlu0 %1231
  %v1233 = vsel %vm216, %v1225, 0.0
  %1234 = vadd.xlane.f32.xlu0 %v1233
  %v1235 = vpop.xlane.xlu0 %1234
  %v1236 = vsel %vm216, %v1226, 0.0
  %1237 = vadd.xlane.f32.xlu0 %v1236
  %v1238 = vpop.xlane.xlu0 %1237
  %v1239 = vmul.f32 %v1229, %v229
  %v1240 = vmul.f32 %v1232, %v229
  %v1241 = vmul.f32 %v1235, %v229
  %v1242 = vmul.f32 %v1238, %v229
  %v1243 = vsub.f32 %v1223, %v1239
  %v1244 = vsub.f32 %v1224, %v1240
  %v1245 = vsub.f32 %v1225, %v1241
  %v1246 = vsub.f32 %v1226, %v1242
  %v1247 = vmul.f32 %v1243, %v1243
  %v1248 = vmul.f32 %v1244, %v1244
  %v1249 = vmul.f32 %v1245, %v1245
  %v1250 = vmul.f32 %v1246, %v1246
  %v1251 = vsel %vm216, %v1247, 0.0
  %1252 = vadd.xlane.f32.xlu0 %v1251
  %v1253 = vpop.xlane.xlu0 %1252
  %v1254 = vsel %vm216, %v1248, 0.0
  %1255 = vadd.xlane.f32.xlu0 %v1254
  %v1256 = vpop.xlane.xlu0 %1255
  %v1257 = vsel %vm216, %v1249, 0.0
  %1258 = vadd.xlane.f32.xlu0 %v1257
  %v1259 = vpop.xlane.xlu0 %1258
  %v1260 = vsel %vm216, %v1250, 0.0
  %1261 = vadd.xlane.f32.xlu0 %v1260
  %v1262 = vpop.xlane.xlu0 %1261
  %v1263 = vmul.f32 %v1253, %v254
  %v1264 = vmul.f32 %v1256, %v254
  %v1265 = vmul.f32 %v1259, %v254
  %v1266 = vmul.f32 %v1262, %v254
  %v1267 = vlaneseq
  %v1268 = vshrl.u32 %v1267, 7
  %v1269 = vsub.s32 6, %v1268
  %v1270 = vrot.slane %v192, %v1269
  %v1271 = vmul.f32 %v1270, %v1243
  %v1272 = vmul.f32 %v1270, %v1244
  %v1273 = vmul.f32 %v1270, %v1245
  %v1274 = vmul.f32 %v1270, %v1246
  %v1275 = vrsqrt.pop %v1263
  %v1276 = vmul.f32 %v1263, %v1275
  %vm1277 = vcmp.eq.f32.partialorder %v1263, inf
  %v1278 = vsel %vm1277, %v1263, %v1276
  %vm1279 = vcmp.eq.f32.partialorder %v1263, 0.0
  %v1280 = vand.u32 %v1263, 2147483648
  %v1281 = vsel %vm1279, %v1280, %v1278
  %v1282 = vrsqrt.pop %v1264
  %v1283 = vmul.f32 %v1264, %v1282
  %vm1284 = vcmp.eq.f32.partialorder %v1264, inf
  %v1285 = vsel %vm1284, %v1264, %v1283
  %vm1286 = vcmp.eq.f32.partialorder %v1264, 0.0
  %v1287 = vand.u32 %v1264, 2147483648
  %v1288 = vsel %vm1286, %v1287, %v1285
  %v1289 = vrsqrt.pop %v1265
  %v1290 = vmul.f32 %v1265, %v1289
  %vm1291 = vcmp.eq.f32.partialorder %v1265, inf
  %v1292 = vsel %vm1291, %v1265, %v1290
  %vm1293 = vcmp.eq.f32.partialorder %v1265, 0.0
  %v1294 = vand.u32 %v1265, 2147483648
  %v1295 = vsel %vm1293, %v1294, %v1292
  %v1296 = vrsqrt.pop %v1266
  %v1297 = vmul.f32 %v1266, %v1296
  %vm1298 = vcmp.eq.f32.partialorder %v1266, inf
  %v1299 = vsel %vm1298, %v1266, %v1297
  %vm1300 = vcmp.eq.f32.partialorder %v1266, 0.0
  %v1301 = vand.u32 %v1266, 2147483648
  %v1302 = vsel %vm1300, %v1301, %v1299
  %v1303 = vadd.f32 %v1281, 1e-06
  %v1304 = vadd.f32 %v1288, 1e-06
  %v1305 = vadd.f32 %v1295, 1e-06
  %v1306 = vadd.f32 %v1302, 1e-06
  %v1307 = vrcp.pop %v1303
  %v1308 = vmul.f32 %v1271, %v1307
  %v1309 = vrcp.pop %v1304
  %v1310 = vmul.f32 %v1272, %v1309
  %v1311 = vrcp.pop %v1305
  %v1312 = vmul.f32 %v1273, %v1311
  %v1313 = vrcp.pop %v1306
  %v1314 = vmul.f32 %v1274, %v1313
  %v1315 = vlaneseq
  %v1316 = vshrl.u32 %v1315, 7
  %v1317 = vsub.s32 7, %v1316
  %v1318 = vrot.slane %v192, %v1317
  %v1319 = vadd.f32 %v1308, %v1318
  %v1320 = vadd.f32 %v1310, %v1318
  %v1321 = vadd.f32 %v1312, %v1318
  %v1322 = vadd.f32 %v1314, %v1318
  %v1323 = vlaneseq
  %v1324 = vshrl.u32 %v1323, 7
  %v1325 = vsub.s32 4, %v1324
  %v1326 = vrot.slane %v192, %v1325
  %v1328 = vsel %vm216, %v1319, 0
  %v1331 = vsel %vm216, %v1320, 0
  %v1334 = vsel %vm216, %v1321, 0
  %v1337 = vsel %vm216, %v1322, 0
  %1339 = vmatprep.subr.mxu0 0.0
  %1340 = vmatpush1.msra.mxu0 %v200
  %1341 = vmatprep.subr.mxu0 0.0
  %1342 = vmatpush1.msra.mxu0 %v201
  %1343 = vmatprep.subr.mxu0 0.0
  %1344 = vmatpush1.msra.mxu0 %v202
  %1345 = vmatprep.subr.mxu0 0.0
  %1346 = vmatpush1.msra.mxu0 %v203
  %1347 = vmatprep.subr.mxu0 0.0
  %1348 = vmatpush1.msra.mxu0 0.0
  %1349 = vmatprep.subr.mxu0 0.0
  %1350 = vmatpush1.msra.mxu0 0.0
  %1351 = vmatprep.subr.mxu0 0.0
  %1352 = vmatpush1.msra.mxu0 0.0
  %1353 = vmatprep.subr.mxu0 0.0
  %1354 = vmatpush1.msra.mxu0 0.0
  %1355 = vmatprep.subr.mxu0 0.0
  %1356 = vmatpush1.msra.mxu0 0.0
  %1357 = vmatprep.subr.mxu0 0.0
  %1358 = vmatpush1.msra.mxu0 0.0
  %1359 = vmatprep.subr.mxu0 0.0
  %1360 = vmatpush1.msra.mxu0 0.0
  %1361 = vmatprep.subr.mxu0 0.0
  %1362 = vmatpush1.msra.mxu0 0.0
  %1363 = vmatprep.subr.mxu0 0.0
  %1364 = vmatpush1.msra.mxu0 0.0
  %1365 = vmatprep.subr.mxu0 0.0
  %1366 = vmatpush1.msra.mxu0 0.0
  %1367 = vmatprep.subr.mxu0 0.0
  %1368 = vmatpush1.msra.mxu0 0.0
  %1369 = vmatprep.subr.mxu0 0.0
  %1370 = vmatpush1.msra.mxu0 0.0
  %1371 = vmatprep.subr.mxu0 0.0
  %1372 = vmatpush1.msra.mxu0 0.0
  %1373 = vmatprep.subr.mxu0 0.0
  %1374 = vmatpush1.msra.mxu0 0.0
  %1375 = vmatprep.subr.mxu0 0.0
  %1376 = vmatpush1.msra.mxu0 0.0
  %1377 = vmatprep.subr.mxu0 0.0
  %1378 = vmatpush1.msra.mxu0 0.0
  %1379 = vmatprep.subr.mxu0 0.0
  %1380 = vmatpush1.msra.mxu0 0.0
  %1381 = vmatprep.subr.mxu0 0.0
  %1382 = vmatpush1.msra.mxu0 0.0
  %1383 = vmatprep.subr.mxu0 0.0
  %1384 = vmatpush1.msra.mxu0 0.0
  %1385 = vmatprep.subr.mxu0 0.0
  %1386 = vmatpush1.msra.mxu0 0.0
  %1387 = vmatprep.subr.mxu0 0.0
  %1388 = vmatpush1.msra.mxu0 0.0
  %1389 = vmatprep.subr.mxu0 0.0
  %1390 = vmatpush1.msra.mxu0 0.0
  %1391 = vmatprep.subr.mxu0 0.0
  %1392 = vmatpush1.msra.mxu0 0.0
  %1393 = vmatprep.subr.mxu0 0.0
  %1394 = vmatpush1.msra.mxu0 0.0
  %1395 = vmatprep.subr.mxu0 0.0
  %1396 = vmatpush1.msra.mxu0 0.0
  %1397 = vmatprep.subr.mxu0 0.0
  %1398 = vmatpush1.msra.mxu0 0.0
  %1399 = vmatprep.subr.mxu0 0.0
  %1400 = vmatpush1.msra.mxu0 0.0
  %1401 = vmatprep.subr.mxu0 0.0
  %1402 = vmatpush1.msra.mxu0 0.0
  %1403 = vmatprep.mubr.f32.mxu0 0.0
  %1404 = vmatmul.mubr.f32.gmra.mrb[0].mxu0 %v1328
  %v1405 = vpop.f32.mrb[0].mxu0
  %v1406 = vadd.f32 %v1326, %v1405
  %v1407 = vpop.f32.mrb[0].mxu0
  %1408 = vmatprep.mubr.f32.mxu0 0.0
  %1409 = vmatmul.mubr.f32.gmra.mrb[0].mxu0 %v1331
  %v1410 = vpop.f32.mrb[0].mxu0
  %v1411 = vadd.f32 %v1326, %v1410
  %v1412 = vpop.f32.mrb[0].mxu0
  %1413 = vmatprep.mubr.f32.mxu0 0.0
  %1414 = vmatmul.mubr.f32.gmra.mrb[0].mxu0 %v1334
  %v1415 = vpop.f32.mrb[0].mxu0
  %v1416 = vadd.f32 %v1326, %v1415
  %v1417 = vpop.f32.mrb[0].mxu0
  %1418 = vmatprep.mubr.f32.mxu0 0.0
  %1419 = vmatmul.mubr.f32.gmra.mrb[0].mxu0 %v1337
  %v1420 = vpop.f32.mrb[0].mxu0
  %v1421 = vadd.f32 %v1326, %v1420
  %v1422 = vpop.f32.mrb[0].mxu0
  %1423 = vdwg.mxu0
  %v1424 = vmax.f32 %v1406, 0.0
  %v1425 = vmax.f32 %v1411, 0.0
  %v1426 = vmax.f32 %v1416, 0.0
  %v1427 = vmax.f32 %v1421, 0.0
  %vm1428 = vcmask 523264
  %v1430 = vsel %vm1428, %v1424, 0
  %v1433 = vsel %vm1428, %v1425, 0
  %v1436 = vsel %vm1428, %v1426, 0
  %v1439 = vsel %vm1428, %v1427, 0
  %1441 = vmatprep.subr.mxu0 0.0
  %1442 = vmatpush1.msra.mxu0 %v208
  %1443 = vmatprep.subr.mxu0 0.0
  %1444 = vmatpush1.msra.mxu0 %v209
  %1445 = vmatprep.subr.mxu0 0.0
  %1446 = vmatpush1.msra.mxu0 %v210
  %1447 = vmatprep.subr.mxu0 0.0
  %1448 = vmatpush1.msra.mxu0 %v211
  %1449 = vmatprep.subr.mxu0 0.0
  %1450 = vmatpush1.msra.mxu0 %v212
  %1451 = vmatprep.subr.mxu0 0.0
  %1452 = vmatpush1.msra.mxu0 %v213
  %1453 = vmatprep.subr.mxu0 0.0
  %1454 = vmatpush1.msra.mxu0 %v214
  %1455 = vmatprep.subr.mxu0 0.0
  %1456 = vmatpush1.msra.mxu0 %v215
  %1457 = vmatprep.subr.mxu0 0.0
  %1458 = vmatpush1.msra.mxu0 0.0
  %1459 = vmatprep.subr.mxu0 0.0
  %1460 = vmatpush1.msra.mxu0 0.0
  %1461 = vmatprep.subr.mxu0 0.0
  %1462 = vmatpush1.msra.mxu0 0.0
  %1463 = vmatprep.subr.mxu0 0.0
  %1464 = vmatpush1.msra.mxu0 0.0
  %1465 = vmatprep.subr.mxu0 0.0
  %1466 = vmatpush1.msra.mxu0 0.0
  %1467 = vmatprep.subr.mxu0 0.0
  %1468 = vmatpush1.msra.mxu0 0.0
  %1469 = vmatprep.subr.mxu0 0.0
  %1470 = vmatpush1.msra.mxu0 0.0
  %1471 = vmatprep.subr.mxu0 0.0
  %1472 = vmatpush1.msra.mxu0 0.0
  %1473 = vmatprep.subr.mxu0 0.0
  %1474 = vmatpush1.msra.mxu0 0.0
  %1475 = vmatprep.subr.mxu0 0.0
  %1476 = vmatpush1.msra.mxu0 0.0
  %1477 = vmatprep.subr.mxu0 0.0
  %1478 = vmatpush1.msra.mxu0 0.0
  %1479 = vmatprep.subr.mxu0 0.0
  %1480 = vmatpush1.msra.mxu0 0.0
  %1481 = vmatprep.subr.mxu0 0.0
  %1482 = vmatpush1.msra.mxu0 0.0
  %1483 = vmatprep.subr.mxu0 0.0
  %1484 = vmatpush1.msra.mxu0 0.0
  %1485 = vmatprep.subr.mxu0 0.0
  %1486 = vmatpush1.msra.mxu0 0.0
  %1487 = vmatprep.subr.mxu0 0.0
  %1488 = vmatpush1.msra.mxu0 0.0
  %1489 = vmatprep.subr.mxu0 0.0
  %1490 = vmatpush1.msra.mxu0 0.0
  %1491 = vmatprep.subr.mxu0 0.0
  %1492 = vmatpush1.msra.mxu0 0.0
  %1493 = vmatprep.subr.mxu0 0.0
  %1494 = vmatpush1.msra.mxu0 0.0
  %1495 = vmatprep.subr.mxu0 0.0
  %1496 = vmatpush1.msra.mxu0 0.0
  %1497 = vmatprep.subr.mxu0 0.0
  %1498 = vmatpush1.msra.mxu0 0.0
  %1499 = vmatprep.subr.mxu0 0.0
  %1500 = vmatpush1.msra.mxu0 0.0
  %1501 = vmatprep.subr.mxu0 0.0
  %1502 = vmatpush1.msra.mxu0 0.0
  %1503 = vmatprep.subr.mxu0 0.0
  %1504 = vmatpush1.msra.mxu0 0.0
  %1505 = vmatprep.mubr.f32.mxu0 0.0
  %1506 = vmatmul.mubr.f32.gmra.mrb[0].mxu0 %v1430
  %v1507 = vpop.f32.mrb[0].mxu0
  %v1508 = vadd.f32 0.0, %v1507
  %v1509 = vpop.f32.mrb[0].mxu0
  %1510 = vmatprep.mubr.f32.mxu0 0.0
  %1511 = vmatmul.mubr.f32.gmra.mrb[0].mxu0 %v1433
  %v1512 = vpop.f32.mrb[0].mxu0
  %v1513 = vadd.f32 0.0, %v1512
  %v1514 = vpop.f32.mrb[0].mxu0
  %1515 = vmatprep.mubr.f32.mxu0 0.0
  %1516 = vmatmul.mubr.f32.gmra.mrb[0].mxu0 %v1436
  %v1517 = vpop.f32.mrb[0].mxu0
  %v1518 = vadd.f32 0.0, %v1517
  %v1519 = vpop.f32.mrb[0].mxu0
  %1520 = vmatprep.mubr.f32.mxu0 0.0
  %1521 = vmatmul.mubr.f32.gmra.mrb[0].mxu0 %v1439
  %v1522 = vpop.f32.mrb[0].mxu0
  %v1523 = vadd.f32 0.0, %v1522
  %v1524 = vpop.f32.mrb[0].mxu0
  %1525 = vdwg.mxu0
  %v1526 = vadd.f32 %v1223, %v1508
  %v1527 = vadd.f32 %v1224, %v1513
  %v1528 = vadd.f32 %v1225, %v1518
  %v1529 = vadd.f32 %v1226, %v1523
  %v1530 = vlaneseq
  %v1531 = vshrl.u32 %v1530, 7
  %v1532 = vsub.s32 5, %v1531
  %v1533 = vrot.slane %v192, %v1532
  %v1534 = vadd.f32 %v1526, %v1533
  %v1535 = vadd.f32 %v1527, %v1533
  %v1536 = vadd.f32 %v1528, %v1533
  %v1537 = vadd.f32 %v1529, %v1533
  %v1538 = vld [vmem:[%s2 + $0x60] sm:$0xff]
  %v1539 = vld [vmem:[%s2 + $0x78] sm:$0xff]
  %v1540 = vld [vmem:[%s2 + $0x90] sm:$0xff]
  %v1541 = vld [vmem:[%s2 + $0xa8] sm:$0xff]
  %v1542 = vld [vmem:[%s2 + $0x68] sm:$0xff]
  %v1543 = vld [vmem:[%s2 + $0x80] sm:$0xff]
  %v1544 = vld [vmem:[%s2 + $0x98] sm:$0xff]
  %v1545 = vld [vmem:[%s2 + $0xb0] sm:$0xff]
  %v1546 = vld [vmem:[%s2 + $0x70] sm:$0xff]
  %v1547 = vld [vmem:[%s2 + $0x88] sm:$0xff]
  %v1548 = vld [vmem:[%s2 + $0xa0] sm:$0xff]
  %v1549 = vld [vmem:[%s2 + $0xb8] sm:$0xff]
  %v1550 = vld [vmem:[%s1 + $0x1c8] sm:$0xff]
  %v1551 = vld [vmem:[%s1 + $0x1d0] sm:$0xff]
  %v1552 = vld [vmem:[%s1 + $0x1d8] sm:$0xff]
  %v1553 = vld [vmem:[%s1 + $0x1e0] sm:$0xff]
  %v1554 = vld [vmem:[%s1 + $0x1e8] sm:$0xff]
  %v1555 = vld [vmem:[%s1 + $0x1f0] sm:$0xff]
  %v1556 = vld [vmem:[%s1 + $0x1f8] sm:$0xff]
  %v1557 = vld [vmem:[%s1 + $0x200] sm:$0xff]
  %v1558 = vsel %vm216, %v1534, 0.0
  %1559 = vadd.xlane.f32.xlu0 %v1558
  %v1560 = vpop.xlane.xlu0 %1559
  %v1561 = vsel %vm216, %v1535, 0.0
  %1562 = vadd.xlane.f32.xlu0 %v1561
  %v1563 = vpop.xlane.xlu0 %1562
  %v1564 = vsel %vm216, %v1536, 0.0
  %1565 = vadd.xlane.f32.xlu0 %v1564
  %v1566 = vpop.xlane.xlu0 %1565
  %v1567 = vsel %vm216, %v1537, 0.0
  %1568 = vadd.xlane.f32.xlu0 %v1567
  %v1569 = vpop.xlane.xlu0 %1568
  %v1570 = vmul.f32 %v1560, %v229
  %v1571 = vmul.f32 %v1563, %v229
  %v1572 = vmul.f32 %v1566, %v229
  %v1573 = vmul.f32 %v1569, %v229
  %v1574 = vsub.f32 %v1534, %v1570
  %v1575 = vsub.f32 %v1535, %v1571
  %v1576 = vsub.f32 %v1536, %v1572
  %v1577 = vsub.f32 %v1537, %v1573
  %v1578 = vmul.f32 %v1574, %v1574
  %v1579 = vmul.f32 %v1575, %v1575
  %v1580 = vmul.f32 %v1576, %v1576
  %v1581 = vmul.f32 %v1577, %v1577
  %v1582 = vsel %vm216, %v1578, 0.0
  %1583 = vadd.xlane.f32.xlu0 %v1582
  %v1584 = vpop.xlane.xlu0 %1583
  %v1585 = vsel %vm216, %v1579, 0.0
  %1586 = vadd.xlane.f32.xlu0 %v1585
  %v1587 = vpop.xlane.xlu0 %1586
  %v1588 = vsel %vm216, %v1580, 0.0
  %1589 = vadd.xlane.f32.xlu0 %v1588
  %v1590 = vpop.xlane.xlu0 %1589
  %v1591 = vsel %vm216, %v1581, 0.0
  %1592 = vadd.xlane.f32.xlu0 %v1591
  %v1593 = vpop.xlane.xlu0 %1592
  %v1594 = vmul.f32 %v1584, %v254
  %v1595 = vmul.f32 %v1587, %v254
  %v1596 = vmul.f32 %v1590, %v254
  %v1597 = vmul.f32 %v1593, %v254
  %v1598 = vlaneseq
  %v1599 = vshrl.u32 %v1598, 7
  %v1600 = vsub.s32 2, %v1599
  %v1601 = vrot.slane %v193, %v1600
  %v1602 = vmul.f32 %v1601, %v1574
  %v1603 = vmul.f32 %v1601, %v1575
  %v1604 = vmul.f32 %v1601, %v1576
  %v1605 = vmul.f32 %v1601, %v1577
  %v1606 = vrsqrt.pop %v1594
  %v1607 = vmul.f32 %v1594, %v1606
  %vm1608 = vcmp.eq.f32.partialorder %v1594, inf
  %v1609 = vsel %vm1608, %v1594, %v1607
  %vm1610 = vcmp.eq.f32.partialorder %v1594, 0.0
  %v1611 = vand.u32 %v1594, 2147483648
  %v1612 = vsel %vm1610, %v1611, %v1609
  %v1613 = vrsqrt.pop %v1595
  %v1614 = vmul.f32 %v1595, %v1613
  %vm1615 = vcmp.eq.f32.partialorder %v1595, inf
  %v1616 = vsel %vm1615, %v1595, %v1614
  %vm1617 = vcmp.eq.f32.partialorder %v1595, 0.0
  %v1618 = vand.u32 %v1595, 2147483648
  %v1619 = vsel %vm1617, %v1618, %v1616
  %v1620 = vrsqrt.pop %v1596
  %v1621 = vmul.f32 %v1596, %v1620
  %vm1622 = vcmp.eq.f32.partialorder %v1596, inf
  %v1623 = vsel %vm1622, %v1596, %v1621
  %vm1624 = vcmp.eq.f32.partialorder %v1596, 0.0
  %v1625 = vand.u32 %v1596, 2147483648
  %v1626 = vsel %vm1624, %v1625, %v1623
  %v1627 = vrsqrt.pop %v1597
  %v1628 = vmul.f32 %v1597, %v1627
  %vm1629 = vcmp.eq.f32.partialorder %v1597, inf
  %v1630 = vsel %vm1629, %v1597, %v1628
  %vm1631 = vcmp.eq.f32.partialorder %v1597, 0.0
  %v1632 = vand.u32 %v1597, 2147483648
  %v1633 = vsel %vm1631, %v1632, %v1630
  %v1634 = vadd.f32 %v1612, 1e-06
  %v1635 = vadd.f32 %v1619, 1e-06
  %v1636 = vadd.f32 %v1626, 1e-06
  %v1637 = vadd.f32 %v1633, 1e-06
  %v1638 = vrcp.pop %v1634
  %v1639 = vmul.f32 %v1602, %v1638
  %v1640 = vrcp.pop %v1635
  %v1641 = vmul.f32 %v1603, %v1640
  %v1642 = vrcp.pop %v1636
  %v1643 = vmul.f32 %v1604, %v1642
  %v1644 = vrcp.pop %v1637
  %v1645 = vmul.f32 %v1605, %v1644
  %v1646 = vlaneseq
  %v1647 = vshrl.u32 %v1646, 7
  %v1648 = vsub.s32 3, %v1647
  %v1649 = vrot.slane %v193, %v1648
  %v1650 = vadd.f32 %v1639, %v1649
  %v1651 = vadd.f32 %v1641, %v1649
  %v1652 = vadd.f32 %v1643, %v1649
  %v1653 = vadd.f32 %v1645, %v1649
  %v1654 = vlaneseq
  %v1655 = vshrl.u32 %v1654, 7
  %v1656 = vsub.s32 0, %v1655
  %v1657 = vrot.slane %v193, %v1656
  %v1659 = vsel %vm216, %v1650, 0
  %v1662 = vsel %vm216, %v1651, 0
  %v1665 = vsel %vm216, %v1652, 0
  %v1668 = vsel %vm216, %v1653, 0
  %1670 = vmatprep.subr.mxu0 0.0
  %1671 = vmatpush1.msra.mxu0 %v1538
  %1672 = vmatprep.subr.mxu0 0.0
  %1673 = vmatpush1.msra.mxu0 %v1539
  %1674 = vmatprep.subr.mxu0 0.0
  %1675 = vmatpush1.msra.mxu0 %v1540
  %1676 = vmatprep.subr.mxu0 0.0
  %1677 = vmatpush1.msra.mxu0 %v1541
  %1678 = vmatprep.subr.mxu0 0.0
  %1679 = vmatpush1.msra.mxu0 0.0
  %1680 = vmatprep.subr.mxu0 0.0
  %1681 = vmatpush1.msra.mxu0 0.0
  %1682 = vmatprep.subr.mxu0 0.0
  %1683 = vmatpush1.msra.mxu0 0.0
  %1684 = vmatprep.subr.mxu0 0.0
  %1685 = vmatpush1.msra.mxu0 0.0
  %1686 = vmatprep.subr.mxu0 0.0
  %1687 = vmatpush1.msra.mxu0 0.0
  %1688 = vmatprep.subr.mxu0 0.0
  %1689 = vmatpush1.msra.mxu0 0.0
  %1690 = vmatprep.subr.mxu0 0.0
  %1691 = vmatpush1.msra.mxu0 0.0
  %1692 = vmatprep.subr.mxu0 0.0
  %1693 = vmatpush1.msra.mxu0 0.0
  %1694 = vmatprep.subr.mxu0 0.0
  %1695 = vmatpush1.msra.mxu0 0.0
  %1696 = vmatprep.subr.mxu0 0.0
  %1697 = vmatpush1.msra.mxu0 0.0
  %1698 = vmatprep.subr.mxu0 0.0
  %1699 = vmatpush1.msra.mxu0 0.0
  %1700 = vmatprep.subr.mxu0 0.0
  %1701 = vmatpush1.msra.mxu0 0.0
  %1702 = vmatprep.subr.mxu0 0.0
  %1703 = vmatpush1.msra.mxu0 0.0
  %1704 = vmatprep.subr.mxu0 0.0
  %1705 = vmatpush1.msra.mxu0 0.0
  %1706 = vmatprep.subr.mxu0 0.0
  %1707 = vmatpush1.msra.mxu0 0.0
  %1708 = vmatprep.subr.mxu0 0.0
  %1709 = vmatpush1.msra.mxu0 0.0
  %1710 = vmatprep.subr.mxu0 0.0
  %1711 = vmatpush1.msra.mxu0 0.0
  %1712 = vmatprep.subr.mxu0 0.0
  %1713 = vmatpush1.msra.mxu0 0.0
  %1714 = vmatprep.subr.mxu0 0.0
  %1715 = vmatpush1.msra.mxu0 0.0
  %1716 = vmatprep.subr.mxu0 0.0
  %1717 = vmatpush1.msra.mxu0 0.0
  %1718 = vmatprep.subr.mxu0 0.0
  %1719 = vmatpush1.msra.mxu0 0.0
  %1720 = vmatprep.subr.mxu0 0.0
  %1721 = vmatpush1.msra.mxu0 0.0
  %1722 = vmatprep.subr.mxu0 0.0
  %1723 = vmatpush1.msra.mxu0 0.0
  %1724 = vmatprep.subr.mxu0 0.0
  %1725 = vmatpush1.msra.mxu0 0.0
  %1726 = vmatprep.subr.mxu0 0.0
  %1727 = vmatpush1.msra.mxu0 0.0
  %1728 = vmatprep.subr.mxu0 0.0
  %1729 = vmatpush1.msra.mxu0 0.0
  %1730 = vmatprep.subr.mxu0 0.0
  %1731 = vmatpush1.msra.mxu0 0.0
  %1732 = vmatprep.subr.mxu0 0.0
  %1733 = vmatpush1.msra.mxu0 0.0
  %1734 = vmatprep.mubr.f32.mxu0 0.0
  %1735 = vmatmul.mubr.f32.gmra.mrb[0].mxu0 %v1659
  %v1736 = vpop.f32.mrb[0].mxu0
  %v1737 = vadd.f32 %v1657, %v1736
  %v1738 = vpop.f32.mrb[0].mxu0
  %1739 = vmatprep.mubr.f32.mxu0 0.0
  %1740 = vmatmul.mubr.f32.gmra.mrb[0].mxu0 %v1662
  %v1741 = vpop.f32.mrb[0].mxu0
  %v1742 = vadd.f32 %v1657, %v1741
  %v1743 = vpop.f32.mrb[0].mxu0
  %1744 = vmatprep.mubr.f32.mxu0 0.0
  %1745 = vmatmul.mubr.f32.gmra.mrb[0].mxu0 %v1665
  %v1746 = vpop.f32.mrb[0].mxu0
  %v1747 = vadd.f32 %v1657, %v1746
  %v1748 = vpop.f32.mrb[0].mxu0
  %1749 = vmatprep.mubr.f32.mxu0 0.0
  %1750 = vmatmul.mubr.f32.gmra.mrb[0].mxu0 %v1668
  %v1751 = vpop.f32.mrb[0].mxu0
  %v1752 = vadd.f32 %v1657, %v1751
  %v1753 = vpop.f32.mrb[0].mxu0
  %1754 = vdwg.mxu0
  %v1755 = vmul.f32 %v1737, %v416
  %v1756 = vmul.f32 %v1742, %v417
  %v1757 = vmul.f32 %v1747, %v418
  %v1758 = vmul.f32 %v1752, %v419
  %v1759 = vmul.f32 %v1737, %v420
  %v1760 = vmul.f32 %v1742, %v421
  %v1761 = vmul.f32 %v1747, %v422
  %v1762 = vmul.f32 %v1752, %v423
  %v1763 = vmul.f32 %v1737, %v424
  %v1764 = vmul.f32 %v1742, %v425
  %v1765 = vmul.f32 %v1747, %v426
  %v1766 = vmul.f32 %v1752, %v427
  %v1767 = vmul.f32 %v1737, %v428
  %v1768 = vmul.f32 %v1742, %v429
  %v1769 = vmul.f32 %v1747, %v430
  %v1770 = vmul.f32 %v1752, %v431
  %1775 = vrot.lane.b32.xlu0 %v1737, 96
  %v1776 = vpop.permute.xlu0 %1775
  %1777 = vrot.lane.b32.xlu0 %v1742, 96
  %v1778 = vpop.permute.xlu0 %1777
  %1779 = vrot.lane.b32.xlu0 %v1747, 96
  %v1780 = vpop.permute.xlu0 %1779
  %1781 = vrot.lane.b32.xlu0 %v1752, 96
  %v1782 = vpop.permute.xlu0 %1781
  %v1784 = vsel %vm216, %v1755, 0
  %v1787 = vsel %vm216, %v1756, 0
  %v1790 = vsel %vm216, %v1757, 0
  %v1793 = vsel %vm216, %v1758, 0
  %v1796 = vsel %vm216, %v1759, 0
  %v1799 = vsel %vm216, %v1760, 0
  %v1802 = vsel %vm216, %v1761, 0
  %v1805 = vsel %vm216, %v1762, 0
  %v1808 = vsel %vm216, %v1763, 0
  %v1811 = vsel %vm216, %v1764, 0
  %v1814 = vsel %vm216, %v1765, 0
  %v1817 = vsel %vm216, %v1766, 0
  %v1820 = vsel %vm216, %v1767, 0
  %v1823 = vsel %vm216, %v1768, 0
  %v1826 = vsel %vm216, %v1769, 0
  %v1829 = vsel %vm216, %v1770, 0
  %v1831 = vsel %vm216, %v1776, 0
  %v1833 = vsel %vm216, %v1778, 0
  %v1835 = vsel %vm216, %v1780, 0
  %v1837 = vsel %vm216, %v1782, 0
  %1839 = vmatprep.subr.mxu0 0.0
  %1840 = vmatpush1.xpose.msra.mxu0 %v1831
  %1841 = vmatprep.subr.mxu0 0.0
  %1842 = vmatpush1.xpose.msra.mxu0 %v1833
  %1843 = vmatprep.subr.mxu0 0.0
  %1844 = vmatpush1.xpose.msra.mxu0 %v1835
  %1845 = vmatprep.subr.mxu0 0.0
  %1846 = vmatpush1.xpose.msra.mxu0 %v1837
  %1847 = vmatprep.subr.mxu0 0.0
  %1848 = vmatpush1.xpose.msra.mxu0 0.0
  %1849 = vmatprep.subr.mxu0 0.0
  %1850 = vmatpush1.xpose.msra.mxu0 0.0
  %1851 = vmatprep.subr.mxu0 0.0
  %1852 = vmatpush1.xpose.msra.mxu0 0.0
  %1853 = vmatprep.subr.mxu0 0.0
  %1854 = vmatpush1.xpose.msra.mxu0 0.0
  %1855 = vmatprep.subr.mxu0 0.0
  %1856 = vmatpush1.xpose.msra.mxu0 0.0
  %1857 = vmatprep.subr.mxu0 0.0
  %1858 = vmatpush1.xpose.msra.mxu0 0.0
  %1859 = vmatprep.subr.mxu0 0.0
  %1860 = vmatpush1.xpose.msra.mxu0 0.0
  %1861 = vmatprep.subr.mxu0 0.0
  %1862 = vmatpush1.xpose.msra.mxu0 0.0
  %1863 = vmatprep.subr.mxu0 0.0
  %1864 = vmatpush1.xpose.msra.mxu0 0.0
  %1865 = vmatprep.subr.mxu0 0.0
  %1866 = vmatpush1.xpose.msra.mxu0 0.0
  %1867 = vmatprep.subr.mxu0 0.0
  %1868 = vmatpush1.xpose.msra.mxu0 0.0
  %1869 = vmatprep.subr.mxu0 0.0
  %1870 = vmatpush1.xpose.msra.mxu0 0.0
  %1871 = vmatprep.subr.mxu0 0.0
  %1872 = vmatpush1.xpose.msra.mxu0 0.0
  %1873 = vmatprep.subr.mxu0 0.0
  %1874 = vmatpush1.xpose.msra.mxu0 0.0
  %1875 = vmatprep.subr.mxu0 0.0
  %1876 = vmatpush1.xpose.msra.mxu0 0.0
  %1877 = vmatprep.subr.mxu0 0.0
  %1878 = vmatpush1.xpose.msra.mxu0 0.0
  %1879 = vmatprep.subr.mxu0 0.0
  %1880 = vmatpush1.xpose.msra.mxu0 0.0
  %1881 = vmatprep.subr.mxu0 0.0
  %1882 = vmatpush1.xpose.msra.mxu0 0.0
  %1883 = vmatprep.subr.mxu0 0.0
  %1884 = vmatpush1.xpose.msra.mxu0 0.0
  %1885 = vmatprep.subr.mxu0 0.0
  %1886 = vmatpush1.xpose.msra.mxu0 0.0
  %1887 = vmatprep.subr.mxu0 0.0
  %1888 = vmatpush1.xpose.msra.mxu0 0.0
  %1889 = vmatprep.subr.mxu0 0.0
  %1890 = vmatpush1.xpose.msra.mxu0 0.0
  %1891 = vmatprep.subr.mxu0 0.0
  %1892 = vmatpush1.xpose.msra.mxu0 0.0
  %1893 = vmatprep.subr.mxu0 0.0
  %1894 = vmatpush1.xpose.msra.mxu0 0.0
  %1895 = vmatprep.subr.mxu0 0.0
  %1896 = vmatpush1.xpose.msra.mxu0 0.0
  %1897 = vmatprep.subr.mxu0 0.0
  %1898 = vmatpush1.xpose.msra.mxu0 0.0
  %1899 = vmatprep.subr.mxu0 0.0
  %1900 = vmatpush1.xpose.msra.mxu0 0.0
  %1901 = vmatprep.subr.mxu0 0.0
  %1902 = vmatpush1.xpose.msra.mxu0 0.0
  %1903 = vmatprep.mubr.f32.mxu0 0.0
  %1904 = vmatmul.mubr.f32.gmra.mrb[0].mxu0 %v1784
  %v1905 = vpop.f32.mrb[0].mxu0
  %v1906 = vadd.f32 0.0, %v1905
  %v1907 = vpop.f32.mrb[0].mxu0
  %1908 = vmatprep.mubr.f32.mxu0 0.0
  %1909 = vmatmul.mubr.f32.gmra.mrb[0].mxu0 %v1787
  %v1910 = vpop.f32.mrb[0].mxu0
  %v1911 = vadd.f32 0.0, %v1910
  %v1912 = vpop.f32.mrb[0].mxu0
  %1913 = vmatprep.mubr.f32.mxu0 0.0
  %1914 = vmatmul.mubr.f32.gmra.mrb[0].mxu0 %v1790
  %v1915 = vpop.f32.mrb[0].mxu0
  %v1916 = vadd.f32 0.0, %v1915
  %v1917 = vpop.f32.mrb[0].mxu0
  %1918 = vmatprep.mubr.f32.mxu0 0.0
  %1919 = vmatmul.mubr.f32.gmra.mrb[0].mxu0 %v1793
  %v1920 = vpop.f32.mrb[0].mxu0
  %v1921 = vadd.f32 0.0, %v1920
  %v1922 = vpop.f32.mrb[0].mxu0
  %1923 = vmatprep.mubr.f32.mxu0 0.0
  %1924 = vmatmul.mubr.f32.gmra.mrb[0].mxu0 %v1796
  %v1925 = vpop.f32.mrb[0].mxu0
  %v1926 = vadd.f32 0.0, %v1925
  %v1927 = vpop.f32.mrb[0].mxu0
  %1928 = vmatprep.mubr.f32.mxu0 0.0
  %1929 = vmatmul.mubr.f32.gmra.mrb[0].mxu0 %v1799
  %v1930 = vpop.f32.mrb[0].mxu0
  %v1931 = vadd.f32 0.0, %v1930
  %v1932 = vpop.f32.mrb[0].mxu0
  %1933 = vmatprep.mubr.f32.mxu0 0.0
  %1934 = vmatmul.mubr.f32.gmra.mrb[0].mxu0 %v1802
  %v1935 = vpop.f32.mrb[0].mxu0
  %v1936 = vadd.f32 0.0, %v1935
  %v1937 = vpop.f32.mrb[0].mxu0
  %1938 = vmatprep.mubr.f32.mxu0 0.0
  %1939 = vmatmul.mubr.f32.gmra.mrb[0].mxu0 %v1805
  %v1940 = vpop.f32.mrb[0].mxu0
  %v1941 = vadd.f32 0.0, %v1940
  %v1942 = vpop.f32.mrb[0].mxu0
  %1943 = vmatprep.mubr.f32.mxu0 0.0
  %1944 = vmatmul.mubr.f32.gmra.mrb[0].mxu0 %v1808
  %v1945 = vpop.f32.mrb[0].mxu0
  %v1946 = vadd.f32 0.0, %v1945
  %v1947 = vpop.f32.mrb[0].mxu0
  %1948 = vmatprep.mubr.f32.mxu0 0.0
  %1949 = vmatmul.mubr.f32.gmra.mrb[0].mxu0 %v1811
  %v1950 = vpop.f32.mrb[0].mxu0
  %v1951 = vadd.f32 0.0, %v1950
  %v1952 = vpop.f32.mrb[0].mxu0
  %1953 = vmatprep.mubr.f32.mxu0 0.0
  %1954 = vmatmul.mubr.f32.gmra.mrb[0].mxu0 %v1814
  %v1955 = vpop.f32.mrb[0].mxu0
  %v1956 = vadd.f32 0.0, %v1955
  %v1957 = vpop.f32.mrb[0].mxu0
  %1958 = vmatprep.mubr.f32.mxu0 0.0
  %1959 = vmatmul.mubr.f32.gmra.mrb[0].mxu0 %v1817
  %v1960 = vpop.f32.mrb[0].mxu0
  %v1961 = vadd.f32 0.0, %v1960
  %v1962 = vpop.f32.mrb[0].mxu0
  %1963 = vmatprep.mubr.f32.mxu0 0.0
  %1964 = vmatmul.mubr.f32.gmra.mrb[0].mxu0 %v1820
  %v1965 = vpop.f32.mrb[0].mxu0
  %v1966 = vadd.f32 0.0, %v1965
  %v1967 = vpop.f32.mrb[0].mxu0
  %1968 = vmatprep.mubr.f32.mxu0 0.0
  %1969 = vmatmul.mubr.f32.gmra.mrb[0].mxu0 %v1823
  %v1970 = vpop.f32.mrb[0].mxu0
  %v1971 = vadd.f32 0.0, %v1970
  %v1972 = vpop.f32.mrb[0].mxu0
  %1973 = vmatprep.mubr.f32.mxu0 0.0
  %1974 = vmatmul.mubr.f32.gmra.mrb[0].mxu0 %v1826
  %v1975 = vpop.f32.mrb[0].mxu0
  %v1976 = vadd.f32 0.0, %v1975
  %v1977 = vpop.f32.mrb[0].mxu0
  %1978 = vmatprep.mubr.f32.mxu0 0.0
  %1979 = vmatmul.mubr.f32.gmra.mrb[0].mxu0 %v1829
  %v1980 = vpop.f32.mrb[0].mxu0
  %v1981 = vadd.f32 0.0, %v1980
  %v1982 = vpop.f32.mrb[0].mxu0
  %1983 = vdwg.mxu0
  %v1984 = vmul.f32 %v1906, 0.35355338
  %v1985 = vmul.f32 %v1911, 0.35355338
  %v1986 = vmul.f32 %v1916, 0.35355338
  %v1987 = vmul.f32 %v1921, 0.35355338
  %v1988 = vmul.f32 %v1926, 0.35355338
  %v1989 = vmul.f32 %v1931, 0.35355338
  %v1990 = vmul.f32 %v1936, 0.35355338
  %v1991 = vmul.f32 %v1941, 0.35355338
  %v1992 = vmul.f32 %v1946, 0.35355338
  %v1993 = vmul.f32 %v1951, 0.35355338
  %v1994 = vmul.f32 %v1956, 0.35355338
  %v1995 = vmul.f32 %v1961, 0.35355338
  %v1996 = vmul.f32 %v1966, 0.35355338
  %v1997 = vmul.f32 %v1971, 0.35355338
  %v1998 = vmul.f32 %v1976, 0.35355338
  %v1999 = vmul.f32 %v1981, 0.35355338
  %v2000 = vadd.f32 %v1984, %v432
  %v2001 = vadd.f32 %v1985, %v433
  %v2002 = vadd.f32 %v1986, %v434
  %v2003 = vadd.f32 %v1987, %v435
  %v2004 = vadd.f32 %v1988, %v436
  %v2005 = vadd.f32 %v1989, %v437
  %v2006 = vadd.f32 %v1990, %v438
  %v2007 = vadd.f32 %v1991, %v439
  %v2008 = vadd.f32 %v1992, %v440
  %v2009 = vadd.f32 %v1993, %v441
  %v2010 = vadd.f32 %v1994, %v442
  %v2011 = vadd.f32 %v1995, %v443
  %v2012 = vadd.f32 %v1996, %v444
  %v2013 = vadd.f32 %v1997, %v445
  %v2014 = vadd.f32 %v1998, %v446
  %v2015 = vadd.f32 %v1999, %v447
  %v2016 = vsel %vm216, %v2000, -inf
  %2017 = vmax.xlane.f32.xlu0 %v2016
  %v2018 = vpop.xlane.xlu0 %2017
  %v2019 = vsel %vm216, %v2001, -inf
  %2020 = vmax.xlane.f32.xlu0 %v2019
  %v2021 = vpop.xlane.xlu0 %2020
  %v2022 = vsel %vm216, %v2002, -inf
  %2023 = vmax.xlane.f32.xlu0 %v2022
  %v2024 = vpop.xlane.xlu0 %2023
  %v2025 = vsel %vm216, %v2003, -inf
  %2026 = vmax.xlane.f32.xlu0 %v2025
  %v2027 = vpop.xlane.xlu0 %2026
  %v2028 = vsel %vm216, %v2004, -inf
  %2029 = vmax.xlane.f32.xlu0 %v2028
  %v2030 = vpop.xlane.xlu0 %2029
  %v2031 = vsel %vm216, %v2005, -inf
  %2032 = vmax.xlane.f32.xlu0 %v2031
  %v2033 = vpop.xlane.xlu0 %2032
  %v2034 = vsel %vm216, %v2006, -inf
  %2035 = vmax.xlane.f32.xlu0 %v2034
  %v2036 = vpop.xlane.xlu0 %2035
  %v2037 = vsel %vm216, %v2007, -inf
  %2038 = vmax.xlane.f32.xlu0 %v2037
  %v2039 = vpop.xlane.xlu0 %2038
  %v2040 = vsel %vm216, %v2008, -inf
  %2041 = vmax.xlane.f32.xlu0 %v2040
  %v2042 = vpop.xlane.xlu0 %2041
  %v2043 = vsel %vm216, %v2009, -inf
  %2044 = vmax.xlane.f32.xlu0 %v2043
  %v2045 = vpop.xlane.xlu0 %2044
  %v2046 = vsel %vm216, %v2010, -inf
  %2047 = vmax.xlane.f32.xlu0 %v2046
  %v2048 = vpop.xlane.xlu0 %2047
  %v2049 = vsel %vm216, %v2011, -inf
  %2050 = vmax.xlane.f32.xlu0 %v2049
  %v2051 = vpop.xlane.xlu0 %2050
  %v2052 = vsel %vm216, %v2012, -inf
  %2053 = vmax.xlane.f32.xlu0 %v2052
  %v2054 = vpop.xlane.xlu0 %2053
  %v2055 = vsel %vm216, %v2013, -inf
  %2056 = vmax.xlane.f32.xlu0 %v2055
  %v2057 = vpop.xlane.xlu0 %2056
  %v2058 = vsel %vm216, %v2014, -inf
  %2059 = vmax.xlane.f32.xlu0 %v2058
  %v2060 = vpop.xlane.xlu0 %2059
  %v2061 = vsel %vm216, %v2015, -inf
  %2062 = vmax.xlane.f32.xlu0 %v2061
  %v2063 = vpop.xlane.xlu0 %2062
  %v2064 = vsub.f32 %v2000, %v2018
  %v2065 = vsub.f32 %v2001, %v2021
  %v2066 = vsub.f32 %v2002, %v2024
  %v2067 = vsub.f32 %v2003, %v2027
  %v2068 = vsub.f32 %v2004, %v2030
  %v2069 = vsub.f32 %v2005, %v2033
  %v2070 = vsub.f32 %v2006, %v2036
  %v2071 = vsub.f32 %v2007, %v2039
  %v2072 = vsub.f32 %v2008, %v2042
  %v2073 = vsub.f32 %v2009, %v2045
  %v2074 = vsub.f32 %v2010, %v2048
  %v2075 = vsub.f32 %v2011, %v2051
  %v2076 = vsub.f32 %v2012, %v2054
  %v2077 = vsub.f32 %v2013, %v2057
  %v2078 = vsub.f32 %v2014, %v2060
  %v2079 = vsub.f32 %v2015, %v2063
  %v2080 = vmul.f32 %v2064, 1.442695
  %v2081 = vpow.pop %v2080
  %v2082 = vmul.f32 %v2065, 1.442695
  %v2083 = vpow.pop %v2082
  %v2084 = vmul.f32 %v2066, 1.442695
  %v2085 = vpow.pop %v2084
  %v2086 = vmul.f32 %v2067, 1.442695
  %v2087 = vpow.pop %v2086
  %v2088 = vmul.f32 %v2068, 1.442695
  %v2089 = vpow.pop %v2088
  %v2090 = vmul.f32 %v2069, 1.442695
  %v2091 = vpow.pop %v2090
  %v2092 = vmul.f32 %v2070, 1.442695
  %v2093 = vpow.pop %v2092
  %v2094 = vmul.f32 %v2071, 1.442695
  %v2095 = vpow.pop %v2094
  %v2096 = vmul.f32 %v2072, 1.442695
  %v2097 = vpow.pop %v2096
  %v2098 = vmul.f32 %v2073, 1.442695
  %v2099 = vpow.pop %v2098
  %v2100 = vmul.f32 %v2074, 1.442695
  %v2101 = vpow.pop %v2100
  %v2102 = vmul.f32 %v2075, 1.442695
  %v2103 = vpow.pop %v2102
  %v2104 = vmul.f32 %v2076, 1.442695
  %v2105 = vpow.pop %v2104
  %v2106 = vmul.f32 %v2077, 1.442695
  %v2107 = vpow.pop %v2106
  %v2108 = vmul.f32 %v2078, 1.442695
  %v2109 = vpow.pop %v2108
  %v2110 = vmul.f32 %v2079, 1.442695
  %v2111 = vpow.pop %v2110
  %v2112 = vsel %vm216, %v2081, 0.0
  %2113 = vadd.xlane.f32.xlu0 %v2112
  %v2114 = vpop.xlane.xlu0 %2113
  %v2115 = vsel %vm216, %v2083, 0.0
  %2116 = vadd.xlane.f32.xlu0 %v2115
  %v2117 = vpop.xlane.xlu0 %2116
  %v2118 = vsel %vm216, %v2085, 0.0
  %2119 = vadd.xlane.f32.xlu0 %v2118
  %v2120 = vpop.xlane.xlu0 %2119
  %v2121 = vsel %vm216, %v2087, 0.0
  %2122 = vadd.xlane.f32.xlu0 %v2121
  %v2123 = vpop.xlane.xlu0 %2122
  %v2124 = vsel %vm216, %v2089, 0.0
  %2125 = vadd.xlane.f32.xlu0 %v2124
  %v2126 = vpop.xlane.xlu0 %2125
  %v2127 = vsel %vm216, %v2091, 0.0
  %2128 = vadd.xlane.f32.xlu0 %v2127
  %v2129 = vpop.xlane.xlu0 %2128
  %v2130 = vsel %vm216, %v2093, 0.0
  %2131 = vadd.xlane.f32.xlu0 %v2130
  %v2132 = vpop.xlane.xlu0 %2131
  %v2133 = vsel %vm216, %v2095, 0.0
  %2134 = vadd.xlane.f32.xlu0 %v2133
  %v2135 = vpop.xlane.xlu0 %2134
  %v2136 = vsel %vm216, %v2097, 0.0
  %2137 = vadd.xlane.f32.xlu0 %v2136
  %v2138 = vpop.xlane.xlu0 %2137
  %v2139 = vsel %vm216, %v2099, 0.0
  %2140 = vadd.xlane.f32.xlu0 %v2139
  %v2141 = vpop.xlane.xlu0 %2140
  %v2142 = vsel %vm216, %v2101, 0.0
  %2143 = vadd.xlane.f32.xlu0 %v2142
  %v2144 = vpop.xlane.xlu0 %2143
  %v2145 = vsel %vm216, %v2103, 0.0
  %2146 = vadd.xlane.f32.xlu0 %v2145
  %v2147 = vpop.xlane.xlu0 %2146
  %v2148 = vsel %vm216, %v2105, 0.0
  %2149 = vadd.xlane.f32.xlu0 %v2148
  %v2150 = vpop.xlane.xlu0 %2149
  %v2151 = vsel %vm216, %v2107, 0.0
  %2152 = vadd.xlane.f32.xlu0 %v2151
  %v2153 = vpop.xlane.xlu0 %2152
  %v2154 = vsel %vm216, %v2109, 0.0
  %2155 = vadd.xlane.f32.xlu0 %v2154
  %v2156 = vpop.xlane.xlu0 %2155
  %v2157 = vsel %vm216, %v2111, 0.0
  %2158 = vadd.xlane.f32.xlu0 %v2157
  %v2159 = vpop.xlane.xlu0 %2158
  %v2160 = vrcp.pop %v2114
  %v2161 = vrcp.pop %v2117
  %v2162 = vrcp.pop %v2120
  %v2163 = vrcp.pop %v2123
  %v2164 = vrcp.pop %v2126
  %v2165 = vrcp.pop %v2129
  %v2166 = vrcp.pop %v2132
  %v2167 = vrcp.pop %v2135
  %v2168 = vrcp.pop %v2138
  %v2169 = vrcp.pop %v2141
  %v2170 = vrcp.pop %v2144
  %v2171 = vrcp.pop %v2147
  %v2172 = vrcp.pop %v2150
  %v2173 = vrcp.pop %v2153
  %v2174 = vrcp.pop %v2156
  %v2175 = vrcp.pop %v2159
  %v2176 = vmul.f32 %v2081, %v2160
  %v2177 = vmul.f32 %v2083, %v2161
  %v2178 = vmul.f32 %v2085, %v2162
  %v2179 = vmul.f32 %v2087, %v2163
  %v2180 = vmul.f32 %v2089, %v2164
  %v2181 = vmul.f32 %v2091, %v2165
  %v2182 = vmul.f32 %v2093, %v2166
  %v2183 = vmul.f32 %v2095, %v2167
  %v2184 = vmul.f32 %v2097, %v2168
  %v2185 = vmul.f32 %v2099, %v2169
  %v2186 = vmul.f32 %v2101, %v2170
  %v2187 = vmul.f32 %v2103, %v2171
  %v2188 = vmul.f32 %v2105, %v2172
  %v2189 = vmul.f32 %v2107, %v2173
  %v2190 = vmul.f32 %v2109, %v2174
  %v2191 = vmul.f32 %v2111, %v2175
  %2192 = vrot.lane.b32.xlu0 %v1737, 64
  %v2193 = vpop.permute.xlu0 %2192
  %2194 = vrot.lane.b32.xlu0 %v1742, 64
  %v2195 = vpop.permute.xlu0 %2194
  %2196 = vrot.lane.b32.xlu0 %v1747, 64
  %v2197 = vpop.permute.xlu0 %2196
  %2198 = vrot.lane.b32.xlu0 %v1752, 64
  %v2199 = vpop.permute.xlu0 %2198
  %v2205 = vsel %vm216, %v2176, 0
  %v2208 = vsel %vm216, %v2177, 0
  %v2211 = vsel %vm216, %v2178, 0
  %v2214 = vsel %vm216, %v2179, 0
  %v2217 = vsel %vm216, %v2180, 0
  %v2220 = vsel %vm216, %v2181, 0
  %v2223 = vsel %vm216, %v2182, 0
  %v2226 = vsel %vm216, %v2183, 0
  %v2229 = vsel %vm216, %v2184, 0
  %v2232 = vsel %vm216, %v2185, 0
  %v2235 = vsel %vm216, %v2186, 0
  %v2238 = vsel %vm216, %v2187, 0
  %v2241 = vsel %vm216, %v2188, 0
  %v2244 = vsel %vm216, %v2189, 0
  %v2247 = vsel %vm216, %v2190, 0
  %v2250 = vsel %vm216, %v2191, 0
  %2252 = vmatprep.subr.mxu0 0.0
  %2253 = vmatpush1.msra.mxu0 %v2193
  %2254 = vmatprep.subr.mxu0 0.0
  %2255 = vmatpush1.msra.mxu0 %v2195
  %2256 = vmatprep.subr.mxu0 0.0
  %2257 = vmatpush1.msra.mxu0 %v2197
  %2258 = vmatprep.subr.mxu0 0.0
  %2259 = vmatpush1.msra.mxu0 %v2199
  %2260 = vmatprep.subr.mxu0 0.0
  %2261 = vmatpush1.msra.mxu0 0.0
  %2262 = vmatprep.subr.mxu0 0.0
  %2263 = vmatpush1.msra.mxu0 0.0
  %2264 = vmatprep.subr.mxu0 0.0
  %2265 = vmatpush1.msra.mxu0 0.0
  %2266 = vmatprep.subr.mxu0 0.0
  %2267 = vmatpush1.msra.mxu0 0.0
  %2268 = vmatprep.subr.mxu0 0.0
  %2269 = vmatpush1.msra.mxu0 0.0
  %2270 = vmatprep.subr.mxu0 0.0
  %2271 = vmatpush1.msra.mxu0 0.0
  %2272 = vmatprep.subr.mxu0 0.0
  %2273 = vmatpush1.msra.mxu0 0.0
  %2274 = vmatprep.subr.mxu0 0.0
  %2275 = vmatpush1.msra.mxu0 0.0
  %2276 = vmatprep.subr.mxu0 0.0
  %2277 = vmatpush1.msra.mxu0 0.0
  %2278 = vmatprep.subr.mxu0 0.0
  %2279 = vmatpush1.msra.mxu0 0.0
  %2280 = vmatprep.subr.mxu0 0.0
  %2281 = vmatpush1.msra.mxu0 0.0
  %2282 = vmatprep.subr.mxu0 0.0
  %2283 = vmatpush1.msra.mxu0 0.0
  %2284 = vmatprep.subr.mxu0 0.0
  %2285 = vmatpush1.msra.mxu0 0.0
  %2286 = vmatprep.subr.mxu0 0.0
  %2287 = vmatpush1.msra.mxu0 0.0
  %2288 = vmatprep.subr.mxu0 0.0
  %2289 = vmatpush1.msra.mxu0 0.0
  %2290 = vmatprep.subr.mxu0 0.0
  %2291 = vmatpush1.msra.mxu0 0.0
  %2292 = vmatprep.subr.mxu0 0.0
  %2293 = vmatpush1.msra.mxu0 0.0
  %2294 = vmatprep.subr.mxu0 0.0
  %2295 = vmatpush1.msra.mxu0 0.0
  %2296 = vmatprep.subr.mxu0 0.0
  %2297 = vmatpush1.msra.mxu0 0.0
  %2298 = vmatprep.subr.mxu0 0.0
  %2299 = vmatpush1.msra.mxu0 0.0
  %2300 = vmatprep.subr.mxu0 0.0
  %2301 = vmatpush1.msra.mxu0 0.0
  %2302 = vmatprep.subr.mxu0 0.0
  %2303 = vmatpush1.msra.mxu0 0.0
  %2304 = vmatprep.subr.mxu0 0.0
  %2305 = vmatpush1.msra.mxu0 0.0
  %2306 = vmatprep.subr.mxu0 0.0
  %2307 = vmatpush1.msra.mxu0 0.0
  %2308 = vmatprep.subr.mxu0 0.0
  %2309 = vmatpush1.msra.mxu0 0.0
  %2310 = vmatprep.subr.mxu0 0.0
  %2311 = vmatpush1.msra.mxu0 0.0
  %2312 = vmatprep.subr.mxu0 0.0
  %2313 = vmatpush1.msra.mxu0 0.0
  %2314 = vmatprep.subr.mxu0 0.0
  %2315 = vmatpush1.msra.mxu0 0.0
  %2316 = vmatprep.mubr.f32.mxu0 0.0
  %2317 = vmatmul.mubr.f32.gmra.mrb[0].mxu0 %v2205
  %v2318 = vpop.f32.mrb[0].mxu0
  %v2319 = vadd.f32 0.0, %v2318
  %v2320 = vpop.f32.mrb[0].mxu0
  %2321 = vmatprep.mubr.f32.mxu0 0.0
  %2322 = vmatmul.mubr.f32.gmra.mrb[0].mxu0 %v2208
  %v2323 = vpop.f32.mrb[0].mxu0
  %v2324 = vadd.f32 0.0, %v2323
  %v2325 = vpop.f32.mrb[0].mxu0
  %2326 = vmatprep.mubr.f32.mxu0 0.0
  %2327 = vmatmul.mubr.f32.gmra.mrb[0].mxu0 %v2211
  %v2328 = vpop.f32.mrb[0].mxu0
  %v2329 = vadd.f32 0.0, %v2328
  %v2330 = vpop.f32.mrb[0].mxu0
  %2331 = vmatprep.mubr.f32.mxu0 0.0
  %2332 = vmatmul.mubr.f32.gmra.mrb[0].mxu0 %v2214
  %v2333 = vpop.f32.mrb[0].mxu0
  %v2334 = vadd.f32 0.0, %v2333
  %v2335 = vpop.f32.mrb[0].mxu0
  %2336 = vmatprep.mubr.f32.mxu0 0.0
  %2337 = vmatmul.mubr.f32.gmra.mrb[0].mxu0 %v2217
  %v2338 = vpop.f32.mrb[0].mxu0
  %v2339 = vadd.f32 0.0, %v2338
  %v2340 = vpop.f32.mrb[0].mxu0
  %2341 = vmatprep.mubr.f32.mxu0 0.0
  %2342 = vmatmul.mubr.f32.gmra.mrb[0].mxu0 %v2220
  %v2343 = vpop.f32.mrb[0].mxu0
  %v2344 = vadd.f32 0.0, %v2343
  %v2345 = vpop.f32.mrb[0].mxu0
  %2346 = vmatprep.mubr.f32.mxu0 0.0
  %2347 = vmatmul.mubr.f32.gmra.mrb[0].mxu0 %v2223
  %v2348 = vpop.f32.mrb[0].mxu0
  %v2349 = vadd.f32 0.0, %v2348
  %v2350 = vpop.f32.mrb[0].mxu0
  %2351 = vmatprep.mubr.f32.mxu0 0.0
  %2352 = vmatmul.mubr.f32.gmra.mrb[0].mxu0 %v2226
  %v2353 = vpop.f32.mrb[0].mxu0
  %v2354 = vadd.f32 0.0, %v2353
  %v2355 = vpop.f32.mrb[0].mxu0
  %2356 = vmatprep.mubr.f32.mxu0 0.0
  %2357 = vmatmul.mubr.f32.gmra.mrb[0].mxu0 %v2229
  %v2358 = vpop.f32.mrb[0].mxu0
  %v2359 = vadd.f32 0.0, %v2358
  %v2360 = vpop.f32.mrb[0].mxu0
  %2361 = vmatprep.mubr.f32.mxu0 0.0
  %2362 = vmatmul.mubr.f32.gmra.mrb[0].mxu0 %v2232
  %v2363 = vpop.f32.mrb[0].mxu0
  %v2364 = vadd.f32 0.0, %v2363
  %v2365 = vpop.f32.mrb[0].mxu0
  %2366 = vmatprep.mubr.f32.mxu0 0.0
  %2367 = vmatmul.mubr.f32.gmra.mrb[0].mxu0 %v2235
  %v2368 = vpop.f32.mrb[0].mxu0
  %v2369 = vadd.f32 0.0, %v2368
  %v2370 = vpop.f32.mrb[0].mxu0
  %2371 = vmatprep.mubr.f32.mxu0 0.0
  %2372 = vmatmul.mubr.f32.gmra.mrb[0].mxu0 %v2238
  %v2373 = vpop.f32.mrb[0].mxu0
  %v2374 = vadd.f32 0.0, %v2373
  %v2375 = vpop.f32.mrb[0].mxu0
  %2376 = vmatprep.mubr.f32.mxu0 0.0
  %2377 = vmatmul.mubr.f32.gmra.mrb[0].mxu0 %v2241
  %v2378 = vpop.f32.mrb[0].mxu0
  %v2379 = vadd.f32 0.0, %v2378
  %v2380 = vpop.f32.mrb[0].mxu0
  %2381 = vmatprep.mubr.f32.mxu0 0.0
  %2382 = vmatmul.mubr.f32.gmra.mrb[0].mxu0 %v2244
  %v2383 = vpop.f32.mrb[0].mxu0
  %v2384 = vadd.f32 0.0, %v2383
  %v2385 = vpop.f32.mrb[0].mxu0
  %2386 = vmatprep.mubr.f32.mxu0 0.0
  %2387 = vmatmul.mubr.f32.gmra.mrb[0].mxu0 %v2247
  %v2388 = vpop.f32.mrb[0].mxu0
  %v2389 = vadd.f32 0.0, %v2388
  %v2390 = vpop.f32.mrb[0].mxu0
  %2391 = vmatprep.mubr.f32.mxu0 0.0
  %2392 = vmatmul.mubr.f32.gmra.mrb[0].mxu0 %v2250
  %v2393 = vpop.f32.mrb[0].mxu0
  %v2394 = vadd.f32 0.0, %v2393
  %v2395 = vpop.f32.mrb[0].mxu0
  %2396 = vdwg.mxu0
  %v2397 = vmul.f32 %v2319, %v416
  %v2398 = vmul.f32 %v2324, %v417
  %v2399 = vmul.f32 %v2329, %v418
  %v2400 = vmul.f32 %v2334, %v419
  %v2401 = vmul.f32 %v2339, %v420
  %v2402 = vmul.f32 %v2344, %v421
  %v2403 = vmul.f32 %v2349, %v422
  %v2404 = vmul.f32 %v2354, %v423
  %v2405 = vmul.f32 %v2359, %v424
  %v2406 = vmul.f32 %v2364, %v425
  %v2407 = vmul.f32 %v2369, %v426
  %v2408 = vmul.f32 %v2374, %v427
  %v2409 = vmul.f32 %v2379, %v428
  %v2410 = vmul.f32 %v2384, %v429
  %v2411 = vmul.f32 %v2389, %v430
  %v2412 = vmul.f32 %v2394, %v431
  %v2413 = vadd.f32 %v2397, %v2401
  %v2414 = vadd.f32 %v2398, %v2402
  %v2415 = vadd.f32 %v2399, %v2403
  %v2416 = vadd.f32 %v2400, %v2404
  %v2417 = vadd.f32 %v2413, %v2405
  %v2418 = vadd.f32 %v2414, %v2406
  %v2419 = vadd.f32 %v2415, %v2407
  %v2420 = vadd.f32 %v2416, %v2408
  %v2421 = vadd.f32 %v2417, %v2409
  %v2422 = vadd.f32 %v2418, %v2410
  %v2423 = vadd.f32 %v2419, %v2411
  %v2424 = vadd.f32 %v2420, %v2412
  %v2426 = vsel %vm216, %v2421, 0
  %v2429 = vsel %vm216, %v2422, 0
  %v2432 = vsel %vm216, %v2423, 0
  %v2435 = vsel %vm216, %v2424, 0
  %2437 = vmatprep.subr.mxu0 0.0
  %2438 = vmatpush1.msra.mxu0 %v1546
  %2439 = vmatprep.subr.mxu0 0.0
  %2440 = vmatpush1.msra.mxu0 %v1547
  %2441 = vmatprep.subr.mxu0 0.0
  %2442 = vmatpush1.msra.mxu0 %v1548
  %2443 = vmatprep.subr.mxu0 0.0
  %2444 = vmatpush1.msra.mxu0 %v1549
  %2445 = vmatprep.subr.mxu0 0.0
  %2446 = vmatpush1.msra.mxu0 0.0
  %2447 = vmatprep.subr.mxu0 0.0
  %2448 = vmatpush1.msra.mxu0 0.0
  %2449 = vmatprep.subr.mxu0 0.0
  %2450 = vmatpush1.msra.mxu0 0.0
  %2451 = vmatprep.subr.mxu0 0.0
  %2452 = vmatpush1.msra.mxu0 0.0
  %2453 = vmatprep.subr.mxu0 0.0
  %2454 = vmatpush1.msra.mxu0 0.0
  %2455 = vmatprep.subr.mxu0 0.0
  %2456 = vmatpush1.msra.mxu0 0.0
  %2457 = vmatprep.subr.mxu0 0.0
  %2458 = vmatpush1.msra.mxu0 0.0
  %2459 = vmatprep.subr.mxu0 0.0
  %2460 = vmatpush1.msra.mxu0 0.0
  %2461 = vmatprep.subr.mxu0 0.0
  %2462 = vmatpush1.msra.mxu0 0.0
  %2463 = vmatprep.subr.mxu0 0.0
  %2464 = vmatpush1.msra.mxu0 0.0
  %2465 = vmatprep.subr.mxu0 0.0
  %2466 = vmatpush1.msra.mxu0 0.0
  %2467 = vmatprep.subr.mxu0 0.0
  %2468 = vmatpush1.msra.mxu0 0.0
  %2469 = vmatprep.subr.mxu0 0.0
  %2470 = vmatpush1.msra.mxu0 0.0
  %2471 = vmatprep.subr.mxu0 0.0
  %2472 = vmatpush1.msra.mxu0 0.0
  %2473 = vmatprep.subr.mxu0 0.0
  %2474 = vmatpush1.msra.mxu0 0.0
  %2475 = vmatprep.subr.mxu0 0.0
  %2476 = vmatpush1.msra.mxu0 0.0
  %2477 = vmatprep.subr.mxu0 0.0
  %2478 = vmatpush1.msra.mxu0 0.0
  %2479 = vmatprep.subr.mxu0 0.0
  %2480 = vmatpush1.msra.mxu0 0.0
  %2481 = vmatprep.subr.mxu0 0.0
  %2482 = vmatpush1.msra.mxu0 0.0
  %2483 = vmatprep.subr.mxu0 0.0
  %2484 = vmatpush1.msra.mxu0 0.0
  %2485 = vmatprep.subr.mxu0 0.0
  %2486 = vmatpush1.msra.mxu0 0.0
  %2487 = vmatprep.subr.mxu0 0.0
  %2488 = vmatpush1.msra.mxu0 0.0
  %2489 = vmatprep.subr.mxu0 0.0
  %2490 = vmatpush1.msra.mxu0 0.0
  %2491 = vmatprep.subr.mxu0 0.0
  %2492 = vmatpush1.msra.mxu0 0.0
  %2493 = vmatprep.subr.mxu0 0.0
  %2494 = vmatpush1.msra.mxu0 0.0
  %2495 = vmatprep.subr.mxu0 0.0
  %2496 = vmatpush1.msra.mxu0 0.0
  %2497 = vmatprep.subr.mxu0 0.0
  %2498 = vmatpush1.msra.mxu0 0.0
  %2499 = vmatprep.subr.mxu0 0.0
  %2500 = vmatpush1.msra.mxu0 0.0
  %2501 = vmatprep.mubr.f32.mxu0 0.0
  %2502 = vmatmul.mubr.f32.gmra.mrb[0].mxu0 %v2426
  %v2503 = vpop.f32.mrb[0].mxu0
  %v2504 = vadd.f32 0.0, %v2503
  %v2505 = vpop.f32.mrb[0].mxu0
  %2506 = vmatprep.mubr.f32.mxu0 0.0
  %2507 = vmatmul.mubr.f32.gmra.mrb[0].mxu0 %v2429
  %v2508 = vpop.f32.mrb[0].mxu0
  %v2509 = vadd.f32 0.0, %v2508
  %v2510 = vpop.f32.mrb[0].mxu0
  %2511 = vmatprep.mubr.f32.mxu0 0.0
  %2512 = vmatmul.mubr.f32.gmra.mrb[0].mxu0 %v2432
  %v2513 = vpop.f32.mrb[0].mxu0
  %v2514 = vadd.f32 0.0, %v2513
  %v2515 = vpop.f32.mrb[0].mxu0
  %2516 = vmatprep.mubr.f32.mxu0 0.0
  %2517 = vmatmul.mubr.f32.gmra.mrb[0].mxu0 %v2435
  %v2518 = vpop.f32.mrb[0].mxu0
  %v2519 = vadd.f32 0.0, %v2518
  %v2520 = vpop.f32.mrb[0].mxu0
  %2521 = vdwg.mxu0
  %v2522 = vadd.f32 %v1534, %v2504
  %v2523 = vadd.f32 %v1535, %v2509
  %v2524 = vadd.f32 %v1536, %v2514
  %v2525 = vadd.f32 %v1537, %v2519
  %v2526 = vlaneseq
  %v2527 = vshrl.u32 %v2526, 7
  %v2528 = vsub.s32 1, %v2527
  %v2529 = vrot.slane %v193, %v2528
  %v2530 = vadd.f32 %v2522, %v2529
  %v2531 = vadd.f32 %v2523, %v2529
  %v2532 = vadd.f32 %v2524, %v2529
  %v2533 = vadd.f32 %v2525, %v2529
  %v2534 = vsel %vm216, %v2530, 0.0
  %2535 = vadd.xlane.f32.xlu0 %v2534
  %v2536 = vpop.xlane.xlu0 %2535
  %v2537 = vsel %vm216, %v2531, 0.0
  %2538 = vadd.xlane.f32.xlu0 %v2537
  %v2539 = vpop.xlane.xlu0 %2538
  %v2540 = vsel %vm216, %v2532, 0.0
  %2541 = vadd.xlane.f32.xlu0 %v2540
  %v2542 = vpop.xlane.xlu0 %2541
  %v2543 = vsel %vm216, %v2533, 0.0
  %2544 = vadd.xlane.f32.xlu0 %v2543
  %v2545 = vpop.xlane.xlu0 %2544
  %v2546 = vmul.f32 %v2536, %v229
  %v2547 = vmul.f32 %v2539, %v229
  %v2548 = vmul.f32 %v2542, %v229
  %v2549 = vmul.f32 %v2545, %v229
  %v2550 = vsub.f32 %v2530, %v2546
  %v2551 = vsub.f32 %v2531, %v2547
  %v2552 = vsub.f32 %v2532, %v2548
  %v2553 = vsub.f32 %v2533, %v2549
  %v2554 = vmul.f32 %v2550, %v2550
  %v2555 = vmul.f32 %v2551, %v2551
  %v2556 = vmul.f32 %v2552, %v2552
  %v2557 = vmul.f32 %v2553, %v2553
  %v2558 = vsel %vm216, %v2554, 0.0
  %2559 = vadd.xlane.f32.xlu0 %v2558
  %v2560 = vpop.xlane.xlu0 %2559
  %v2561 = vsel %vm216, %v2555, 0.0
  %2562 = vadd.xlane.f32.xlu0 %v2561
  %v2563 = vpop.xlane.xlu0 %2562
  %v2564 = vsel %vm216, %v2556, 0.0
  %2565 = vadd.xlane.f32.xlu0 %v2564
  %v2566 = vpop.xlane.xlu0 %2565
  %v2567 = vsel %vm216, %v2557, 0.0
  %2568 = vadd.xlane.f32.xlu0 %v2567
  %v2569 = vpop.xlane.xlu0 %2568
  %v2570 = vmul.f32 %v2560, %v254
  %v2571 = vmul.f32 %v2563, %v254
  %v2572 = vmul.f32 %v2566, %v254
  %v2573 = vmul.f32 %v2569, %v254
  %v2574 = vlaneseq
  %v2575 = vshrl.u32 %v2574, 7
  %v2576 = vsub.s32 6, %v2575
  %v2577 = vrot.slane %v193, %v2576
  %v2578 = vmul.f32 %v2577, %v2550
  %v2579 = vmul.f32 %v2577, %v2551
  %v2580 = vmul.f32 %v2577, %v2552
  %v2581 = vmul.f32 %v2577, %v2553
  %v2582 = vrsqrt.pop %v2570
  %v2583 = vmul.f32 %v2570, %v2582
  %vm2584 = vcmp.eq.f32.partialorder %v2570, inf
  %v2585 = vsel %vm2584, %v2570, %v2583
  %vm2586 = vcmp.eq.f32.partialorder %v2570, 0.0
  %v2587 = vand.u32 %v2570, 2147483648
  %v2588 = vsel %vm2586, %v2587, %v2585
  %v2589 = vrsqrt.pop %v2571
  %v2590 = vmul.f32 %v2571, %v2589
  %vm2591 = vcmp.eq.f32.partialorder %v2571, inf
  %v2592 = vsel %vm2591, %v2571, %v2590
  %vm2593 = vcmp.eq.f32.partialorder %v2571, 0.0
  %v2594 = vand.u32 %v2571, 2147483648
  %v2595 = vsel %vm2593, %v2594, %v2592
  %v2596 = vrsqrt.pop %v2572
  %v2597 = vmul.f32 %v2572, %v2596
  %vm2598 = vcmp.eq.f32.partialorder %v2572, inf
  %v2599 = vsel %vm2598, %v2572, %v2597
  %vm2600 = vcmp.eq.f32.partialorder %v2572, 0.0
  %v2601 = vand.u32 %v2572, 2147483648
  %v2602 = vsel %vm2600, %v2601, %v2599
  %v2603 = vrsqrt.pop %v2573
  %v2604 = vmul.f32 %v2573, %v2603
  %vm2605 = vcmp.eq.f32.partialorder %v2573, inf
  %v2606 = vsel %vm2605, %v2573, %v2604
  %vm2607 = vcmp.eq.f32.partialorder %v2573, 0.0
  %v2608 = vand.u32 %v2573, 2147483648
  %v2609 = vsel %vm2607, %v2608, %v2606
  %v2610 = vadd.f32 %v2588, 1e-06
  %v2611 = vadd.f32 %v2595, 1e-06
  %v2612 = vadd.f32 %v2602, 1e-06
  %v2613 = vadd.f32 %v2609, 1e-06
  %v2614 = vrcp.pop %v2610
  %v2615 = vmul.f32 %v2578, %v2614
  %v2616 = vrcp.pop %v2611
  %v2617 = vmul.f32 %v2579, %v2616
  %v2618 = vrcp.pop %v2612
  %v2619 = vmul.f32 %v2580, %v2618
  %v2620 = vrcp.pop %v2613
  %v2621 = vmul.f32 %v2581, %v2620
  %v2622 = vlaneseq
  %v2623 = vshrl.u32 %v2622, 7
  %v2624 = vsub.s32 7, %v2623
  %v2625 = vrot.slane %v193, %v2624
  %v2626 = vadd.f32 %v2615, %v2625
  %v2627 = vadd.f32 %v2617, %v2625
  %v2628 = vadd.f32 %v2619, %v2625
  %v2629 = vadd.f32 %v2621, %v2625
  %v2630 = vlaneseq
  %v2631 = vshrl.u32 %v2630, 7
  %v2632 = vsub.s32 4, %v2631
  %v2633 = vrot.slane %v193, %v2632
  %v2635 = vsel %vm216, %v2626, 0
  %v2638 = vsel %vm216, %v2627, 0
  %v2641 = vsel %vm216, %v2628, 0
  %v2644 = vsel %vm216, %v2629, 0
  %2646 = vmatprep.subr.mxu0 0.0
  %2647 = vmatpush1.msra.mxu0 %v1542
  %2648 = vmatprep.subr.mxu0 0.0
  %2649 = vmatpush1.msra.mxu0 %v1543
  %2650 = vmatprep.subr.mxu0 0.0
  %2651 = vmatpush1.msra.mxu0 %v1544
  %2652 = vmatprep.subr.mxu0 0.0
  %2653 = vmatpush1.msra.mxu0 %v1545
  %2654 = vmatprep.subr.mxu0 0.0
  %2655 = vmatpush1.msra.mxu0 0.0
  %2656 = vmatprep.subr.mxu0 0.0
  %2657 = vmatpush1.msra.mxu0 0.0
  %2658 = vmatprep.subr.mxu0 0.0
  %2659 = vmatpush1.msra.mxu0 0.0
  %2660 = vmatprep.subr.mxu0 0.0
  %2661 = vmatpush1.msra.mxu0 0.0
  %2662 = vmatprep.subr.mxu0 0.0
  %2663 = vmatpush1.msra.mxu0 0.0
  %2664 = vmatprep.subr.mxu0 0.0
  %2665 = vmatpush1.msra.mxu0 0.0
  %2666 = vmatprep.subr.mxu0 0.0
  %2667 = vmatpush1.msra.mxu0 0.0
  %2668 = vmatprep.subr.mxu0 0.0
  %2669 = vmatpush1.msra.mxu0 0.0
  %2670 = vmatprep.subr.mxu0 0.0
  %2671 = vmatpush1.msra.mxu0 0.0
  %2672 = vmatprep.subr.mxu0 0.0
  %2673 = vmatpush1.msra.mxu0 0.0
  %2674 = vmatprep.subr.mxu0 0.0
  %2675 = vmatpush1.msra.mxu0 0.0
  %2676 = vmatprep.subr.mxu0 0.0
  %2677 = vmatpush1.msra.mxu0 0.0
  %2678 = vmatprep.subr.mxu0 0.0
  %2679 = vmatpush1.msra.mxu0 0.0
  %2680 = vmatprep.subr.mxu0 0.0
  %2681 = vmatpush1.msra.mxu0 0.0
  %2682 = vmatprep.subr.mxu0 0.0
  %2683 = vmatpush1.msra.mxu0 0.0
  %2684 = vmatprep.subr.mxu0 0.0
  %2685 = vmatpush1.msra.mxu0 0.0
  %2686 = vmatprep.subr.mxu0 0.0
  %2687 = vmatpush1.msra.mxu0 0.0
  %2688 = vmatprep.subr.mxu0 0.0
  %2689 = vmatpush1.msra.mxu0 0.0
  %2690 = vmatprep.subr.mxu0 0.0
  %2691 = vmatpush1.msra.mxu0 0.0
  %2692 = vmatprep.subr.mxu0 0.0
  %2693 = vmatpush1.msra.mxu0 0.0
  %2694 = vmatprep.subr.mxu0 0.0
  %2695 = vmatpush1.msra.mxu0 0.0
  %2696 = vmatprep.subr.mxu0 0.0
  %2697 = vmatpush1.msra.mxu0 0.0
  %2698 = vmatprep.subr.mxu0 0.0
  %2699 = vmatpush1.msra.mxu0 0.0
  %2700 = vmatprep.subr.mxu0 0.0
  %2701 = vmatpush1.msra.mxu0 0.0
  %2702 = vmatprep.subr.mxu0 0.0
  %2703 = vmatpush1.msra.mxu0 0.0
  %2704 = vmatprep.subr.mxu0 0.0
  %2705 = vmatpush1.msra.mxu0 0.0
  %2706 = vmatprep.subr.mxu0 0.0
  %2707 = vmatpush1.msra.mxu0 0.0
  %2708 = vmatprep.subr.mxu0 0.0
  %2709 = vmatpush1.msra.mxu0 0.0
  %2710 = vmatprep.mubr.f32.mxu0 0.0
  %2711 = vmatmul.mubr.f32.gmra.mrb[0].mxu0 %v2635
  %v2712 = vpop.f32.mrb[0].mxu0
  %v2713 = vadd.f32 %v2633, %v2712
  %v2714 = vpop.f32.mrb[0].mxu0
  %2715 = vmatprep.mubr.f32.mxu0 0.0
  %2716 = vmatmul.mubr.f32.gmra.mrb[0].mxu0 %v2638
  %v2717 = vpop.f32.mrb[0].mxu0
  %v2718 = vadd.f32 %v2633, %v2717
  %v2719 = vpop.f32.mrb[0].mxu0
  %2720 = vmatprep.mubr.f32.mxu0 0.0
  %2721 = vmatmul.mubr.f32.gmra.mrb[0].mxu0 %v2641
  %v2722 = vpop.f32.mrb[0].mxu0
  %v2723 = vadd.f32 %v2633, %v2722
  %v2724 = vpop.f32.mrb[0].mxu0
  %2725 = vmatprep.mubr.f32.mxu0 0.0
  %2726 = vmatmul.mubr.f32.gmra.mrb[0].mxu0 %v2644
  %v2727 = vpop.f32.mrb[0].mxu0
  %v2728 = vadd.f32 %v2633, %v2727
  %v2729 = vpop.f32.mrb[0].mxu0
  %2730 = vdwg.mxu0
  %v2731 = vmax.f32 %v2713, 0.0
  %v2732 = vmax.f32 %v2718, 0.0
  %v2733 = vmax.f32 %v2723, 0.0
  %v2734 = vmax.f32 %v2728, 0.0
  %v2736 = vsel %vm1428, %v2731, 0
  %v2739 = vsel %vm1428, %v2732, 0
  %v2742 = vsel %vm1428, %v2733, 0
  %v2745 = vsel %vm1428, %v2734, 0
  %2747 = vmatprep.subr.mxu0 0.0
  %2748 = vmatpush1.msra.mxu0 %v1550
  %2749 = vmatprep.subr.mxu0 0.0
  %2750 = vmatpush1.msra.mxu0 %v1551
  %2751 = vmatprep.subr.mxu0 0.0
  %2752 = vmatpush1.msra.mxu0 %v1552
  %2753 = vmatprep.subr.mxu0 0.0
  %2754 = vmatpush1.msra.mxu0 %v1553
  %2755 = vmatprep.subr.mxu0 0.0
  %2756 = vmatpush1.msra.mxu0 %v1554
  %2757 = vmatprep.subr.mxu0 0.0
  %2758 = vmatpush1.msra.mxu0 %v1555
  %2759 = vmatprep.subr.mxu0 0.0
  %2760 = vmatpush1.msra.mxu0 %v1556
  %2761 = vmatprep.subr.mxu0 0.0
  %2762 = vmatpush1.msra.mxu0 %v1557
  %2763 = vmatprep.subr.mxu0 0.0
  %2764 = vmatpush1.msra.mxu0 0.0
  %2765 = vmatprep.subr.mxu0 0.0
  %2766 = vmatpush1.msra.mxu0 0.0
  %2767 = vmatprep.subr.mxu0 0.0
  %2768 = vmatpush1.msra.mxu0 0.0
  %2769 = vmatprep.subr.mxu0 0.0
  %2770 = vmatpush1.msra.mxu0 0.0
  %2771 = vmatprep.subr.mxu0 0.0
  %2772 = vmatpush1.msra.mxu0 0.0
  %2773 = vmatprep.subr.mxu0 0.0
  %2774 = vmatpush1.msra.mxu0 0.0
  %2775 = vmatprep.subr.mxu0 0.0
  %2776 = vmatpush1.msra.mxu0 0.0
  %2777 = vmatprep.subr.mxu0 0.0
  %2778 = vmatpush1.msra.mxu0 0.0
  %2779 = vmatprep.subr.mxu0 0.0
  %2780 = vmatpush1.msra.mxu0 0.0
  %2781 = vmatprep.subr.mxu0 0.0
  %2782 = vmatpush1.msra.mxu0 0.0
  %2783 = vmatprep.subr.mxu0 0.0
  %2784 = vmatpush1.msra.mxu0 0.0
  %2785 = vmatprep.subr.mxu0 0.0
  %2786 = vmatpush1.msra.mxu0 0.0
  %2787 = vmatprep.subr.mxu0 0.0
  %2788 = vmatpush1.msra.mxu0 0.0
  %2789 = vmatprep.subr.mxu0 0.0
  %2790 = vmatpush1.msra.mxu0 0.0
  %2791 = vmatprep.subr.mxu0 0.0
  %2792 = vmatpush1.msra.mxu0 0.0
  %2793 = vmatprep.subr.mxu0 0.0
  %2794 = vmatpush1.msra.mxu0 0.0
  %2795 = vmatprep.subr.mxu0 0.0
  %2796 = vmatpush1.msra.mxu0 0.0
  %2797 = vmatprep.subr.mxu0 0.0
  %2798 = vmatpush1.msra.mxu0 0.0
  %2799 = vmatprep.subr.mxu0 0.0
  %2800 = vmatpush1.msra.mxu0 0.0
  %2801 = vmatprep.subr.mxu0 0.0
  %2802 = vmatpush1.msra.mxu0 0.0
  %2803 = vmatprep.subr.mxu0 0.0
  %2804 = vmatpush1.msra.mxu0 0.0
  %2805 = vmatprep.subr.mxu0 0.0
  %2806 = vmatpush1.msra.mxu0 0.0
  %2807 = vmatprep.subr.mxu0 0.0
  %2808 = vmatpush1.msra.mxu0 0.0
  %2809 = vmatprep.subr.mxu0 0.0
  %2810 = vmatpush1.msra.mxu0 0.0
  %2811 = vmatprep.mubr.f32.mxu0 0.0
  %2812 = vmatmul.mubr.f32.gmra.mrb[0].mxu0 %v2736
  %v2813 = vpop.f32.mrb[0].mxu0
  %v2814 = vadd.f32 0.0, %v2813
  %v2815 = vpop.f32.mrb[0].mxu0
  %2816 = vmatprep.mubr.f32.mxu0 0.0
  %2817 = vmatmul.mubr.f32.gmra.mrb[0].mxu0 %v2739
  %v2818 = vpop.f32.mrb[0].mxu0
  %v2819 = vadd.f32 0.0, %v2818
  %v2820 = vpop.f32.mrb[0].mxu0
  %2821 = vmatprep.mubr.f32.mxu0 0.0
  %2822 = vmatmul.mubr.f32.gmra.mrb[0].mxu0 %v2742
  %v2823 = vpop.f32.mrb[0].mxu0
  %v2824 = vadd.f32 0.0, %v2823
  %v2825 = vpop.f32.mrb[0].mxu0
  %2826 = vmatprep.mubr.f32.mxu0 0.0
  %2827 = vmatmul.mubr.f32.gmra.mrb[0].mxu0 %v2745
  %v2828 = vpop.f32.mrb[0].mxu0
  %v2829 = vadd.f32 0.0, %v2828
  %v2830 = vpop.f32.mrb[0].mxu0
  %2831 = vdwg.mxu0
  %v2832 = vadd.f32 %v2530, %v2814
  %v2833 = vadd.f32 %v2531, %v2819
  %v2834 = vadd.f32 %v2532, %v2824
  %v2835 = vadd.f32 %v2533, %v2829
  %v2836 = vlaneseq
  %v2837 = vshrl.u32 %v2836, 7
  %v2838 = vsub.s32 5, %v2837
  %v2839 = vrot.slane %v193, %v2838
  %v2840 = vadd.f32 %v2832, %v2839
  %v2841 = vadd.f32 %v2833, %v2839
  %v2842 = vadd.f32 %v2834, %v2839
  %v2843 = vadd.f32 %v2835, %v2839
  %v2844 = vsel %vm216, %v2840, 0.0
  %2845 = vadd.xlane.f32.xlu0 %v2844
  %v2846 = vpop.xlane.xlu0 %2845
  %v2847 = vsel %vm216, %v2841, 0.0
  %2848 = vadd.xlane.f32.xlu0 %v2847
  %v2849 = vpop.xlane.xlu0 %2848
  %v2850 = vsel %vm216, %v2842, 0.0
  %2851 = vadd.xlane.f32.xlu0 %v2850
  %v2852 = vpop.xlane.xlu0 %2851
  %v2853 = vsel %vm216, %v2843, 0.0
  %2854 = vadd.xlane.f32.xlu0 %v2853
  %v2855 = vpop.xlane.xlu0 %2854
  %v2856 = vmul.f32 %v2846, %v229
  %v2857 = vmul.f32 %v2849, %v229
  %v2858 = vmul.f32 %v2852, %v229
  %v2859 = vmul.f32 %v2855, %v229
  %v2860 = vsub.f32 %v2840, %v2856
  %v2861 = vsub.f32 %v2841, %v2857
  %v2862 = vsub.f32 %v2842, %v2858
  %v2863 = vsub.f32 %v2843, %v2859
  %v2864 = vmul.f32 %v2860, %v2860
  %v2865 = vmul.f32 %v2861, %v2861
  %v2866 = vmul.f32 %v2862, %v2862
  %v2867 = vmul.f32 %v2863, %v2863
  %v2868 = vsel %vm216, %v2864, 0.0
  %2869 = vadd.xlane.f32.xlu0 %v2868
  %v2870 = vpop.xlane.xlu0 %2869
  %v2871 = vsel %vm216, %v2865, 0.0
  %2872 = vadd.xlane.f32.xlu0 %v2871
  %v2873 = vpop.xlane.xlu0 %2872
  %v2874 = vsel %vm216, %v2866, 0.0
  %2875 = vadd.xlane.f32.xlu0 %v2874
  %v2876 = vpop.xlane.xlu0 %2875
  %v2877 = vsel %vm216, %v2867, 0.0
  %2878 = vadd.xlane.f32.xlu0 %v2877
  %v2879 = vpop.xlane.xlu0 %2878
  %v2880 = vmul.f32 %v2870, %v254
  %v2881 = vmul.f32 %v2873, %v254
  %v2882 = vmul.f32 %v2876, %v254
  %v2883 = vmul.f32 %v2879, %v254
  %v2884 = vlaneseq
  %v2885 = vshrl.u32 %v2884, 7
  %v2886 = vsub.s32 0, %v2885
  %v2887 = vrot.slane %v194, %v2886
  %v2888 = vmul.f32 %v2887, %v2860
  %v2889 = vmul.f32 %v2887, %v2861
  %v2890 = vmul.f32 %v2887, %v2862
  %v2891 = vmul.f32 %v2887, %v2863
  %v2892 = vrsqrt.pop %v2880
  %v2893 = vmul.f32 %v2880, %v2892
  %vm2894 = vcmp.eq.f32.partialorder %v2880, inf
  %v2895 = vsel %vm2894, %v2880, %v2893
  %vm2896 = vcmp.eq.f32.partialorder %v2880, 0.0
  %v2897 = vand.u32 %v2880, 2147483648
  %v2898 = vsel %vm2896, %v2897, %v2895
  %v2899 = vrsqrt.pop %v2881
  %v2900 = vmul.f32 %v2881, %v2899
  %vm2901 = vcmp.eq.f32.partialorder %v2881, inf
  %v2902 = vsel %vm2901, %v2881, %v2900
  %vm2903 = vcmp.eq.f32.partialorder %v2881, 0.0
  %v2904 = vand.u32 %v2881, 2147483648
  %v2905 = vsel %vm2903, %v2904, %v2902
  %v2906 = vrsqrt.pop %v2882
  %v2907 = vmul.f32 %v2882, %v2906
  %vm2908 = vcmp.eq.f32.partialorder %v2882, inf
  %v2909 = vsel %vm2908, %v2882, %v2907
  %vm2910 = vcmp.eq.f32.partialorder %v2882, 0.0
  %v2911 = vand.u32 %v2882, 2147483648
  %v2912 = vsel %vm2910, %v2911, %v2909
  %v2913 = vrsqrt.pop %v2883
  %v2914 = vmul.f32 %v2883, %v2913
  %vm2915 = vcmp.eq.f32.partialorder %v2883, inf
  %v2916 = vsel %vm2915, %v2883, %v2914
  %vm2917 = vcmp.eq.f32.partialorder %v2883, 0.0
  %v2918 = vand.u32 %v2883, 2147483648
  %v2919 = vsel %vm2917, %v2918, %v2916
  %v2920 = vadd.f32 %v2898, 1e-06
  %v2921 = vadd.f32 %v2905, 1e-06
  %v2922 = vadd.f32 %v2912, 1e-06
  %v2923 = vadd.f32 %v2919, 1e-06
  %v2924 = vrcp.pop %v2920
  %v2925 = vmul.f32 %v2888, %v2924
  %v2926 = vrcp.pop %v2921
  %v2927 = vmul.f32 %v2889, %v2926
  %v2928 = vrcp.pop %v2922
  %v2929 = vmul.f32 %v2890, %v2928
  %v2930 = vrcp.pop %v2923
  %v2931 = vmul.f32 %v2891, %v2930
  %v2932 = vlaneseq
  %v2933 = vshrl.u32 %v2932, 7
  %v2934 = vsub.s32 1, %v2933
  %v2935 = vrot.slane %v194, %v2934
  %v2936 = vadd.f32 %v2925, %v2935
  %v2937 = vadd.f32 %v2927, %v2935
  %v2938 = vadd.f32 %v2929, %v2935
  %v2939 = vadd.f32 %v2931, %v2935
  %v2941 = vsel %vm1428, %v195, 0
  %2943 = vmatprep.subr.mxu0 0.0
  %2944 = vmatpush1.msra.mxu0 %v174
  %2945 = vmatprep.subr.mxu0 0.0
  %2946 = vmatpush1.msra.mxu0 %v179
  %2947 = vmatprep.subr.mxu0 0.0
  %2948 = vmatpush1.msra.mxu0 %v184
  %2949 = vmatprep.subr.mxu0 0.0
  %2950 = vmatpush1.msra.mxu0 %v189
  %2951 = vmatprep.subr.mxu0 0.0
  %2952 = vmatpush1.msra.mxu0 %v2936
  %2953 = vmatprep.subr.mxu0 0.0
  %2954 = vmatpush1.msra.mxu0 %v2937
  %2955 = vmatprep.subr.mxu0 0.0
  %2956 = vmatpush1.msra.mxu0 %v2938
  %2957 = vmatprep.subr.mxu0 0.0
  %2958 = vmatpush1.msra.mxu0 %v2939
  %2959 = vmatprep.subr.mxu0 0.0
  %2960 = vmatpush1.msra.mxu0 0.0
  %2961 = vmatprep.subr.mxu0 0.0
  %2962 = vmatpush1.msra.mxu0 0.0
  %2963 = vmatprep.subr.mxu0 0.0
  %2964 = vmatpush1.msra.mxu0 0.0
  %2965 = vmatprep.subr.mxu0 0.0
  %2966 = vmatpush1.msra.mxu0 0.0
  %2967 = vmatprep.subr.mxu0 0.0
  %2968 = vmatpush1.msra.mxu0 0.0
  %2969 = vmatprep.subr.mxu0 0.0
  %2970 = vmatpush1.msra.mxu0 0.0
  %2971 = vmatprep.subr.mxu0 0.0
  %2972 = vmatpush1.msra.mxu0 0.0
  %2973 = vmatprep.subr.mxu0 0.0
  %2974 = vmatpush1.msra.mxu0 0.0
  %2975 = vmatprep.subr.mxu0 0.0
  %2976 = vmatpush1.msra.mxu0 0.0
  %2977 = vmatprep.subr.mxu0 0.0
  %2978 = vmatpush1.msra.mxu0 0.0
  %2979 = vmatprep.subr.mxu0 0.0
  %2980 = vmatpush1.msra.mxu0 0.0
  %2981 = vmatprep.subr.mxu0 0.0
  %2982 = vmatpush1.msra.mxu0 0.0
  %2983 = vmatprep.subr.mxu0 0.0
  %2984 = vmatpush1.msra.mxu0 0.0
  %2985 = vmatprep.subr.mxu0 0.0
  %2986 = vmatpush1.msra.mxu0 0.0
  %2987 = vmatprep.subr.mxu0 0.0
  %2988 = vmatpush1.msra.mxu0 0.0
  %2989 = vmatprep.subr.mxu0 0.0
  %2990 = vmatpush1.msra.mxu0 0.0
  %2991 = vmatprep.subr.mxu0 0.0
  %2992 = vmatpush1.msra.mxu0 0.0
  %2993 = vmatprep.subr.mxu0 0.0
  %2994 = vmatpush1.msra.mxu0 0.0
  %2995 = vmatprep.subr.mxu0 0.0
  %2996 = vmatpush1.msra.mxu0 0.0
  %2997 = vmatprep.subr.mxu0 0.0
  %2998 = vmatpush1.msra.mxu0 0.0
  %2999 = vmatprep.subr.mxu0 0.0
  %3000 = vmatpush1.msra.mxu0 0.0
  %3001 = vmatprep.subr.mxu0 0.0
  %3002 = vmatpush1.msra.mxu0 0.0
  %3003 = vmatprep.subr.mxu0 0.0
  %3004 = vmatpush1.msra.mxu0 0.0
  %3005 = vmatprep.subr.mxu0 0.0
  %3006 = vmatpush1.msra.mxu0 0.0
  %3007 = vmatprep.mubr.f32.mxu0 0.0
  %3008 = vmatmul.mubr.f32.gmra.mrb[0].mxu0 %v2941
  %v3009 = vpop.f32.mrb[0].mxu0
  %v3010 = vadd.f32 0.0, %v3009
  %v3011 = vpop.f32.mrb[0].mxu0
  %3012 = vdwg.mxu0
  %v3013 = vrot.slane %v3010, 4
  %v3014 = vmul.f32 %v3010, %v3013
  %v3015 = vsel %vm216, %v3014, 0.0
  %3016 = vadd.xlane.f32.xlu0 %v3015
  %v3017 = vpop.xlane.xlu0 %3016
  %v3018 = vmul.f32 %v3010, %v3010
  %v3019 = vsel %vm216, %v3018, 0.0
  %3020 = vadd.xlane.f32.xlu0 %v3019
  %v3021 = vpop.xlane.xlu0 %3020
  %v3022 = vrsqrt.pop %v3021
  %v3023 = vmul.f32 %v3021, %v3022
  %vm3024 = vcmp.eq.f32.partialorder %v3021, inf
  %v3025 = vsel %vm3024, %v3021, %v3023
  %vm3026 = vcmp.eq.f32.partialorder %v3021, 0.0
  %v3027 = vand.u32 %v3021, 2147483648
  %v3028 = vsel %vm3026, %v3027, %v3025
  %v3029 = vmul.f32 %v3013, %v3013
  %v3030 = vsel %vm216, %v3029, 0.0
  %3031 = vadd.xlane.f32.xlu0 %v3030
  %v3032 = vpop.xlane.xlu0 %3031
  %v3033 = vrsqrt.pop %v3032
  %v3034 = vmul.f32 %v3032, %v3033
  %vm3035 = vcmp.eq.f32.partialorder %v3032, inf
  %v3036 = vsel %vm3035, %v3032, %v3034
  %vm3037 = vcmp.eq.f32.partialorder %v3032, 0.0
  %v3038 = vand.u32 %v3032, 2147483648
  %v3039 = vsel %vm3037, %v3038, %v3036
  %v3040 = vmax.f32 %v3028, 1e-06
  %v3041 = vmax.f32 %v3039, 1e-06
  %v3042 = vmul.f32 %v3040, %v3041
  %v3043 = vrcp.pop %v3042
  %v3044 = vmul.f32 %v3017, %v3043
  %3045 = vst [vmem:[%s4] sm:$0xff] %v3044
  // Predicated region
  $region18: #{transformer_forward.1} parent=0 // pred_check
    _
  $region19: #{transformer_forward.1} parent=0 // pred_check_branch
    %3047 = sbr.rel (0) target = $region21
  $region20: #{transformer_forward.1} parent=0 // pred_region
    _
  $region21: #{transformer_forward.1} parent=0 // pred_fallthru
    _
  // Predicated region
  $region22: #{transformer_forward.1} parent=0 // pred_check
    _
  $region23: #{transformer_forward.1} parent=0 // pred_check_branch
    %3049 = sbr.rel (0) target = $region25
  $region24: #{transformer_forward.1} parent=0 // pred_region
    _
  $region25: #{transformer_forward.1} parent=0 // pred_fallthru
    _

</llo_original>
